<compile_context>
chip_gen: v7x
topology: tpu7x:2x2x1
jax: 0.10.0
libtpu: 0.0.40
codegen_flags: <defaults>
</compile_context>

<pallas_src>
import math
import functools

import jax
import jax.numpy as jnp
from jax.experimental import pallas as pl
from jax.experimental.pallas import tpu as pltpu


# ----------------------------- kernel -------------------------------------- #

def _layernorm(x, w, b, eps=1e-5):
    mu = jnp.mean(x, axis=-1, keepdims=True)
    var = jnp.mean((x - mu) ** 2, axis=-1, keepdims=True)
    return (x - mu) * jax.lax.rsqrt(var + eps) * w + b


def fused_forward_kernel(
        x_ref, pe_ref, pool_ref,
        embw_ref, embb_ref,
        wqkv_ref, bqkv_ref, wo_ref, bo_ref, ln1w_ref, ln1b_ref,
        wf1_ref, bf1_ref, wf2_ref, bf2_ref, ln2w_ref, ln2b_ref,
        outw_ref, outb_ref,
        o_ref, *, nlayers, nhead, batch, seq):
    f32 = jnp.float32
    bf16 = jnp.bfloat16
    bs = batch * seq

    # ---- embedding (two Linears folded offline) + positional encoding ----
    x = x_ref[...].astype(bf16)                                          # [BS, IN]
    h = jnp.dot(x, embw_ref[...], preferred_element_type=f32) + embb_ref[...]
    # PositionalEncoding.forward: x + pe[:seq_len]  (pe pre-broadcast to [BS, D]
    # in the wrapper; dropout = identity in eval mode)
    h = h + pe_ref[...]                                                  # [BS, D]

    d_model = h.shape[-1]
    hd = d_model // nhead

    # ---- causal additive mask, [S, S], built once in-kernel ----
    row = jax.lax.broadcasted_iota(jnp.int32, (seq, seq), 0)
    col = jax.lax.broadcasted_iota(jnp.int32, (seq, seq), 1)
    mask_bias = jnp.where(col <= row, 0.0, -1e30).astype(f32)            # finite, not -inf

    # ---- post-norm TransformerEncoder layers (statically unrolled) ----
    for l in range(nlayers):
        hb = h.astype(bf16)
        # fused lane-dense QKV projection: single [D, 3D] matmul
        # (1/sqrt(hd) already folded into the Wq columns at init)
        qkv = jnp.dot(hb, wqkv_ref[l], preferred_element_type=f32) + bqkv_ref[l]  # [BS, 3D]

        head_outs = []
        for i in range(nhead):   # heads only for the tiny score / P@V einsums
            qh = qkv[:, i * hd:(i + 1) * hd].reshape(batch, seq, hd).astype(bf16)
            kh = qkv[:, d_model + i * hd:d_model + (i + 1) * hd
                     ].reshape(batch, seq, hd).astype(bf16)
            vh = qkv[:, 2 * d_model + i * hd:2 * d_model + (i + 1) * hd
                     ].reshape(batch, seq, hd).astype(bf16)
            s = jnp.einsum('bqd,bkd->bqk', qh, kh,
                           preferred_element_type=f32) + mask_bias       # [B, S, S]
            s = s - jnp.max(s, axis=-1, keepdims=True)
            p = jnp.exp(s)
            p = p * pl.reciprocal(jnp.sum(p, axis=-1, keepdims=True), approx=True)
            oh = jnp.einsum('bqk,bkd->bqd', p.astype(bf16), vh,
                            preferred_element_type=f32)                  # [B, S, hd]
            head_outs.append(oh.reshape(bs, hd))

        # fused output projection: one [BS, D] @ [D, D] matmul + one bias add
        heads = jnp.concatenate(head_outs, axis=-1).astype(bf16)         # [BS, D]
        attn = jnp.dot(heads, wo_ref[l], preferred_element_type=f32) + bo_ref[l]

        h1 = _layernorm(h + attn, ln1w_ref[l], ln1b_ref[l])              # post-norm
        ff = jnp.maximum(
            jnp.dot(h1.astype(bf16), wf1_ref[l], preferred_element_type=f32)
            + bf1_ref[l], 0.0)
        ff = jnp.dot(ff.astype(bf16), wf2_ref[l], preferred_element_type=f32) + bf2_ref[l]
        h = _layernorm(h1 + ff, ln2w_ref[l], ln2b_ref[l])

    # ---- mean over seq (last_output=False) via pooling matmul + output Linear ----
    pooled = jnp.dot(pool_ref[...], h.astype(bf16), preferred_element_type=f32)   # [B, D]
    o_ref[...] = jnp.dot(pooled.astype(bf16), outw_ref[...],
                         preferred_element_type=f32) + outb_ref[...]


# ----------------------------- wrapper -------------------------------------- #

def transformer_forward(params, src, *, nhead):
    B, S, IN = src.shape
    nlayers = params["w_qkv"].shape[0]
    out_dim = params["out_w"].shape[1]

    x2d = src.reshape(B * S, IN)
    # positional encoding pre-broadcast to [B*S, D] (row b*S+s gets pe[s])
    pe_bs = jnp.tile(params["pe"][:S], (B, 1))
    # mean-pool as a precomputed [B, B*S] matmul (1/S in each batch's block)
    rows = jnp.arange(B, dtype=jnp.int32)[:, None]
    cols = jnp.arange(B * S, dtype=jnp.int32)[None, :]
    pool = jnp.where(cols // S == rows, 1.0 / S, 0.0).astype(jnp.bfloat16)

    args = (x2d, pe_bs, pool,
            params["emb_w"], params["emb_b"],
            params["w_qkv"], params["b_qkv"], params["w_o"], params["b_o"],
            params["ln1_w"], params["ln1_b"],
            params["w_ff1"], params["b_ff1"], params["w_ff2"], params["b_ff2"],
            params["ln2_w"], params["ln2_b"],
            params["out_w"], params["out_b"])

    kernel = functools.partial(fused_forward_kernel,
                               nlayers=nlayers, nhead=nhead, batch=B, seq=S)
    vmem = pl.BlockSpec(memory_space=pltpu.MemorySpace.VMEM)
    return pl.pallas_call(
        kernel,
        in_specs=[vmem] * len(args),
        out_specs=vmem,
        out_shape=jax.ShapeDtypeStruct((B, out_dim), jnp.float32),
        compiler_params=pltpu.CompilerParams(vmem_limit_bytes=32 * 1024 * 1024),
    )(*args)


# ----------------------------- params --------------------------------------- #

def init_params(key, *, input_size, d_model, nhead, d_hid, nlayers,
                output_size, max_len=200):
    hd = d_model // nhead
    scale = 1.0 / math.sqrt(hd)
    keys = iter(jax.random.split(key, 9))

    def unif(shape):
        return jax.random.uniform(next(keys), shape, jnp.float32, -0.1, 0.1)

    # embedding: two Linears with no nonlinearity between them -> fold offline
    ew1 = unif((input_size, d_model)); eb1 = jnp.zeros((1, d_model), jnp.float32)
    ew2 = unif((d_model, d_model));    eb2 = jnp.zeros((1, d_model), jnp.float32)
    emb_w = (ew1 @ ew2).astype(jnp.bfloat16)
    emb_b = (eb1 @ ew2 + eb2)

    # fused per-layer QKV weights, [L, D, 3D]; 1/sqrt(hd) folded into the Wq part
    w_q = unif((nlayers, d_model, d_model)) * scale
    w_k = unif((nlayers, d_model, d_model))
    w_v = unif((nlayers, d_model, d_model))
    w_qkv = jnp.concatenate([w_q, w_k, w_v], axis=-1).astype(jnp.bfloat16)
    b_qkv = jnp.zeros((nlayers, 1, 3 * d_model), jnp.float32)  # (Wq-scale would fold here too)

    p = {
        "emb_w": emb_w, "emb_b": emb_b,
        "w_qkv": w_qkv, "b_qkv": b_qkv,
        "w_o": unif((nlayers, d_model, d_model)).astype(jnp.bfloat16),
        "b_o": jnp.zeros((nlayers, 1, d_model), jnp.float32),
        "ln1_w": jnp.ones((nlayers, 1, d_model), jnp.float32),
        "ln1_b": jnp.zeros((nlayers, 1, d_model), jnp.float32),
        "w_ff1": unif((nlayers, d_model, d_hid)).astype(jnp.bfloat16),
        "b_ff1": jnp.zeros((nlayers, 1, d_hid), jnp.float32),
        "w_ff2": unif((nlayers, d_hid, d_model)).astype(jnp.bfloat16),
        "b_ff2": jnp.zeros((nlayers, 1, d_model), jnp.float32),
        "ln2_w": jnp.ones((nlayers, 1, d_model), jnp.float32),
        "ln2_b": jnp.zeros((nlayers, 1, d_model), jnp.float32),
        "out_w": unif((d_model, output_size)).astype(jnp.bfloat16),
        "out_b": jnp.zeros((1, output_size), jnp.float32),
    }

    # sinusoidal positional encoding buffer (PositionalEncoding), [max_len, d_model]
    position = jnp.arange(max_len, dtype=jnp.float32)[:, None]
    div_term = jnp.exp(jnp.arange(0, d_model, 2, dtype=jnp.float32)
                       * (-math.log(10000.0) / d_model))
    pe = jnp.zeros((max_len, d_model), jnp.float32)
    pe = pe.at[:, 0::2].set(jnp.sin(position * div_term))
    pe = pe.at[:, 1::2].set(jnp.cos(position * div_term))
    p["pe"] = pe
    return p


# ----------------------------- main ------------------------------------------ #

if __name__ == "__main__":
    B, S = 2, 8
    input_size, d_model, nhead, d_hid, nlayers, output_size = 4, 32, 4, 64, 2, 1

    key = jax.random.PRNGKey(0)
    k_params, k_src = jax.random.split(key)

    params = init_params(k_params, input_size=input_size, d_model=d_model,
                         nhead=nhead, d_hid=d_hid, nlayers=nlayers,
                         output_size=output_size)
    src = jax.random.normal(k_src, (B, S, input_size), jnp.float32)

    fwd = jax.jit(functools.partial(transformer_forward, nhead=nhead))
    out = fwd(params, src)
    jax.block_until_ready(out)

    assert out.shape == (B, output_size), out.shape
    assert bool(jnp.all(jnp.isfinite(out)))
    print("KERNEL_OK")
</pallas_src>

<mosaic_0001>
module attributes {stable_mosaic.version = 11 : i64} {
  func.func @fused_forward_kernel(%arg0: memref<16x4xf32, #tpu.memory_space<vmem>>, %arg1: memref<16x32xf32, #tpu.memory_space<vmem>>, %arg2: memref<2x16xbf16, #tpu.memory_space<vmem>>, %arg3: memref<4x32xbf16, #tpu.memory_space<vmem>>, %arg4: memref<1x32xf32, #tpu.memory_space<vmem>>, %arg5: memref<2x32x96xbf16, #tpu.memory_space<vmem>>, %arg6: memref<2x1x96xf32, #tpu.memory_space<vmem>>, %arg7: memref<2x32x32xbf16, #tpu.memory_space<vmem>>, %arg8: memref<2x1x32xf32, #tpu.memory_space<vmem>>, %arg9: memref<2x1x32xf32, #tpu.memory_space<vmem>>, %arg10: memref<2x1x32xf32, #tpu.memory_space<vmem>>, %arg11: memref<2x32x64xbf16, #tpu.memory_space<vmem>>, %arg12: memref<2x1x64xf32, #tpu.memory_space<vmem>>, %arg13: memref<2x64x32xbf16, #tpu.memory_space<vmem>>, %arg14: memref<2x1x32xf32, #tpu.memory_space<vmem>>, %arg15: memref<2x1x32xf32, #tpu.memory_space<vmem>>, %arg16: memref<2x1x32xf32, #tpu.memory_space<vmem>>, %arg17: memref<32x1xbf16, #tpu.memory_space<vmem>>, %arg18: memref<1x1xf32, #tpu.memory_space<vmem>>, %arg19: memref<2x1xf32, #tpu.memory_space<vmem>>) attributes {dimension_semantics = [], scalar_prefetch = 0 : i64, scratch_operands = 0 : i64, tpu.core_type = #tpu.core_type<tc>} {
    %c0 = arith.constant 0 : index
    %c0_0 = arith.constant 0 : index
    %0 = vector.load %arg0[%c0, %c0_0] : memref<16x4xf32, #tpu.memory_space<vmem>>, vector<16x4xf32>
    %1 = arith.truncf %0 : vector<16x4xf32> to vector<16x4xbf16>
    %c0_1 = arith.constant 0 : index
    %c0_2 = arith.constant 0 : index
    %2 = vector.load %arg3[%c0_1, %c0_2] : memref<4x32xbf16, #tpu.memory_space<vmem>>, vector<4x32xbf16>
    %cst = arith.constant dense<0.000000e+00> : vector<16x32xf32>
    %3 = tpu.matmul %1, %2, %cst {dimension_numbers = #tpu.dot_dimension_numbers<[1], [0], [0], [1], [0, 0, 1, 1], [], []>} : vector<16x4xbf16>, vector<4x32xbf16>, vector<16x32xf32> -> vector<16x32xf32>
    %c0_3 = arith.constant 0 : index
    %c0_4 = arith.constant 0 : index
    %4 = vector.load %arg4[%c0_3, %c0_4] : memref<1x32xf32, #tpu.memory_space<vmem>>, vector<1x32xf32>
    %5 = vector.broadcast %4 : vector<1x32xf32> to vector<16x32xf32>
    %6 = arith.addf %3, %5 : vector<16x32xf32>
    %c0_5 = arith.constant 0 : index
    %c0_6 = arith.constant 0 : index
    %7 = vector.load %arg1[%c0_5, %c0_6] : memref<16x32xf32, #tpu.memory_space<vmem>>, vector<16x32xf32>
    %8 = arith.addf %6, %7 : vector<16x32xf32>
    %9 = tpu.iota {dimensions = array<i32: 0>} : vector<8x8xi32>
    %10 = tpu.iota {dimensions = array<i32: 1>} : vector<8x8xi32>
    %11 = arith.cmpi sle, %10, %9 : vector<8x8xi32>
    %cst_7 = arith.constant 0.000000e+00 : f32
    %cst_8 = arith.constant -1.000000e+30 : f32
    %12 = vector.broadcast %cst_7 : f32 to vector<8x8xf32>
    %13 = vector.broadcast %cst_8 : f32 to vector<8x8xf32>
    %14 = arith.select %11, %12, %13 : vector<8x8xi1>, vector<8x8xf32>
    %15 = arith.truncf %8 : vector<16x32xf32> to vector<16x32xbf16>
    %c0_9 = arith.constant 0 : index
    %c0_10 = arith.constant 0 : index
    %c0_11 = arith.constant 0 : index
    %16 = vector.load %arg5[%c0_9, %c0_10, %c0_11] : memref<2x32x96xbf16, #tpu.memory_space<vmem>>, vector<1x32x96xbf16>
    %17 = vector.shape_cast %16 : vector<1x32x96xbf16> to vector<32x96xbf16>
    %cst_12 = arith.constant dense<0.000000e+00> : vector<16x96xf32>
    %18 = tpu.matmul %15, %17, %cst_12 {dimension_numbers = #tpu.dot_dimension_numbers<[1], [0], [0], [1], [0, 0, 1, 1], [], []>} : vector<16x32xbf16>, vector<32x96xbf16>, vector<16x96xf32> -> vector<16x96xf32>
    %c0_13 = arith.constant 0 : index
    %c0_14 = arith.constant 0 : index
    %c0_15 = arith.constant 0 : index
    %19 = vector.load %arg6[%c0_13, %c0_14, %c0_15] : memref<2x1x96xf32, #tpu.memory_space<vmem>>, vector<1x1x96xf32>
    %20 = vector.shape_cast %19 : vector<1x1x96xf32> to vector<1x96xf32>
    %21 = vector.broadcast %20 : vector<1x96xf32> to vector<16x96xf32>
    %22 = arith.addf %18, %21 : vector<16x96xf32>
    %23 = vector.extract_strided_slice %22 {offsets = [0, 0], sizes = [16, 8], strides = [1, 1]} : vector<16x96xf32> to vector<16x8xf32>
    %24 = vector.shape_cast %23 : vector<16x8xf32> to vector<2x8x8xf32>
    %25 = arith.truncf %24 : vector<2x8x8xf32> to vector<2x8x8xbf16>
    %26 = vector.extract_strided_slice %22 {offsets = [0, 32], sizes = [16, 8], strides = [1, 1]} : vector<16x96xf32> to vector<16x8xf32>
    %27 = vector.shape_cast %26 : vector<16x8xf32> to vector<2x8x8xf32>
    %28 = arith.truncf %27 : vector<2x8x8xf32> to vector<2x8x8xbf16>
    %29 = vector.extract_strided_slice %22 {offsets = [0, 64], sizes = [16, 8], strides = [1, 1]} : vector<16x96xf32> to vector<16x8xf32>
    %30 = vector.shape_cast %29 : vector<16x8xf32> to vector<2x8x8xf32>
    %31 = arith.truncf %30 : vector<2x8x8xf32> to vector<2x8x8xbf16>
    "tpu.trace_start"() <{level = 10 : i32, message = "bqd,bkd->bqk"}> : () -> ()
    %cst_16 = arith.constant dense<0.000000e+00> : vector<2x8x8xf32>
    %32 = tpu.matmul %25, %28, %cst_16 {dimension_numbers = #tpu.dot_dimension_numbers<[2], [2], [1], [1], [0, 0, 0, 1, 1, 1], [0], [0]>} : vector<2x8x8xbf16>, vector<2x8x8xbf16>, vector<2x8x8xf32> -> vector<2x8x8xf32>
    "tpu.trace_stop"() : () -> ()
    %33 = vector.shape_cast %14 : vector<8x8xf32> to vector<1x8x8xf32>
    %34 = vector.broadcast %33 : vector<1x8x8xf32> to vector<2x8x8xf32>
    %35 = arith.addf %32, %34 : vector<2x8x8xf32>
    %cst_17 = arith.constant dense<0xFF800000> : vector<2x8xf32>
    %36 = vector.multi_reduction <maximumf>, %35, %cst_17 [2] : vector<2x8x8xf32> to vector<2x8xf32>
    %37 = vector.shape_cast %36 : vector<2x8xf32> to vector<2x8x1xf32>
    %38 = vector.broadcast %37 : vector<2x8x1xf32> to vector<2x8x8xf32>
    %39 = arith.subf %35, %38 : vector<2x8x8xf32>
    %40 = math.exp %39 : vector<2x8x8xf32>
    %cst_18 = arith.constant dense<0.000000e+00> : vector<2x8xf32>
    %41 = vector.multi_reduction <add>, %40, %cst_18 [2] : vector<2x8x8xf32> to vector<2x8xf32>
    %42 = vector.shape_cast %41 : vector<2x8xf32> to vector<2x8x1xf32>
    %43 = tpu.reciprocal %42 {approx = true} : vector<2x8x1xf32> -> vector<2x8x1xf32>
    %44 = vector.broadcast %43 : vector<2x8x1xf32> to vector<2x8x8xf32>
    %45 = arith.mulf %40, %44 : vector<2x8x8xf32>
    %46 = arith.truncf %45 : vector<2x8x8xf32> to vector<2x8x8xbf16>
    "tpu.trace_start"() <{level = 10 : i32, message = "bqk,bkd->bqd"}> : () -> ()
    %cst_19 = arith.constant dense<0.000000e+00> : vector<2x8x8xf32>
    %47 = tpu.matmul %46, %31, %cst_19 {dimension_numbers = #tpu.dot_dimension_numbers<[2], [1], [1], [2], [0, 0, 0, 1, 1, 2], [0], [0]>} : vector<2x8x8xbf16>, vector<2x8x8xbf16>, vector<2x8x8xf32> -> vector<2x8x8xf32>
    "tpu.trace_stop"() : () -> ()
    %48 = vector.shape_cast %47 : vector<2x8x8xf32> to vector<16x8xf32>
    %49 = vector.extract_strided_slice %22 {offsets = [0, 8], sizes = [16, 8], strides = [1, 1]} : vector<16x96xf32> to vector<16x8xf32>
    %50 = vector.shape_cast %49 : vector<16x8xf32> to vector<2x8x8xf32>
    %51 = arith.truncf %50 : vector<2x8x8xf32> to vector<2x8x8xbf16>
    %52 = vector.extract_strided_slice %22 {offsets = [0, 40], sizes = [16, 8], strides = [1, 1]} : vector<16x96xf32> to vector<16x8xf32>
    %53 = vector.shape_cast %52 : vector<16x8xf32> to vector<2x8x8xf32>
    %54 = arith.truncf %53 : vector<2x8x8xf32> to vector<2x8x8xbf16>
    %55 = vector.extract_strided_slice %22 {offsets = [0, 72], sizes = [16, 8], strides = [1, 1]} : vector<16x96xf32> to vector<16x8xf32>
    %56 = vector.shape_cast %55 : vector<16x8xf32> to vector<2x8x8xf32>
    %57 = arith.truncf %56 : vector<2x8x8xf32> to vector<2x8x8xbf16>
    "tpu.trace_start"() <{level = 10 : i32, message = "bqd,bkd->bqk"}> : () -> ()
    %cst_20 = arith.constant dense<0.000000e+00> : vector<2x8x8xf32>
    %58 = tpu.matmul %51, %54, %cst_20 {dimension_numbers = #tpu.dot_dimension_numbers<[2], [2], [1], [1], [0, 0, 0, 1, 1, 1], [0], [0]>} : vector<2x8x8xbf16>, vector<2x8x8xbf16>, vector<2x8x8xf32> -> vector<2x8x8xf32>
    "tpu.trace_stop"() : () -> ()
    %59 = vector.shape_cast %14 : vector<8x8xf32> to vector<1x8x8xf32>
    %60 = vector.broadcast %59 : vector<1x8x8xf32> to vector<2x8x8xf32>
    %61 = arith.addf %58, %60 : vector<2x8x8xf32>
    %cst_21 = arith.constant dense<0xFF800000> : vector<2x8xf32>
    %62 = vector.multi_reduction <maximumf>, %61, %cst_21 [2] : vector<2x8x8xf32> to vector<2x8xf32>
    %63 = vector.shape_cast %62 : vector<2x8xf32> to vector<2x8x1xf32>
    %64 = vector.broadcast %63 : vector<2x8x1xf32> to vector<2x8x8xf32>
    %65 = arith.subf %61, %64 : vector<2x8x8xf32>
    %66 = math.exp %65 : vector<2x8x8xf32>
    %cst_22 = arith.constant dense<0.000000e+00> : vector<2x8xf32>
    %67 = vector.multi_reduction <add>, %66, %cst_22 [2] : vector<2x8x8xf32> to vector<2x8xf32>
    %68 = vector.shape_cast %67 : vector<2x8xf32> to vector<2x8x1xf32>
    %69 = tpu.reciprocal %68 {approx = true} : vector<2x8x1xf32> -> vector<2x8x1xf32>
    %70 = vector.broadcast %69 : vector<2x8x1xf32> to vector<2x8x8xf32>
    %71 = arith.mulf %66, %70 : vector<2x8x8xf32>
    %72 = arith.truncf %71 : vector<2x8x8xf32> to vector<2x8x8xbf16>
    "tpu.trace_start"() <{level = 10 : i32, message = "bqk,bkd->bqd"}> : () -> ()
    %cst_23 = arith.constant dense<0.000000e+00> : vector<2x8x8xf32>
    %73 = tpu.matmul %72, %57, %cst_23 {dimension_numbers = #tpu.dot_dimension_numbers<[2], [1], [1], [2], [0, 0, 0, 1, 1, 2], [0], [0]>} : vector<2x8x8xbf16>, vector<2x8x8xbf16>, vector<2x8x8xf32> -> vector<2x8x8xf32>
    "tpu.trace_stop"() : () -> ()
    %74 = vector.shape_cast %73 : vector<2x8x8xf32> to vector<16x8xf32>
    %75 = vector.extract_strided_slice %22 {offsets = [0, 16], sizes = [16, 8], strides = [1, 1]} : vector<16x96xf32> to vector<16x8xf32>
    %76 = vector.shape_cast %75 : vector<16x8xf32> to vector<2x8x8xf32>
    %77 = arith.truncf %76 : vector<2x8x8xf32> to vector<2x8x8xbf16>
    %78 = vector.extract_strided_slice %22 {offsets = [0, 48], sizes = [16, 8], strides = [1, 1]} : vector<16x96xf32> to vector<16x8xf32>
    %79 = vector.shape_cast %78 : vector<16x8xf32> to vector<2x8x8xf32>
    %80 = arith.truncf %79 : vector<2x8x8xf32> to vector<2x8x8xbf16>
    %81 = vector.extract_strided_slice %22 {offsets = [0, 80], sizes = [16, 8], strides = [1, 1]} : vector<16x96xf32> to vector<16x8xf32>
    %82 = vector.shape_cast %81 : vector<16x8xf32> to vector<2x8x8xf32>
    %83 = arith.truncf %82 : vector<2x8x8xf32> to vector<2x8x8xbf16>
    "tpu.trace_start"() <{level = 10 : i32, message = "bqd,bkd->bqk"}> : () -> ()
    %cst_24 = arith.constant dense<0.000000e+00> : vector<2x8x8xf32>
    %84 = tpu.matmul %77, %80, %cst_24 {dimension_numbers = #tpu.dot_dimension_numbers<[2], [2], [1], [1], [0, 0, 0, 1, 1, 1], [0], [0]>} : vector<2x8x8xbf16>, vector<2x8x8xbf16>, vector<2x8x8xf32> -> vector<2x8x8xf32>
    "tpu.trace_stop"() : () -> ()
    %85 = vector.shape_cast %14 : vector<8x8xf32> to vector<1x8x8xf32>
    %86 = vector.broadcast %85 : vector<1x8x8xf32> to vector<2x8x8xf32>
    %87 = arith.addf %84, %86 : vector<2x8x8xf32>
    %cst_25 = arith.constant dense<0xFF800000> : vector<2x8xf32>
    %88 = vector.multi_reduction <maximumf>, %87, %cst_25 [2] : vector<2x8x8xf32> to vector<2x8xf32>
    %89 = vector.shape_cast %88 : vector<2x8xf32> to vector<2x8x1xf32>
    %90 = vector.broadcast %89 : vector<2x8x1xf32> to vector<2x8x8xf32>
    %91 = arith.subf %87, %90 : vector<2x8x8xf32>
    %92 = math.exp %91 : vector<2x8x8xf32>
    %cst_26 = arith.constant dense<0.000000e+00> : vector<2x8xf32>
    %93 = vector.multi_reduction <add>, %92, %cst_26 [2] : vector<2x8x8xf32> to vector<2x8xf32>
    %94 = vector.shape_cast %93 : vector<2x8xf32> to vector<2x8x1xf32>
    %95 = tpu.reciprocal %94 {approx = true} : vector<2x8x1xf32> -> vector<2x8x1xf32>
    %96 = vector.broadcast %95 : vector<2x8x1xf32> to vector<2x8x8xf32>
    %97 = arith.mulf %92, %96 : vector<2x8x8xf32>
    %98 = arith.truncf %97 : vector<2x8x8xf32> to vector<2x8x8xbf16>
    "tpu.trace_start"() <{level = 10 : i32, message = "bqk,bkd->bqd"}> : () -> ()
    %cst_27 = arith.constant dense<0.000000e+00> : vector<2x8x8xf32>
    %99 = tpu.matmul %98, %83, %cst_27 {dimension_numbers = #tpu.dot_dimension_numbers<[2], [1], [1], [2], [0, 0, 0, 1, 1, 2], [0], [0]>} : vector<2x8x8xbf16>, vector<2x8x8xbf16>, vector<2x8x8xf32> -> vector<2x8x8xf32>
    "tpu.trace_stop"() : () -> ()
    %100 = vector.shape_cast %99 : vector<2x8x8xf32> to vector<16x8xf32>
    %101 = vector.extract_strided_slice %22 {offsets = [0, 24], sizes = [16, 8], strides = [1, 1]} : vector<16x96xf32> to vector<16x8xf32>
    %102 = vector.shape_cast %101 : vector<16x8xf32> to vector<2x8x8xf32>
    %103 = arith.truncf %102 : vector<2x8x8xf32> to vector<2x8x8xbf16>
    %104 = vector.extract_strided_slice %22 {offsets = [0, 56], sizes = [16, 8], strides = [1, 1]} : vector<16x96xf32> to vector<16x8xf32>
    %105 = vector.shape_cast %104 : vector<16x8xf32> to vector<2x8x8xf32>
    %106 = arith.truncf %105 : vector<2x8x8xf32> to vector<2x8x8xbf16>
    %107 = vector.extract_strided_slice %22 {offsets = [0, 88], sizes = [16, 8], strides = [1, 1]} : vector<16x96xf32> to vector<16x8xf32>
    %108 = vector.shape_cast %107 : vector<16x8xf32> to vector<2x8x8xf32>
    %109 = arith.truncf %108 : vector<2x8x8xf32> to vector<2x8x8xbf16>
    "tpu.trace_start"() <{level = 10 : i32, message = "bqd,bkd->bqk"}> : () -> ()
    %cst_28 = arith.constant dense<0.000000e+00> : vector<2x8x8xf32>
    %110 = tpu.matmul %103, %106, %cst_28 {dimension_numbers = #tpu.dot_dimension_numbers<[2], [2], [1], [1], [0, 0, 0, 1, 1, 1], [0], [0]>} : vector<2x8x8xbf16>, vector<2x8x8xbf16>, vector<2x8x8xf32> -> vector<2x8x8xf32>
    "tpu.trace_stop"() : () -> ()
    %111 = vector.shape_cast %14 : vector<8x8xf32> to vector<1x8x8xf32>
    %112 = vector.broadcast %111 : vector<1x8x8xf32> to vector<2x8x8xf32>
    %113 = arith.addf %110, %112 : vector<2x8x8xf32>
    %cst_29 = arith.constant dense<0xFF800000> : vector<2x8xf32>
    %114 = vector.multi_reduction <maximumf>, %113, %cst_29 [2] : vector<2x8x8xf32> to vector<2x8xf32>
    %115 = vector.shape_cast %114 : vector<2x8xf32> to vector<2x8x1xf32>
    %116 = vector.broadcast %115 : vector<2x8x1xf32> to vector<2x8x8xf32>
    %117 = arith.subf %113, %116 : vector<2x8x8xf32>
    %118 = math.exp %117 : vector<2x8x8xf32>
    %cst_30 = arith.constant dense<0.000000e+00> : vector<2x8xf32>
    %119 = vector.multi_reduction <add>, %118, %cst_30 [2] : vector<2x8x8xf32> to vector<2x8xf32>
    %120 = vector.shape_cast %119 : vector<2x8xf32> to vector<2x8x1xf32>
    %121 = tpu.reciprocal %120 {approx = true} : vector<2x8x1xf32> -> vector<2x8x1xf32>
    %122 = vector.broadcast %121 : vector<2x8x1xf32> to vector<2x8x8xf32>
    %123 = arith.mulf %118, %122 : vector<2x8x8xf32>
    %124 = arith.truncf %123 : vector<2x8x8xf32> to vector<2x8x8xbf16>
    "tpu.trace_start"() <{level = 10 : i32, message = "bqk,bkd->bqd"}> : () -> ()
    %cst_31 = arith.constant dense<0.000000e+00> : vector<2x8x8xf32>
    %125 = tpu.matmul %124, %109, %cst_31 {dimension_numbers = #tpu.dot_dimension_numbers<[2], [1], [1], [2], [0, 0, 0, 1, 1, 2], [0], [0]>} : vector<2x8x8xbf16>, vector<2x8x8xbf16>, vector<2x8x8xf32> -> vector<2x8x8xf32>
    "tpu.trace_stop"() : () -> ()
    %126 = vector.shape_cast %125 : vector<2x8x8xf32> to vector<16x8xf32>
    %127 = tpu.concatenate %48, %74, %100, %126 in 1 : vector<16x8xf32>, vector<16x8xf32>, vector<16x8xf32>, vector<16x8xf32> -> vector<16x32xf32>
    %128 = arith.truncf %127 : vector<16x32xf32> to vector<16x32xbf16>
    %c0_32 = arith.constant 0 : index
    %c0_33 = arith.constant 0 : index
    %c0_34 = arith.constant 0 : index
    %129 = vector.load %arg7[%c0_32, %c0_33, %c0_34] : memref<2x32x32xbf16, #tpu.memory_space<vmem>>, vector<1x32x32xbf16>
    %130 = vector.shape_cast %129 : vector<1x32x32xbf16> to vector<32x32xbf16>
    %cst_35 = arith.constant dense<0.000000e+00> : vector<16x32xf32>
    %131 = tpu.matmul %128, %130, %cst_35 {dimension_numbers = #tpu.dot_dimension_numbers<[1], [0], [0], [1], [0, 0, 1, 1], [], []>} : vector<16x32xbf16>, vector<32x32xbf16>, vector<16x32xf32> -> vector<16x32xf32>
    %c0_36 = arith.constant 0 : index
    %c0_37 = arith.constant 0 : index
    %c0_38 = arith.constant 0 : index
    %132 = vector.load %arg8[%c0_36, %c0_37, %c0_38] : memref<2x1x32xf32, #tpu.memory_space<vmem>>, vector<1x1x32xf32>
    %133 = vector.shape_cast %132 : vector<1x1x32xf32> to vector<1x32xf32>
    %134 = vector.broadcast %133 : vector<1x32xf32> to vector<16x32xf32>
    %135 = arith.addf %131, %134 : vector<16x32xf32>
    %136 = arith.addf %8, %135 : vector<16x32xf32>
    %c0_39 = arith.constant 0 : index
    %c0_40 = arith.constant 0 : index
    %c0_41 = arith.constant 0 : index
    %137 = vector.load %arg9[%c0_39, %c0_40, %c0_41] : memref<2x1x32xf32, #tpu.memory_space<vmem>>, vector<1x1x32xf32>
    %138 = vector.shape_cast %137 : vector<1x1x32xf32> to vector<1x32xf32>
    %c0_42 = arith.constant 0 : index
    %c0_43 = arith.constant 0 : index
    %c0_44 = arith.constant 0 : index
    %139 = vector.load %arg10[%c0_42, %c0_43, %c0_44] : memref<2x1x32xf32, #tpu.memory_space<vmem>>, vector<1x1x32xf32>
    %140 = vector.shape_cast %139 : vector<1x1x32xf32> to vector<1x32xf32>
    %cst_45 = arith.constant dense<0.000000e+00> : vector<16xf32>
    %141 = vector.multi_reduction <add>, %136, %cst_45 [1] : vector<16x32xf32> to vector<16xf32>
    %142 = vector.shape_cast %141 : vector<16xf32> to vector<16x1xf32>
    %cst_46 = arith.constant 3.200000e+01 : f32
    %143 = vector.broadcast %cst_46 : f32 to vector<16x1xf32>
    %144 = arith.divf %142, %143 : vector<16x1xf32>
    %145 = vector.broadcast %144 : vector<16x1xf32> to vector<16x32xf32>
    %146 = arith.subf %136, %145 : vector<16x32xf32>
    %147 = arith.mulf %146, %146 : vector<16x32xf32>
    %cst_47 = arith.constant dense<0.000000e+00> : vector<16xf32>
    %148 = vector.multi_reduction <add>, %147, %cst_47 [1] : vector<16x32xf32> to vector<16xf32>
    %149 = vector.shape_cast %148 : vector<16xf32> to vector<16x1xf32>
    %cst_48 = arith.constant 3.200000e+01 : f32
    %150 = vector.broadcast %cst_48 : f32 to vector<16x1xf32>
    %151 = arith.divf %149, %150 : vector<16x1xf32>
    %152 = vector.broadcast %144 : vector<16x1xf32> to vector<16x32xf32>
    %153 = arith.subf %136, %152 : vector<16x32xf32>
    %cst_49 = arith.constant 9.99999974E-6 : f32
    %154 = vector.broadcast %cst_49 : f32 to vector<16x1xf32>
    %155 = arith.addf %151, %154 : vector<16x1xf32>
    %156 = math.rsqrt %155 : vector<16x1xf32>
    %157 = vector.broadcast %156 : vector<16x1xf32> to vector<16x32xf32>
    %158 = arith.mulf %153, %157 : vector<16x32xf32>
    %159 = vector.broadcast %138 : vector<1x32xf32> to vector<16x32xf32>
    %160 = arith.mulf %158, %159 : vector<16x32xf32>
    %161 = vector.broadcast %140 : vector<1x32xf32> to vector<16x32xf32>
    %162 = arith.addf %160, %161 : vector<16x32xf32>
    %163 = arith.truncf %162 : vector<16x32xf32> to vector<16x32xbf16>
    %c0_50 = arith.constant 0 : index
    %c0_51 = arith.constant 0 : index
    %c0_52 = arith.constant 0 : index
    %164 = vector.load %arg11[%c0_50, %c0_51, %c0_52] : memref<2x32x64xbf16, #tpu.memory_space<vmem>>, vector<1x32x64xbf16>
    %165 = vector.shape_cast %164 : vector<1x32x64xbf16> to vector<32x64xbf16>
    %cst_53 = arith.constant dense<0.000000e+00> : vector<16x64xf32>
    %166 = tpu.matmul %163, %165, %cst_53 {dimension_numbers = #tpu.dot_dimension_numbers<[1], [0], [0], [1], [0, 0, 1, 1], [], []>} : vector<16x32xbf16>, vector<32x64xbf16>, vector<16x64xf32> -> vector<16x64xf32>
    %c0_54 = arith.constant 0 : index
    %c0_55 = arith.constant 0 : index
    %c0_56 = arith.constant 0 : index
    %167 = vector.load %arg12[%c0_54, %c0_55, %c0_56] : memref<2x1x64xf32, #tpu.memory_space<vmem>>, vector<1x1x64xf32>
    %168 = vector.shape_cast %167 : vector<1x1x64xf32> to vector<1x64xf32>
    %169 = vector.broadcast %168 : vector<1x64xf32> to vector<16x64xf32>
    %170 = arith.addf %166, %169 : vector<16x64xf32>
    %cst_57 = arith.constant 0.000000e+00 : f32
    %171 = vector.broadcast %cst_57 : f32 to vector<16x64xf32>
    %172 = arith.maximumf %170, %171 : vector<16x64xf32>
    %173 = arith.truncf %172 : vector<16x64xf32> to vector<16x64xbf16>
    %c0_58 = arith.constant 0 : index
    %c0_59 = arith.constant 0 : index
    %c0_60 = arith.constant 0 : index
    %174 = vector.load %arg13[%c0_58, %c0_59, %c0_60] : memref<2x64x32xbf16, #tpu.memory_space<vmem>>, vector<1x64x32xbf16>
    %175 = vector.shape_cast %174 : vector<1x64x32xbf16> to vector<64x32xbf16>
    %cst_61 = arith.constant dense<0.000000e+00> : vector<16x32xf32>
    %176 = tpu.matmul %173, %175, %cst_61 {dimension_numbers = #tpu.dot_dimension_numbers<[1], [0], [0], [1], [0, 0, 1, 1], [], []>} : vector<16x64xbf16>, vector<64x32xbf16>, vector<16x32xf32> -> vector<16x32xf32>
    %c0_62 = arith.constant 0 : index
    %c0_63 = arith.constant 0 : index
    %c0_64 = arith.constant 0 : index
    %177 = vector.load %arg14[%c0_62, %c0_63, %c0_64] : memref<2x1x32xf32, #tpu.memory_space<vmem>>, vector<1x1x32xf32>
    %178 = vector.shape_cast %177 : vector<1x1x32xf32> to vector<1x32xf32>
    %179 = vector.broadcast %178 : vector<1x32xf32> to vector<16x32xf32>
    %180 = arith.addf %176, %179 : vector<16x32xf32>
    %181 = arith.addf %162, %180 : vector<16x32xf32>
    %c0_65 = arith.constant 0 : index
    %c0_66 = arith.constant 0 : index
    %c0_67 = arith.constant 0 : index
    %182 = vector.load %arg15[%c0_65, %c0_66, %c0_67] : memref<2x1x32xf32, #tpu.memory_space<vmem>>, vector<1x1x32xf32>
    %183 = vector.shape_cast %182 : vector<1x1x32xf32> to vector<1x32xf32>
    %c0_68 = arith.constant 0 : index
    %c0_69 = arith.constant 0 : index
    %c0_70 = arith.constant 0 : index
    %184 = vector.load %arg16[%c0_68, %c0_69, %c0_70] : memref<2x1x32xf32, #tpu.memory_space<vmem>>, vector<1x1x32xf32>
    %185 = vector.shape_cast %184 : vector<1x1x32xf32> to vector<1x32xf32>
    %cst_71 = arith.constant dense<0.000000e+00> : vector<16xf32>
    %186 = vector.multi_reduction <add>, %181, %cst_71 [1] : vector<16x32xf32> to vector<16xf32>
    %187 = vector.shape_cast %186 : vector<16xf32> to vector<16x1xf32>
    %cst_72 = arith.constant 3.200000e+01 : f32
    %188 = vector.broadcast %cst_72 : f32 to vector<16x1xf32>
    %189 = arith.divf %187, %188 : vector<16x1xf32>
    %190 = vector.broadcast %189 : vector<16x1xf32> to vector<16x32xf32>
    %191 = arith.subf %181, %190 : vector<16x32xf32>
    %192 = arith.mulf %191, %191 : vector<16x32xf32>
    %cst_73 = arith.constant dense<0.000000e+00> : vector<16xf32>
    %193 = vector.multi_reduction <add>, %192, %cst_73 [1] : vector<16x32xf32> to vector<16xf32>
    %194 = vector.shape_cast %193 : vector<16xf32> to vector<16x1xf32>
    %cst_74 = arith.constant 3.200000e+01 : f32
    %195 = vector.broadcast %cst_74 : f32 to vector<16x1xf32>
    %196 = arith.divf %194, %195 : vector<16x1xf32>
    %197 = vector.broadcast %189 : vector<16x1xf32> to vector<16x32xf32>
    %198 = arith.subf %181, %197 : vector<16x32xf32>
    %cst_75 = arith.constant 9.99999974E-6 : f32
    %199 = vector.broadcast %cst_75 : f32 to vector<16x1xf32>
    %200 = arith.addf %196, %199 : vector<16x1xf32>
    %201 = math.rsqrt %200 : vector<16x1xf32>
    %202 = vector.broadcast %201 : vector<16x1xf32> to vector<16x32xf32>
    %203 = arith.mulf %198, %202 : vector<16x32xf32>
    %204 = vector.broadcast %183 : vector<1x32xf32> to vector<16x32xf32>
    %205 = arith.mulf %203, %204 : vector<16x32xf32>
    %206 = vector.broadcast %185 : vector<1x32xf32> to vector<16x32xf32>
    %207 = arith.addf %205, %206 : vector<16x32xf32>
    %208 = arith.truncf %207 : vector<16x32xf32> to vector<16x32xbf16>
    %c1 = arith.constant 1 : index
    %c0_76 = arith.constant 0 : index
    %c0_77 = arith.constant 0 : index
    %209 = vector.load %arg5[%c1, %c0_76, %c0_77] : memref<2x32x96xbf16, #tpu.memory_space<vmem>>, vector<1x32x96xbf16>
    %210 = vector.shape_cast %209 : vector<1x32x96xbf16> to vector<32x96xbf16>
    %cst_78 = arith.constant dense<0.000000e+00> : vector<16x96xf32>
    %211 = tpu.matmul %208, %210, %cst_78 {dimension_numbers = #tpu.dot_dimension_numbers<[1], [0], [0], [1], [0, 0, 1, 1], [], []>} : vector<16x32xbf16>, vector<32x96xbf16>, vector<16x96xf32> -> vector<16x96xf32>
    %c1_79 = arith.constant 1 : index
    %c0_80 = arith.constant 0 : index
    %c0_81 = arith.constant 0 : index
    %212 = vector.load %arg6[%c1_79, %c0_80, %c0_81] : memref<2x1x96xf32, #tpu.memory_space<vmem>>, vector<1x1x96xf32>
    %213 = vector.shape_cast %212 : vector<1x1x96xf32> to vector<1x96xf32>
    %214 = vector.broadcast %213 : vector<1x96xf32> to vector<16x96xf32>
    %215 = arith.addf %211, %214 : vector<16x96xf32>
    %216 = vector.extract_strided_slice %215 {offsets = [0, 0], sizes = [16, 8], strides = [1, 1]} : vector<16x96xf32> to vector<16x8xf32>
    %217 = vector.shape_cast %216 : vector<16x8xf32> to vector<2x8x8xf32>
    %218 = arith.truncf %217 : vector<2x8x8xf32> to vector<2x8x8xbf16>
    %219 = vector.extract_strided_slice %215 {offsets = [0, 32], sizes = [16, 8], strides = [1, 1]} : vector<16x96xf32> to vector<16x8xf32>
    %220 = vector.shape_cast %219 : vector<16x8xf32> to vector<2x8x8xf32>
    %221 = arith.truncf %220 : vector<2x8x8xf32> to vector<2x8x8xbf16>
    %222 = vector.extract_strided_slice %215 {offsets = [0, 64], sizes = [16, 8], strides = [1, 1]} : vector<16x96xf32> to vector<16x8xf32>
    %223 = vector.shape_cast %222 : vector<16x8xf32> to vector<2x8x8xf32>
    %224 = arith.truncf %223 : vector<2x8x8xf32> to vector<2x8x8xbf16>
    "tpu.trace_start"() <{level = 10 : i32, message = "bqd,bkd->bqk"}> : () -> ()
    %cst_82 = arith.constant dense<0.000000e+00> : vector<2x8x8xf32>
    %225 = tpu.matmul %218, %221, %cst_82 {dimension_numbers = #tpu.dot_dimension_numbers<[2], [2], [1], [1], [0, 0, 0, 1, 1, 1], [0], [0]>} : vector<2x8x8xbf16>, vector<2x8x8xbf16>, vector<2x8x8xf32> -> vector<2x8x8xf32>
    "tpu.trace_stop"() : () -> ()
    %226 = vector.shape_cast %14 : vector<8x8xf32> to vector<1x8x8xf32>
    %227 = vector.broadcast %226 : vector<1x8x8xf32> to vector<2x8x8xf32>
    %228 = arith.addf %225, %227 : vector<2x8x8xf32>
    %cst_83 = arith.constant dense<0xFF800000> : vector<2x8xf32>
    %229 = vector.multi_reduction <maximumf>, %228, %cst_83 [2] : vector<2x8x8xf32> to vector<2x8xf32>
    %230 = vector.shape_cast %229 : vector<2x8xf32> to vector<2x8x1xf32>
    %231 = vector.broadcast %230 : vector<2x8x1xf32> to vector<2x8x8xf32>
    %232 = arith.subf %228, %231 : vector<2x8x8xf32>
    %233 = math.exp %232 : vector<2x8x8xf32>
    %cst_84 = arith.constant dense<0.000000e+00> : vector<2x8xf32>
    %234 = vector.multi_reduction <add>, %233, %cst_84 [2] : vector<2x8x8xf32> to vector<2x8xf32>
    %235 = vector.shape_cast %234 : vector<2x8xf32> to vector<2x8x1xf32>
    %236 = tpu.reciprocal %235 {approx = true} : vector<2x8x1xf32> -> vector<2x8x1xf32>
    %237 = vector.broadcast %236 : vector<2x8x1xf32> to vector<2x8x8xf32>
    %238 = arith.mulf %233, %237 : vector<2x8x8xf32>
    %239 = arith.truncf %238 : vector<2x8x8xf32> to vector<2x8x8xbf16>
    "tpu.trace_start"() <{level = 10 : i32, message = "bqk,bkd->bqd"}> : () -> ()
    %cst_85 = arith.constant dense<0.000000e+00> : vector<2x8x8xf32>
    %240 = tpu.matmul %239, %224, %cst_85 {dimension_numbers = #tpu.dot_dimension_numbers<[2], [1], [1], [2], [0, 0, 0, 1, 1, 2], [0], [0]>} : vector<2x8x8xbf16>, vector<2x8x8xbf16>, vector<2x8x8xf32> -> vector<2x8x8xf32>
    "tpu.trace_stop"() : () -> ()
    %241 = vector.shape_cast %240 : vector<2x8x8xf32> to vector<16x8xf32>
    %242 = vector.extract_strided_slice %215 {offsets = [0, 8], sizes = [16, 8], strides = [1, 1]} : vector<16x96xf32> to vector<16x8xf32>
    %243 = vector.shape_cast %242 : vector<16x8xf32> to vector<2x8x8xf32>
    %244 = arith.truncf %243 : vector<2x8x8xf32> to vector<2x8x8xbf16>
    %245 = vector.extract_strided_slice %215 {offsets = [0, 40], sizes = [16, 8], strides = [1, 1]} : vector<16x96xf32> to vector<16x8xf32>
    %246 = vector.shape_cast %245 : vector<16x8xf32> to vector<2x8x8xf32>
    %247 = arith.truncf %246 : vector<2x8x8xf32> to vector<2x8x8xbf16>
    %248 = vector.extract_strided_slice %215 {offsets = [0, 72], sizes = [16, 8], strides = [1, 1]} : vector<16x96xf32> to vector<16x8xf32>
    %249 = vector.shape_cast %248 : vector<16x8xf32> to vector<2x8x8xf32>
    %250 = arith.truncf %249 : vector<2x8x8xf32> to vector<2x8x8xbf16>
    "tpu.trace_start"() <{level = 10 : i32, message = "bqd,bkd->bqk"}> : () -> ()
    %cst_86 = arith.constant dense<0.000000e+00> : vector<2x8x8xf32>
    %251 = tpu.matmul %244, %247, %cst_86 {dimension_numbers = #tpu.dot_dimension_numbers<[2], [2], [1], [1], [0, 0, 0, 1, 1, 1], [0], [0]>} : vector<2x8x8xbf16>, vector<2x8x8xbf16>, vector<2x8x8xf32> -> vector<2x8x8xf32>
    "tpu.trace_stop"() : () -> ()
    %252 = vector.shape_cast %14 : vector<8x8xf32> to vector<1x8x8xf32>
    %253 = vector.broadcast %252 : vector<1x8x8xf32> to vector<2x8x8xf32>
    %254 = arith.addf %251, %253 : vector<2x8x8xf32>
    %cst_87 = arith.constant dense<0xFF800000> : vector<2x8xf32>
    %255 = vector.multi_reduction <maximumf>, %254, %cst_87 [2] : vector<2x8x8xf32> to vector<2x8xf32>
    %256 = vector.shape_cast %255 : vector<2x8xf32> to vector<2x8x1xf32>
    %257 = vector.broadcast %256 : vector<2x8x1xf32> to vector<2x8x8xf32>
    %258 = arith.subf %254, %257 : vector<2x8x8xf32>
    %259 = math.exp %258 : vector<2x8x8xf32>
    %cst_88 = arith.constant dense<0.000000e+00> : vector<2x8xf32>
    %260 = vector.multi_reduction <add>, %259, %cst_88 [2] : vector<2x8x8xf32> to vector<2x8xf32>
    %261 = vector.shape_cast %260 : vector<2x8xf32> to vector<2x8x1xf32>
    %262 = tpu.reciprocal %261 {approx = true} : vector<2x8x1xf32> -> vector<2x8x1xf32>
    %263 = vector.broadcast %262 : vector<2x8x1xf32> to vector<2x8x8xf32>
    %264 = arith.mulf %259, %263 : vector<2x8x8xf32>
    %265 = arith.truncf %264 : vector<2x8x8xf32> to vector<2x8x8xbf16>
    "tpu.trace_start"() <{level = 10 : i32, message = "bqk,bkd->bqd"}> : () -> ()
    %cst_89 = arith.constant dense<0.000000e+00> : vector<2x8x8xf32>
    %266 = tpu.matmul %265, %250, %cst_89 {dimension_numbers = #tpu.dot_dimension_numbers<[2], [1], [1], [2], [0, 0, 0, 1, 1, 2], [0], [0]>} : vector<2x8x8xbf16>, vector<2x8x8xbf16>, vector<2x8x8xf32> -> vector<2x8x8xf32>
    "tpu.trace_stop"() : () -> ()
    %267 = vector.shape_cast %266 : vector<2x8x8xf32> to vector<16x8xf32>
    %268 = vector.extract_strided_slice %215 {offsets = [0, 16], sizes = [16, 8], strides = [1, 1]} : vector<16x96xf32> to vector<16x8xf32>
    %269 = vector.shape_cast %268 : vector<16x8xf32> to vector<2x8x8xf32>
    %270 = arith.truncf %269 : vector<2x8x8xf32> to vector<2x8x8xbf16>
    %271 = vector.extract_strided_slice %215 {offsets = [0, 48], sizes = [16, 8], strides = [1, 1]} : vector<16x96xf32> to vector<16x8xf32>
    %272 = vector.shape_cast %271 : vector<16x8xf32> to vector<2x8x8xf32>
    %273 = arith.truncf %272 : vector<2x8x8xf32> to vector<2x8x8xbf16>
    %274 = vector.extract_strided_slice %215 {offsets = [0, 80], sizes = [16, 8], strides = [1, 1]} : vector<16x96xf32> to vector<16x8xf32>
    %275 = vector.shape_cast %274 : vector<16x8xf32> to vector<2x8x8xf32>
    %276 = arith.truncf %275 : vector<2x8x8xf32> to vector<2x8x8xbf16>
    "tpu.trace_start"() <{level = 10 : i32, message = "bqd,bkd->bqk"}> : () -> ()
    %cst_90 = arith.constant dense<0.000000e+00> : vector<2x8x8xf32>
    %277 = tpu.matmul %270, %273, %cst_90 {dimension_numbers = #tpu.dot_dimension_numbers<[2], [2], [1], [1], [0, 0, 0, 1, 1, 1], [0], [0]>} : vector<2x8x8xbf16>, vector<2x8x8xbf16>, vector<2x8x8xf32> -> vector<2x8x8xf32>
    "tpu.trace_stop"() : () -> ()
    %278 = vector.shape_cast %14 : vector<8x8xf32> to vector<1x8x8xf32>
    %279 = vector.broadcast %278 : vector<1x8x8xf32> to vector<2x8x8xf32>
    %280 = arith.addf %277, %279 : vector<2x8x8xf32>
    %cst_91 = arith.constant dense<0xFF800000> : vector<2x8xf32>
    %281 = vector.multi_reduction <maximumf>, %280, %cst_91 [2] : vector<2x8x8xf32> to vector<2x8xf32>
    %282 = vector.shape_cast %281 : vector<2x8xf32> to vector<2x8x1xf32>
    %283 = vector.broadcast %282 : vector<2x8x1xf32> to vector<2x8x8xf32>
    %284 = arith.subf %280, %283 : vector<2x8x8xf32>
    %285 = math.exp %284 : vector<2x8x8xf32>
    %cst_92 = arith.constant dense<0.000000e+00> : vector<2x8xf32>
    %286 = vector.multi_reduction <add>, %285, %cst_92 [2] : vector<2x8x8xf32> to vector<2x8xf32>
    %287 = vector.shape_cast %286 : vector<2x8xf32> to vector<2x8x1xf32>
    %288 = tpu.reciprocal %287 {approx = true} : vector<2x8x1xf32> -> vector<2x8x1xf32>
    %289 = vector.broadcast %288 : vector<2x8x1xf32> to vector<2x8x8xf32>
    %290 = arith.mulf %285, %289 : vector<2x8x8xf32>
    %291 = arith.truncf %290 : vector<2x8x8xf32> to vector<2x8x8xbf16>
    "tpu.trace_start"() <{level = 10 : i32, message = "bqk,bkd->bqd"}> : () -> ()
    %cst_93 = arith.constant dense<0.000000e+00> : vector<2x8x8xf32>
    %292 = tpu.matmul %291, %276, %cst_93 {dimension_numbers = #tpu.dot_dimension_numbers<[2], [1], [1], [2], [0, 0, 0, 1, 1, 2], [0], [0]>} : vector<2x8x8xbf16>, vector<2x8x8xbf16>, vector<2x8x8xf32> -> vector<2x8x8xf32>
    "tpu.trace_stop"() : () -> ()
    %293 = vector.shape_cast %292 : vector<2x8x8xf32> to vector<16x8xf32>
    %294 = vector.extract_strided_slice %215 {offsets = [0, 24], sizes = [16, 8], strides = [1, 1]} : vector<16x96xf32> to vector<16x8xf32>
    %295 = vector.shape_cast %294 : vector<16x8xf32> to vector<2x8x8xf32>
    %296 = arith.truncf %295 : vector<2x8x8xf32> to vector<2x8x8xbf16>
    %297 = vector.extract_strided_slice %215 {offsets = [0, 56], sizes = [16, 8], strides = [1, 1]} : vector<16x96xf32> to vector<16x8xf32>
    %298 = vector.shape_cast %297 : vector<16x8xf32> to vector<2x8x8xf32>
    %299 = arith.truncf %298 : vector<2x8x8xf32> to vector<2x8x8xbf16>
    %300 = vector.extract_strided_slice %215 {offsets = [0, 88], sizes = [16, 8], strides = [1, 1]} : vector<16x96xf32> to vector<16x8xf32>
    %301 = vector.shape_cast %300 : vector<16x8xf32> to vector<2x8x8xf32>
    %302 = arith.truncf %301 : vector<2x8x8xf32> to vector<2x8x8xbf16>
    "tpu.trace_start"() <{level = 10 : i32, message = "bqd,bkd->bqk"}> : () -> ()
    %cst_94 = arith.constant dense<0.000000e+00> : vector<2x8x8xf32>
    %303 = tpu.matmul %296, %299, %cst_94 {dimension_numbers = #tpu.dot_dimension_numbers<[2], [2], [1], [1], [0, 0, 0, 1, 1, 1], [0], [0]>} : vector<2x8x8xbf16>, vector<2x8x8xbf16>, vector<2x8x8xf32> -> vector<2x8x8xf32>
    "tpu.trace_stop"() : () -> ()
    %304 = vector.shape_cast %14 : vector<8x8xf32> to vector<1x8x8xf32>
    %305 = vector.broadcast %304 : vector<1x8x8xf32> to vector<2x8x8xf32>
    %306 = arith.addf %303, %305 : vector<2x8x8xf32>
    %cst_95 = arith.constant dense<0xFF800000> : vector<2x8xf32>
    %307 = vector.multi_reduction <maximumf>, %306, %cst_95 [2] : vector<2x8x8xf32> to vector<2x8xf32>
    %308 = vector.shape_cast %307 : vector<2x8xf32> to vector<2x8x1xf32>
    %309 = vector.broadcast %308 : vector<2x8x1xf32> to vector<2x8x8xf32>
    %310 = arith.subf %306, %309 : vector<2x8x8xf32>
    %311 = math.exp %310 : vector<2x8x8xf32>
    %cst_96 = arith.constant dense<0.000000e+00> : vector<2x8xf32>
    %312 = vector.multi_reduction <add>, %311, %cst_96 [2] : vector<2x8x8xf32> to vector<2x8xf32>
    %313 = vector.shape_cast %312 : vector<2x8xf32> to vector<2x8x1xf32>
    %314 = tpu.reciprocal %313 {approx = true} : vector<2x8x1xf32> -> vector<2x8x1xf32>
    %315 = vector.broadcast %314 : vector<2x8x1xf32> to vector<2x8x8xf32>
    %316 = arith.mulf %311, %315 : vector<2x8x8xf32>
    %317 = arith.truncf %316 : vector<2x8x8xf32> to vector<2x8x8xbf16>
    "tpu.trace_start"() <{level = 10 : i32, message = "bqk,bkd->bqd"}> : () -> ()
    %cst_97 = arith.constant dense<0.000000e+00> : vector<2x8x8xf32>
    %318 = tpu.matmul %317, %302, %cst_97 {dimension_numbers = #tpu.dot_dimension_numbers<[2], [1], [1], [2], [0, 0, 0, 1, 1, 2], [0], [0]>} : vector<2x8x8xbf16>, vector<2x8x8xbf16>, vector<2x8x8xf32> -> vector<2x8x8xf32>
    "tpu.trace_stop"() : () -> ()
    %319 = vector.shape_cast %318 : vector<2x8x8xf32> to vector<16x8xf32>
    %320 = tpu.concatenate %241, %267, %293, %319 in 1 : vector<16x8xf32>, vector<16x8xf32>, vector<16x8xf32>, vector<16x8xf32> -> vector<16x32xf32>
    %321 = arith.truncf %320 : vector<16x32xf32> to vector<16x32xbf16>
    %c1_98 = arith.constant 1 : index
    %c0_99 = arith.constant 0 : index
    %c0_100 = arith.constant 0 : index
    %322 = vector.load %arg7[%c1_98, %c0_99, %c0_100] : memref<2x32x32xbf16, #tpu.memory_space<vmem>>, vector<1x32x32xbf16>
    %323 = vector.shape_cast %322 : vector<1x32x32xbf16> to vector<32x32xbf16>
    %cst_101 = arith.constant dense<0.000000e+00> : vector<16x32xf32>
    %324 = tpu.matmul %321, %323, %cst_101 {dimension_numbers = #tpu.dot_dimension_numbers<[1], [0], [0], [1], [0, 0, 1, 1], [], []>} : vector<16x32xbf16>, vector<32x32xbf16>, vector<16x32xf32> -> vector<16x32xf32>
    %c1_102 = arith.constant 1 : index
    %c0_103 = arith.constant 0 : index
    %c0_104 = arith.constant 0 : index
    %325 = vector.load %arg8[%c1_102, %c0_103, %c0_104] : memref<2x1x32xf32, #tpu.memory_space<vmem>>, vector<1x1x32xf32>
    %326 = vector.shape_cast %325 : vector<1x1x32xf32> to vector<1x32xf32>
    %327 = vector.broadcast %326 : vector<1x32xf32> to vector<16x32xf32>
    %328 = arith.addf %324, %327 : vector<16x32xf32>
    %329 = arith.addf %207, %328 : vector<16x32xf32>
    %c1_105 = arith.constant 1 : index
    %c0_106 = arith.constant 0 : index
    %c0_107 = arith.constant 0 : index
    %330 = vector.load %arg9[%c1_105, %c0_106, %c0_107] : memref<2x1x32xf32, #tpu.memory_space<vmem>>, vector<1x1x32xf32>
    %331 = vector.shape_cast %330 : vector<1x1x32xf32> to vector<1x32xf32>
    %c1_108 = arith.constant 1 : index
    %c0_109 = arith.constant 0 : index
    %c0_110 = arith.constant 0 : index
    %332 = vector.load %arg10[%c1_108, %c0_109, %c0_110] : memref<2x1x32xf32, #tpu.memory_space<vmem>>, vector<1x1x32xf32>
    %333 = vector.shape_cast %332 : vector<1x1x32xf32> to vector<1x32xf32>
    %cst_111 = arith.constant dense<0.000000e+00> : vector<16xf32>
    %334 = vector.multi_reduction <add>, %329, %cst_111 [1] : vector<16x32xf32> to vector<16xf32>
    %335 = vector.shape_cast %334 : vector<16xf32> to vector<16x1xf32>
    %cst_112 = arith.constant 3.200000e+01 : f32
    %336 = vector.broadcast %cst_112 : f32 to vector<16x1xf32>
    %337 = arith.divf %335, %336 : vector<16x1xf32>
    %338 = vector.broadcast %337 : vector<16x1xf32> to vector<16x32xf32>
    %339 = arith.subf %329, %338 : vector<16x32xf32>
    %340 = arith.mulf %339, %339 : vector<16x32xf32>
    %cst_113 = arith.constant dense<0.000000e+00> : vector<16xf32>
    %341 = vector.multi_reduction <add>, %340, %cst_113 [1] : vector<16x32xf32> to vector<16xf32>
    %342 = vector.shape_cast %341 : vector<16xf32> to vector<16x1xf32>
    %cst_114 = arith.constant 3.200000e+01 : f32
    %343 = vector.broadcast %cst_114 : f32 to vector<16x1xf32>
    %344 = arith.divf %342, %343 : vector<16x1xf32>
    %345 = vector.broadcast %337 : vector<16x1xf32> to vector<16x32xf32>
    %346 = arith.subf %329, %345 : vector<16x32xf32>
    %cst_115 = arith.constant 9.99999974E-6 : f32
    %347 = vector.broadcast %cst_115 : f32 to vector<16x1xf32>
    %348 = arith.addf %344, %347 : vector<16x1xf32>
    %349 = math.rsqrt %348 : vector<16x1xf32>
    %350 = vector.broadcast %349 : vector<16x1xf32> to vector<16x32xf32>
    %351 = arith.mulf %346, %350 : vector<16x32xf32>
    %352 = vector.broadcast %331 : vector<1x32xf32> to vector<16x32xf32>
    %353 = arith.mulf %351, %352 : vector<16x32xf32>
    %354 = vector.broadcast %333 : vector<1x32xf32> to vector<16x32xf32>
    %355 = arith.addf %353, %354 : vector<16x32xf32>
    %356 = arith.truncf %355 : vector<16x32xf32> to vector<16x32xbf16>
    %c1_116 = arith.constant 1 : index
    %c0_117 = arith.constant 0 : index
    %c0_118 = arith.constant 0 : index
    %357 = vector.load %arg11[%c1_116, %c0_117, %c0_118] : memref<2x32x64xbf16, #tpu.memory_space<vmem>>, vector<1x32x64xbf16>
    %358 = vector.shape_cast %357 : vector<1x32x64xbf16> to vector<32x64xbf16>
    %cst_119 = arith.constant dense<0.000000e+00> : vector<16x64xf32>
    %359 = tpu.matmul %356, %358, %cst_119 {dimension_numbers = #tpu.dot_dimension_numbers<[1], [0], [0], [1], [0, 0, 1, 1], [], []>} : vector<16x32xbf16>, vector<32x64xbf16>, vector<16x64xf32> -> vector<16x64xf32>
    %c1_120 = arith.constant 1 : index
    %c0_121 = arith.constant 0 : index
    %c0_122 = arith.constant 0 : index
    %360 = vector.load %arg12[%c1_120, %c0_121, %c0_122] : memref<2x1x64xf32, #tpu.memory_space<vmem>>, vector<1x1x64xf32>
    %361 = vector.shape_cast %360 : vector<1x1x64xf32> to vector<1x64xf32>
    %362 = vector.broadcast %361 : vector<1x64xf32> to vector<16x64xf32>
    %363 = arith.addf %359, %362 : vector<16x64xf32>
    %cst_123 = arith.constant 0.000000e+00 : f32
    %364 = vector.broadcast %cst_123 : f32 to vector<16x64xf32>
    %365 = arith.maximumf %363, %364 : vector<16x64xf32>
    %366 = arith.truncf %365 : vector<16x64xf32> to vector<16x64xbf16>
    %c1_124 = arith.constant 1 : index
    %c0_125 = arith.constant 0 : index
    %c0_126 = arith.constant 0 : index
    %367 = vector.load %arg13[%c1_124, %c0_125, %c0_126] : memref<2x64x32xbf16, #tpu.memory_space<vmem>>, vector<1x64x32xbf16>
    %368 = vector.shape_cast %367 : vector<1x64x32xbf16> to vector<64x32xbf16>
    %cst_127 = arith.constant dense<0.000000e+00> : vector<16x32xf32>
    %369 = tpu.matmul %366, %368, %cst_127 {dimension_numbers = #tpu.dot_dimension_numbers<[1], [0], [0], [1], [0, 0, 1, 1], [], []>} : vector<16x64xbf16>, vector<64x32xbf16>, vector<16x32xf32> -> vector<16x32xf32>
    %c1_128 = arith.constant 1 : index
    %c0_129 = arith.constant 0 : index
    %c0_130 = arith.constant 0 : index
    %370 = vector.load %arg14[%c1_128, %c0_129, %c0_130] : memref<2x1x32xf32, #tpu.memory_space<vmem>>, vector<1x1x32xf32>
    %371 = vector.shape_cast %370 : vector<1x1x32xf32> to vector<1x32xf32>
    %372 = vector.broadcast %371 : vector<1x32xf32> to vector<16x32xf32>
    %373 = arith.addf %369, %372 : vector<16x32xf32>
    %374 = arith.addf %355, %373 : vector<16x32xf32>
    %c1_131 = arith.constant 1 : index
    %c0_132 = arith.constant 0 : index
    %c0_133 = arith.constant 0 : index
    %375 = vector.load %arg15[%c1_131, %c0_132, %c0_133] : memref<2x1x32xf32, #tpu.memory_space<vmem>>, vector<1x1x32xf32>
    %376 = vector.shape_cast %375 : vector<1x1x32xf32> to vector<1x32xf32>
    %c1_134 = arith.constant 1 : index
    %c0_135 = arith.constant 0 : index
    %c0_136 = arith.constant 0 : index
    %377 = vector.load %arg16[%c1_134, %c0_135, %c0_136] : memref<2x1x32xf32, #tpu.memory_space<vmem>>, vector<1x1x32xf32>
    %378 = vector.shape_cast %377 : vector<1x1x32xf32> to vector<1x32xf32>
    %cst_137 = arith.constant dense<0.000000e+00> : vector<16xf32>
    %379 = vector.multi_reduction <add>, %374, %cst_137 [1] : vector<16x32xf32> to vector<16xf32>
    %380 = vector.shape_cast %379 : vector<16xf32> to vector<16x1xf32>
    %cst_138 = arith.constant 3.200000e+01 : f32
    %381 = vector.broadcast %cst_138 : f32 to vector<16x1xf32>
    %382 = arith.divf %380, %381 : vector<16x1xf32>
    %383 = vector.broadcast %382 : vector<16x1xf32> to vector<16x32xf32>
    %384 = arith.subf %374, %383 : vector<16x32xf32>
    %385 = arith.mulf %384, %384 : vector<16x32xf32>
    %cst_139 = arith.constant dense<0.000000e+00> : vector<16xf32>
    %386 = vector.multi_reduction <add>, %385, %cst_139 [1] : vector<16x32xf32> to vector<16xf32>
    %387 = vector.shape_cast %386 : vector<16xf32> to vector<16x1xf32>
    %cst_140 = arith.constant 3.200000e+01 : f32
    %388 = vector.broadcast %cst_140 : f32 to vector<16x1xf32>
    %389 = arith.divf %387, %388 : vector<16x1xf32>
    %390 = vector.broadcast %382 : vector<16x1xf32> to vector<16x32xf32>
    %391 = arith.subf %374, %390 : vector<16x32xf32>
    %cst_141 = arith.constant 9.99999974E-6 : f32
    %392 = vector.broadcast %cst_141 : f32 to vector<16x1xf32>
    %393 = arith.addf %389, %392 : vector<16x1xf32>
    %394 = math.rsqrt %393 : vector<16x1xf32>
    %395 = vector.broadcast %394 : vector<16x1xf32> to vector<16x32xf32>
    %396 = arith.mulf %391, %395 : vector<16x32xf32>
    %397 = vector.broadcast %376 : vector<1x32xf32> to vector<16x32xf32>
    %398 = arith.mulf %396, %397 : vector<16x32xf32>
    %399 = vector.broadcast %378 : vector<1x32xf32> to vector<16x32xf32>
    %400 = arith.addf %398, %399 : vector<16x32xf32>
    %c0_142 = arith.constant 0 : index
    %c0_143 = arith.constant 0 : index
    %401 = vector.load %arg2[%c0_142, %c0_143] : memref<2x16xbf16, #tpu.memory_space<vmem>>, vector<2x16xbf16>
    %402 = arith.truncf %400 : vector<16x32xf32> to vector<16x32xbf16>
    %cst_144 = arith.constant dense<0.000000e+00> : vector<2x32xf32>
    %403 = tpu.matmul %401, %402, %cst_144 {dimension_numbers = #tpu.dot_dimension_numbers<[1], [0], [0], [1], [0, 0, 1, 1], [], []>} : vector<2x16xbf16>, vector<16x32xbf16>, vector<2x32xf32> -> vector<2x32xf32>
    %404 = arith.truncf %403 : vector<2x32xf32> to vector<2x32xbf16>
    %c0_145 = arith.constant 0 : index
    %c0_146 = arith.constant 0 : index
    %405 = vector.load %arg17[%c0_145, %c0_146] : memref<32x1xbf16, #tpu.memory_space<vmem>>, vector<32x1xbf16>
    %cst_147 = arith.constant dense<0.000000e+00> : vector<2x1xf32>
    %406 = tpu.matmul %404, %405, %cst_147 {dimension_numbers = #tpu.dot_dimension_numbers<[1], [0], [0], [1], [0, 0, 1, 1], [], []>} : vector<2x32xbf16>, vector<32x1xbf16>, vector<2x1xf32> -> vector<2x1xf32>
    %c0_148 = arith.constant 0 : index
    %c0_149 = arith.constant 0 : index
    %407 = vector.load %arg18[%c0_148, %c0_149] : memref<1x1xf32, #tpu.memory_space<vmem>>, vector<1x1xf32>
    %408 = vector.broadcast %407 : vector<1x1xf32> to vector<2x1xf32>
    %409 = arith.addf %406, %408 : vector<2x1xf32>
    %c0_150 = arith.constant 0 : index
    %c0_151 = arith.constant 0 : index
    %410 = vector.load %arg19[%c0_150, %c0_151] : memref<2x1xf32, #tpu.memory_space<vmem>>, vector<2x1xf32>
    tpu.vector_store %arg19[%c0_150, %c0_151], %409 {strides = array<i32>} : memref<2x1xf32, #tpu.memory_space<vmem>>, vector<2x1xf32>,
    return
  }
}

</mosaic_0001>

<llo_original>
// kernel: transformer_forward.1
$region0: #{transformer_forward.1}
  #allocation0 [shape = 'u32[]', space=smem, size = 0x4, offset = 0x4, fixed_abs, tag = 'smem constant byte address 0x4 - core index']
  #allocation1 [shape = 'u32[144,128]{1,0:T(1,128)}', space=vmem, size = 0x12000, scoped, tag = 'internal scratch']
  #allocation2 [shape = 'f32[1,1]{1,0:T(1,128)S(1)}', space=vmem, size = 0x200, scoped, tag = 'scoped memory for transformer_forward.1']
  %s0 = inlined_call_operand.vmem [shape: f32[16,4], index: 0, kind: input, shape index: {}]
  %s1 = inlined_call_operand.vmem [shape: f32[16,32], index: 1, kind: input, shape index: {}]
  %s2 = inlined_call_operand.vmem [shape: bf16[2,16], index: 2, kind: input, shape index: {}]
  %s3 = inlined_call_operand.vmem [shape: bf16[4,32], index: 3, kind: input, shape index: {}]
  %s4 = inlined_call_operand.vmem [shape: f32[1,32], index: 4, kind: input, shape index: {}]
  %s5 = inlined_call_operand.vmem [shape: bf16[2,32,96], index: 5, kind: input, shape index: {}]
  %s6 = inlined_call_operand.vmem [shape: f32[2,1,96], index: 6, kind: input, shape index: {}]
  %s7 = inlined_call_operand.vmem [shape: bf16[2,32,32], index: 7, kind: input, shape index: {}]
  %s8 = inlined_call_operand.vmem [shape: f32[2,1,32], index: 8, kind: input, shape index: {}]
  %s9 = inlined_call_operand.vmem [shape: f32[2,1,32], index: 9, kind: input, shape index: {}]
  %s10 = inlined_call_operand.vmem [shape: f32[2,1,32], index: 10, kind: input, shape index: {}]
  %s11 = inlined_call_operand.vmem [shape: bf16[2,32,64], index: 11, kind: input, shape index: {}]
  %s12 = inlined_call_operand.vmem [shape: f32[2,1,64], index: 12, kind: input, shape index: {}]
  %s13 = inlined_call_operand.vmem [shape: bf16[2,64,32], index: 13, kind: input, shape index: {}]
  %s14 = inlined_call_operand.vmem [shape: f32[2,1,32], index: 14, kind: input, shape index: {}]
  %s15 = inlined_call_operand.vmem [shape: f32[2,1,32], index: 15, kind: input, shape index: {}]
  %s16 = inlined_call_operand.vmem [shape: f32[2,1,32], index: 16, kind: input, shape index: {}]
  %s17 = inlined_call_operand.vmem [shape: bf16[32,1], index: 17, kind: input, shape index: {}]
  %s18 = inlined_call_operand.<no memory space> [shape: f32[1,1], index: 18, kind: input, shape index: {}]
  %s19 = inlined_call_operand.vmem [shape: f32[2,1], index: 19, kind: output, shape index: {}]
  %s20 = sld [smem:[#allocation0]]
  $region86: #{transformer_forward.1} parent=0
    _
  %s22 = ssub.s32 1, %s20
  %s23 = scalar_select 0, %s22, %s20
  %v24 = vstv %s18
  %25 = vst [vmem:[#allocation2] sm:$0x1] %v24
  // Predicated region
  $region2: #{transformer_forward.1} parent=0 // pred_check
    _
  $region3: #{transformer_forward.1} parent=0 // pred_check_branch
    %27 = sbr.rel (0) target = $region5
  $region4: #{transformer_forward.1} parent=0 // pred_region
    _
  $region5: #{transformer_forward.1} parent=0 // pred_fallthru
    _
  // Predicated region
  $region6: #{transformer_forward.1} parent=0 // pred_check
    _
  $region7: #{transformer_forward.1} parent=0 // pred_check_branch
    %29 = sbr.rel (0) target = $region9
  $region8: #{transformer_forward.1} parent=0 // pred_region
    _
  $region9: #{transformer_forward.1} parent=0 // pred_fallthru
    _
  // Predicated region
  $region10: #{transformer_forward.1} parent=0 // pred_check
    _
  $region11: #{transformer_forward.1} parent=0 // pred_check_branch
    %31 = sbr.rel (0) target = $region13
  $region12: #{transformer_forward.1} parent=0 // pred_region
    _
  $region13: #{transformer_forward.1} parent=0 // pred_fallthru
    _
  // Predicated region
  $region14: #{transformer_forward.1} parent=0 // pred_check
    _
  $region15: #{transformer_forward.1} parent=0 // pred_check_branch
    %33 = sbr.rel (0) target = $region17
  $region16: #{transformer_forward.1} parent=0 // pred_region
    _
  $region17: #{transformer_forward.1} parent=0 // pred_fallthru
    _
  // Predicated region
  $region18: #{transformer_forward.1} parent=0 // pred_check
    _
  $region19: #{transformer_forward.1} parent=0 // pred_check_branch
    %35 = sbr.rel (0) target = $region21
  $region20: #{transformer_forward.1} parent=0 // pred_region
    _
  $region21: #{transformer_forward.1} parent=0 // pred_fallthru
    _
  // Predicated region
  $region22: #{transformer_forward.1} parent=0 // pred_check
    _
  $region23: #{transformer_forward.1} parent=0 // pred_check_branch
    %37 = sbr.rel (0) target = $region25
  $region24: #{transformer_forward.1} parent=0 // pred_region
    _
  $region25: #{transformer_forward.1} parent=0 // pred_fallthru
    _
  // Predicated region
  $region26: #{transformer_forward.1} parent=0 // pred_check
    _
  $region27: #{transformer_forward.1} parent=0 // pred_check_branch
    %39 = sbr.rel (0) target = $region29
  $region28: #{transformer_forward.1} parent=0 // pred_region
    _
  $region29: #{transformer_forward.1} parent=0 // pred_fallthru
    _
  // Predicated region
  $region30: #{transformer_forward.1} parent=0 // pred_check
    _
  $region31: #{transformer_forward.1} parent=0 // pred_check_branch
    %41 = sbr.rel (0) target = $region33
  $region32: #{transformer_forward.1} parent=0 // pred_region
    _
  $region33: #{transformer_forward.1} parent=0 // pred_fallthru
    _
  // Predicated region
  $region34: #{transformer_forward.1} parent=0 // pred_check
    _
  $region35: #{transformer_forward.1} parent=0 // pred_check_branch
    %43 = sbr.rel (0) target = $region37
  $region36: #{transformer_forward.1} parent=0 // pred_region
    _
  $region37: #{transformer_forward.1} parent=0 // pred_fallthru
    _
  // Predicated region
  $region38: #{transformer_forward.1} parent=0 // pred_check
    _
  $region39: #{transformer_forward.1} parent=0 // pred_check_branch
    %45 = sbr.rel (0) target = $region41
  $region40: #{transformer_forward.1} parent=0 // pred_region
    _
  $region41: #{transformer_forward.1} parent=0 // pred_fallthru
    _
  // Predicated region
  $region42: #{transformer_forward.1} parent=0 // pred_check
    _
  $region43: #{transformer_forward.1} parent=0 // pred_check_branch
    %47 = sbr.rel (0) target = $region45
  $region44: #{transformer_forward.1} parent=0 // pred_region
    _
  $region45: #{transformer_forward.1} parent=0 // pred_fallthru
    _
  // Predicated region
  $region46: #{transformer_forward.1} parent=0 // pred_check
    _
  $region47: #{transformer_forward.1} parent=0 // pred_check_branch
    %49 = sbr.rel (0) target = $region49
  $region48: #{transformer_forward.1} parent=0 // pred_region
    _
  $region49: #{transformer_forward.1} parent=0 // pred_fallthru
    _
  // Predicated region
  $region50: #{transformer_forward.1} parent=0 // pred_check
    _
  $region51: #{transformer_forward.1} parent=0 // pred_check_branch
    %51 = sbr.rel (0) target = $region53
  $region52: #{transformer_forward.1} parent=0 // pred_region
    _
  $region53: #{transformer_forward.1} parent=0 // pred_fallthru
    _
  // Predicated region
  $region54: #{transformer_forward.1} parent=0 // pred_check
    _
  $region55: #{transformer_forward.1} parent=0 // pred_check_branch
    %53 = sbr.rel (0) target = $region57
  $region56: #{transformer_forward.1} parent=0 // pred_region
    _
  $region57: #{transformer_forward.1} parent=0 // pred_fallthru
    _
  // Predicated region
  $region58: #{transformer_forward.1} parent=0 // pred_check
    _
  $region59: #{transformer_forward.1} parent=0 // pred_check_branch
    %55 = sbr.rel (0) target = $region61
  $region60: #{transformer_forward.1} parent=0 // pred_region
    _
  $region61: #{transformer_forward.1} parent=0 // pred_fallthru
    _
  // Predicated region
  $region62: #{transformer_forward.1} parent=0 // pred_check
    _
  $region63: #{transformer_forward.1} parent=0 // pred_check_branch
    %57 = sbr.rel (0) target = $region65
  $region64: #{transformer_forward.1} parent=0 // pred_region
    _
  $region65: #{transformer_forward.1} parent=0 // pred_fallthru
    _
  // Predicated region
  $region66: #{transformer_forward.1} parent=0 // pred_check
    _
  $region67: #{transformer_forward.1} parent=0 // pred_check_branch
    %59 = sbr.rel (0) target = $region69
  $region68: #{transformer_forward.1} parent=0 // pred_region
    _
  $region69: #{transformer_forward.1} parent=0 // pred_fallthru
    _
  // Predicated region
  $region70: #{transformer_forward.1} parent=0 // pred_check
    _
  $region71: #{transformer_forward.1} parent=0 // pred_check_branch
    %61 = sbr.rel (0) target = $region73
  $region72: #{transformer_forward.1} parent=0 // pred_region
    _
  $region73: #{transformer_forward.1} parent=0 // pred_fallthru
    _
  // Predicated region
  $region74: #{transformer_forward.1} parent=0 // pred_check
    _
  $region75: #{transformer_forward.1} parent=0 // pred_check_branch
    %63 = sbr.rel (0) target = $region77
  $region76: #{transformer_forward.1} parent=0 // pred_region
    _
  $region77: #{transformer_forward.1} parent=0 // pred_fallthru
    _
  %v65 = vld [vmem:[%s0] sm:$0xff]
  %v66 = vld [vmem:[%s0 + $0x8] sm:$0xff]
  %v67 = vpack.c.bf16 %v66, %v65
  %v68 = vld [vmem:[%s3] sm:$0x3]
  %v69 = vld [vmem:[%s4] sm:$0x1]
  %v71 = vlaneseq
  %v72 = vshrl.u32 %v71, 7
  %v73 = vsub.s32 0, %v72
  %v74 = vrot.slane %v69, %v73
  %vm76 = vcmask 31744
  %v78 = vsel %vm76, %v67, 0
  %vm80 = vcmask 1041408
  %v82 = vsel %vm80, %v68, 0
  %84 = vmatprep.subr.bf16.mxu0 0
  %85 = vmatpush1.bf16.msra.mxu0 %v82
  %86 = vmatprep.subr.bf16.mxu0 0
  %87 = vmatpush1.bf16.msra.mxu0 0
  %88 = vmatprep.subr.bf16.mxu0 0
  %89 = vmatpush1.bf16.msra.mxu0 0
  %90 = vmatprep.subr.bf16.mxu0 0
  %91 = vmatpush1.bf16.msra.mxu0 0
  %92 = vmatprep.subr.bf16.mxu0 0
  %93 = vmatpush1.bf16.msra.mxu0 0
  %94 = vmatprep.subr.bf16.mxu0 0
  %95 = vmatpush1.bf16.msra.mxu0 0
  %96 = vmatprep.subr.bf16.mxu0 0
  %97 = vmatpush1.bf16.msra.mxu0 0
  %98 = vmatprep.subr.bf16.mxu0 0
  %99 = vmatpush1.bf16.msra.mxu0 0
  %100 = vmatprep.subr.bf16.mxu0 0
  %101 = vmatpush1.bf16.msra.mxu0 0
  %102 = vmatprep.subr.bf16.mxu0 0
  %103 = vmatpush1.bf16.msra.mxu0 0
  %104 = vmatprep.subr.bf16.mxu0 0
  %105 = vmatpush1.bf16.msra.mxu0 0
  %106 = vmatprep.subr.bf16.mxu0 0
  %107 = vmatpush1.bf16.msra.mxu0 0
  %108 = vmatprep.subr.bf16.mxu0 0
  %109 = vmatpush1.bf16.msra.mxu0 0
  %110 = vmatprep.subr.bf16.mxu0 0
  %111 = vmatpush1.bf16.msra.mxu0 0
  %112 = vmatprep.subr.bf16.mxu0 0
  %113 = vmatpush1.bf16.msra.mxu0 0
  %114 = vmatprep.subr.bf16.mxu0 0
  %115 = vmatpush1.bf16.msra.mxu0 0
  %116 = vmatprep.mubr.bf16.mxu0 0
  %117 = vmatmul.mubr.bf16.gmra.mrb[0].mxu0 %v78
  %v118 = vpop.f32.mrb[0].mxu0
  %v119 = vadd.f32 %v74, %v118
  %v120 = vpop.f32.mrb[0].mxu0
  %v121 = vpop.f32.mrb[0].mxu0
  %v122 = vadd.f32 %v74, %v121
  %v123 = vpop.f32.mrb[0].mxu0
  %124 = vdwg.mxu0
  %v125 = vld [vmem:[%s1] sm:$0xff]
  %v126 = vld [vmem:[%s1 + $0x8] sm:$0xff]
  %v127 = vadd.f32 %v119, %v125
  %v128 = vadd.f32 %v122, %v126
  %v129 = vlaneseq
  %v130 = vshrl.u32 %v129, 7
  %v131 = vlaneseq
  %v132 = vand.u32 %v131, 127
  %vm133 = vcmp.le.s32.totalorder %v132, %v130
  %v134 = vsel %vm133, 0.0, -1e+30
  %v135 = vpack.c.bf16 %v128, %v127
  %v136 = vld [vmem:[%s5] sm:$0xf]
  %v137 = vld [vmem:[%s5 + $0x4] sm:$0xf]
  %v138 = vld [vmem:[%s5 + $0x8] sm:$0xf]
  %v139 = vld [vmem:[%s5 + $0xc] sm:$0xf]
  %v140 = vld [vmem:[%s6] sm:$0x1]
  %v142 = vlaneseq
  %v143 = vshrl.u32 %v142, 7
  %v144 = vsub.s32 0, %v143
  %v145 = vrot.slane %v140, %v144
  %v151 = vunpack.c.l.b16 %v136
  %v152 = vunpack.c.l.b16 %v137
  %v153 = vunpack.c.l.b16 %v138
  %v154 = vunpack.c.l.b16 %v139
  %v155 = vpack.c.b16 %v152, %v151
  %v156 = vpack.c.b16 %v154, %v153
  %vm159 = vcmask 261120
  %v161 = vsel %vm159, %v135, 0
  %163 = vmatprep.subr.bf16.mxu0 0
  %164 = vmatpush1.bf16.msra.mxu0 %v155
  %165 = vmatprep.subr.bf16.mxu0 0
  %166 = vmatpush1.bf16.msra.mxu0 %v156
  %167 = vmatprep.subr.bf16.mxu0 0
  %168 = vmatpush1.bf16.msra.mxu0 0
  %169 = vmatprep.subr.bf16.mxu0 0
  %170 = vmatpush1.bf16.msra.mxu0 0
  %171 = vmatprep.subr.bf16.mxu0 0
  %172 = vmatpush1.bf16.msra.mxu0 0
  %173 = vmatprep.subr.bf16.mxu0 0
  %174 = vmatpush1.bf16.msra.mxu0 0
  %175 = vmatprep.subr.bf16.mxu0 0
  %176 = vmatpush1.bf16.msra.mxu0 0
  %177 = vmatprep.subr.bf16.mxu0 0
  %178 = vmatpush1.bf16.msra.mxu0 0
  %179 = vmatprep.subr.bf16.mxu0 0
  %180 = vmatpush1.bf16.msra.mxu0 0
  %181 = vmatprep.subr.bf16.mxu0 0
  %182 = vmatpush1.bf16.msra.mxu0 0
  %183 = vmatprep.subr.bf16.mxu0 0
  %184 = vmatpush1.bf16.msra.mxu0 0
  %185 = vmatprep.subr.bf16.mxu0 0
  %186 = vmatpush1.bf16.msra.mxu0 0
  %187 = vmatprep.subr.bf16.mxu0 0
  %188 = vmatpush1.bf16.msra.mxu0 0
  %189 = vmatprep.subr.bf16.mxu0 0
  %190 = vmatpush1.bf16.msra.mxu0 0
  %191 = vmatprep.subr.bf16.mxu0 0
  %192 = vmatpush1.bf16.msra.mxu0 0
  %193 = vmatprep.subr.bf16.mxu0 0
  %194 = vmatpush1.bf16.msra.mxu0 0
  %195 = vmatprep.mubr.bf16.mxu0 0
  %196 = vmatmul.mubr.bf16.gmra.mrb[0].mxu0 %v161
  %v197 = vpop.f32.mrb[0].mxu0
  %v198 = vadd.f32 %v145, %v197
  %v199 = vpop.f32.mrb[0].mxu0
  %v200 = vpop.f32.mrb[0].mxu0
  %v201 = vadd.f32 %v145, %v200
  %v202 = vpop.f32.mrb[0].mxu0
  %203 = vdwg.mxu0
  %v204 = vpack.c.bf16 %v198, %v198
  %v205 = vpack.c.bf16 %v201, %v201
  %207 = vrot.lane.b32.xlu0 %v204, 96
  %v208 = vpop.permute.xlu0 %207
  %vm209 = vcmask 64512
  %v211 = vsel %vm209, %v204, 0
  %v214 = vsel %vm209, %v208, 0
  %216 = vmatprep.subr.bf16.mxu0 0
  %217 = vmatpush1.bf16.xpose.msra.mxu0 %v214
  %218 = vmatprep.subr.bf16.mxu0 0
  %219 = vmatpush1.bf16.xpose.msra.mxu0 0
  %220 = vmatprep.subr.bf16.mxu0 0
  %221 = vmatpush1.bf16.xpose.msra.mxu0 0
  %222 = vmatprep.subr.bf16.mxu0 0
  %223 = vmatpush1.bf16.xpose.msra.mxu0 0
  %224 = vmatprep.subr.bf16.mxu0 0
  %225 = vmatpush1.bf16.xpose.msra.mxu0 0
  %226 = vmatprep.subr.bf16.mxu0 0
  %227 = vmatpush1.bf16.xpose.msra.mxu0 0
  %228 = vmatprep.subr.bf16.mxu0 0
  %229 = vmatpush1.bf16.xpose.msra.mxu0 0
  %230 = vmatprep.subr.bf16.mxu0 0
  %231 = vmatpush1.bf16.xpose.msra.mxu0 0
  %232 = vmatprep.subr.bf16.mxu0 0
  %233 = vmatpush1.bf16.xpose.msra.mxu0 0
  %234 = vmatprep.subr.bf16.mxu0 0
  %235 = vmatpush1.bf16.xpose.msra.mxu0 0
  %236 = vmatprep.subr.bf16.mxu0 0
  %237 = vmatpush1.bf16.xpose.msra.mxu0 0
  %238 = vmatprep.subr.bf16.mxu0 0
  %239 = vmatpush1.bf16.xpose.msra.mxu0 0
  %240 = vmatprep.subr.bf16.mxu0 0
  %241 = vmatpush1.bf16.xpose.msra.mxu0 0
  %242 = vmatprep.subr.bf16.mxu0 0
  %243 = vmatpush1.bf16.xpose.msra.mxu0 0
  %244 = vmatprep.subr.bf16.mxu0 0
  %245 = vmatpush1.bf16.xpose.msra.mxu0 0
  %246 = vmatprep.subr.bf16.mxu0 0
  %247 = vmatpush1.bf16.xpose.msra.mxu0 0
  %248 = vmatprep.mubr.bf16.mxu0 0
  %249 = vmatmul.mubr.bf16.gmra.mrb[0].mxu0 %v211
  %v250 = vpop.f32.mrb[0].mxu0
  %v251 = vadd.f32 %v134, %v250
  %v252 = vpop.f32.mrb[0].mxu0
  %v253 = vpop.f32.mrb[0].mxu0
  %v254 = vpop.f32.mrb[0].mxu0
  %255 = vdwg.mxu0
  %257 = vrot.lane.b32.xlu0 %v205, 96
  %v258 = vpop.permute.xlu0 %257
  %v260 = vsel %vm209, %v205, 0
  %v263 = vsel %vm209, %v258, 0
  %265 = vmatprep.subr.bf16.mxu0 0
  %266 = vmatpush1.bf16.xpose.msra.mxu0 %v263
  %267 = vmatprep.subr.bf16.mxu0 0
  %268 = vmatpush1.bf16.xpose.msra.mxu0 0
  %269 = vmatprep.subr.bf16.mxu0 0
  %270 = vmatpush1.bf16.xpose.msra.mxu0 0
  %271 = vmatprep.subr.bf16.mxu0 0
  %272 = vmatpush1.bf16.xpose.msra.mxu0 0
  %273 = vmatprep.subr.bf16.mxu0 0
  %274 = vmatpush1.bf16.xpose.msra.mxu0 0
  %275 = vmatprep.subr.bf16.mxu0 0
  %276 = vmatpush1.bf16.xpose.msra.mxu0 0
  %277 = vmatprep.subr.bf16.mxu0 0
  %278 = vmatpush1.bf16.xpose.msra.mxu0 0
  %279 = vmatprep.subr.bf16.mxu0 0
  %280 = vmatpush1.bf16.xpose.msra.mxu0 0
  %281 = vmatprep.subr.bf16.mxu0 0
  %282 = vmatpush1.bf16.xpose.msra.mxu0 0
  %283 = vmatprep.subr.bf16.mxu0 0
  %284 = vmatpush1.bf16.xpose.msra.mxu0 0
  %285 = vmatprep.subr.bf16.mxu0 0
  %286 = vmatpush1.bf16.xpose.msra.mxu0 0
  %287 = vmatprep.subr.bf16.mxu0 0
  %288 = vmatpush1.bf16.xpose.msra.mxu0 0
  %289 = vmatprep.subr.bf16.mxu0 0
  %290 = vmatpush1.bf16.xpose.msra.mxu0 0
  %291 = vmatprep.subr.bf16.mxu0 0
  %292 = vmatpush1.bf16.xpose.msra.mxu0 0
  %293 = vmatprep.subr.bf16.mxu0 0
  %294 = vmatpush1.bf16.xpose.msra.mxu0 0
  %295 = vmatprep.subr.bf16.mxu0 0
  %296 = vmatpush1.bf16.xpose.msra.mxu0 0
  %297 = vmatprep.mubr.bf16.mxu0 0
  %298 = vmatmul.mubr.bf16.gmra.mrb[0].mxu0 %v260
  %v299 = vpop.f32.mrb[0].mxu0
  %v300 = vadd.f32 %v134, %v299
  %v301 = vpop.f32.mrb[0].mxu0
  %v302 = vpop.f32.mrb[0].mxu0
  %v303 = vpop.f32.mrb[0].mxu0
  %304 = vdwg.mxu0
  %v305 = vsel %vm209, %v251, -inf
  %306 = vmax.xlane.f32.xlu0 %v305
  %v307 = vpop.xlane.xlu0 %306
  %v308 = vsel %vm209, %v300, -inf
  %309 = vmax.xlane.f32.xlu0 %v308
  %v310 = vpop.xlane.xlu0 %309
  %v311 = vsub.f32 %v251, %v307
  %v312 = vsub.f32 %v300, %v310
  %v313 = vmul.f32 %v311, 1.442695
  %v314 = vpow.pop %v313
  %v315 = vmul.f32 %v312, 1.442695
  %v316 = vpow.pop %v315
  %v317 = vsel %vm209, %v314, 0.0
  %318 = vadd.xlane.f32.xlu0 %v317
  %v319 = vpop.xlane.xlu0 %318
  %v320 = vsel %vm209, %v316, 0.0
  %321 = vadd.xlane.f32.xlu0 %v320
  %v322 = vpop.xlane.xlu0 %321
  %v323 = vrcp.pop %v319
  %v324 = vrcp.pop %v322
  %v325 = vmul.f32 %v314, %v323
  %v326 = vmul.f32 %v316, %v324
  %v327 = vpack.c.bf16 %v325, %v325
  %v328 = vpack.c.bf16 %v326, %v326
  %329 = vrot.lane.b32.xlu0 %v204, 64
  %v330 = vpop.permute.xlu0 %329
  %v332 = vsel %vm209, %v327, 0
  %vm334 = vcmask 1043456
  %v336 = vsel %vm334, %v330, 0
  %338 = vmatprep.subr.bf16.mxu0 0
  %339 = vmatpush1.bf16.msra.mxu0 %v336
  %340 = vmatprep.subr.bf16.mxu0 0
  %341 = vmatpush1.bf16.msra.mxu0 0
  %342 = vmatprep.subr.bf16.mxu0 0
  %343 = vmatpush1.bf16.msra.mxu0 0
  %344 = vmatprep.subr.bf16.mxu0 0
  %345 = vmatpush1.bf16.msra.mxu0 0
  %346 = vmatprep.subr.bf16.mxu0 0
  %347 = vmatpush1.bf16.msra.mxu0 0
  %348 = vmatprep.subr.bf16.mxu0 0
  %349 = vmatpush1.bf16.msra.mxu0 0
  %350 = vmatprep.subr.bf16.mxu0 0
  %351 = vmatpush1.bf16.msra.mxu0 0
  %352 = vmatprep.subr.bf16.mxu0 0
  %353 = vmatpush1.bf16.msra.mxu0 0
  %354 = vmatprep.subr.bf16.mxu0 0
  %355 = vmatpush1.bf16.msra.mxu0 0
  %356 = vmatprep.subr.bf16.mxu0 0
  %357 = vmatpush1.bf16.msra.mxu0 0
  %358 = vmatprep.subr.bf16.mxu0 0
  %359 = vmatpush1.bf16.msra.mxu0 0
  %360 = vmatprep.subr.bf16.mxu0 0
  %361 = vmatpush1.bf16.msra.mxu0 0
  %362 = vmatprep.subr.bf16.mxu0 0
  %363 = vmatpush1.bf16.msra.mxu0 0
  %364 = vmatprep.subr.bf16.mxu0 0
  %365 = vmatpush1.bf16.msra.mxu0 0
  %366 = vmatprep.subr.bf16.mxu0 0
  %367 = vmatpush1.bf16.msra.mxu0 0
  %368 = vmatprep.subr.bf16.mxu0 0
  %369 = vmatpush1.bf16.msra.mxu0 0
  %370 = vmatprep.mubr.bf16.mxu0 0
  %371 = vmatmul.mubr.bf16.gmra.mrb[0].mxu0 %v332
  %v372 = vpop.f32.mrb[0].mxu0
  %v373 = vadd.f32 0.0, %v372
  %v374 = vpop.f32.mrb[0].mxu0
  %v375 = vpop.f32.mrb[0].mxu0
  %v376 = vpop.f32.mrb[0].mxu0
  %377 = vdwg.mxu0
  %378 = vrot.lane.b32.xlu0 %v205, 64
  %v379 = vpop.permute.xlu0 %378
  %v381 = vsel %vm209, %v328, 0
  %v384 = vsel %vm334, %v379, 0
  %386 = vmatprep.subr.bf16.mxu0 0
  %387 = vmatpush1.bf16.msra.mxu0 %v384
  %388 = vmatprep.subr.bf16.mxu0 0
  %389 = vmatpush1.bf16.msra.mxu0 0
  %390 = vmatprep.subr.bf16.mxu0 0
  %391 = vmatpush1.bf16.msra.mxu0 0
  %392 = vmatprep.subr.bf16.mxu0 0
  %393 = vmatpush1.bf16.msra.mxu0 0
  %394 = vmatprep.subr.bf16.mxu0 0
  %395 = vmatpush1.bf16.msra.mxu0 0
  %396 = vmatprep.subr.bf16.mxu0 0
  %397 = vmatpush1.bf16.msra.mxu0 0
  %398 = vmatprep.subr.bf16.mxu0 0
  %399 = vmatpush1.bf16.msra.mxu0 0
  %400 = vmatprep.subr.bf16.mxu0 0
  %401 = vmatpush1.bf16.msra.mxu0 0
  %402 = vmatprep.subr.bf16.mxu0 0
  %403 = vmatpush1.bf16.msra.mxu0 0
  %404 = vmatprep.subr.bf16.mxu0 0
  %405 = vmatpush1.bf16.msra.mxu0 0
  %406 = vmatprep.subr.bf16.mxu0 0
  %407 = vmatpush1.bf16.msra.mxu0 0
  %408 = vmatprep.subr.bf16.mxu0 0
  %409 = vmatpush1.bf16.msra.mxu0 0
  %410 = vmatprep.subr.bf16.mxu0 0
  %411 = vmatpush1.bf16.msra.mxu0 0
  %412 = vmatprep.subr.bf16.mxu0 0
  %413 = vmatpush1.bf16.msra.mxu0 0
  %414 = vmatprep.subr.bf16.mxu0 0
  %415 = vmatpush1.bf16.msra.mxu0 0
  %416 = vmatprep.subr.bf16.mxu0 0
  %417 = vmatpush1.bf16.msra.mxu0 0
  %418 = vmatprep.mubr.bf16.mxu0 0
  %419 = vmatmul.mubr.bf16.gmra.mrb[0].mxu0 %v381
  %v420 = vpop.f32.mrb[0].mxu0
  %v421 = vadd.f32 0.0, %v420
  %v422 = vpop.f32.mrb[0].mxu0
  %v423 = vpop.f32.mrb[0].mxu0
  %v424 = vpop.f32.mrb[0].mxu0
  %425 = vdwg.mxu0
  %426 = vrot.lane.b32.xlu0 %v204, 120
  %v427 = vpop.permute.xlu0 %426
  %428 = vrot.lane.b32.xlu0 %v204, 88
  %v429 = vpop.permute.xlu0 %428
  %v431 = vsel %vm209, %v427, 0
  %v434 = vsel %vm209, %v429, 0
  %436 = vmatprep.subr.bf16.mxu0 0
  %437 = vmatpush1.bf16.xpose.msra.mxu0 %v434
  %438 = vmatprep.subr.bf16.mxu0 0
  %439 = vmatpush1.bf16.xpose.msra.mxu0 0
  %440 = vmatprep.subr.bf16.mxu0 0
  %441 = vmatpush1.bf16.xpose.msra.mxu0 0
  %442 = vmatprep.subr.bf16.mxu0 0
  %443 = vmatpush1.bf16.xpose.msra.mxu0 0
  %444 = vmatprep.subr.bf16.mxu0 0
  %445 = vmatpush1.bf16.xpose.msra.mxu0 0
  %446 = vmatprep.subr.bf16.mxu0 0
  %447 = vmatpush1.bf16.xpose.msra.mxu0 0
  %448 = vmatprep.subr.bf16.mxu0 0
  %449 = vmatpush1.bf16.xpose.msra.mxu0 0
  %450 = vmatprep.subr.bf16.mxu0 0
  %451 = vmatpush1.bf16.xpose.msra.mxu0 0
  %452 = vmatprep.subr.bf16.mxu0 0
  %453 = vmatpush1.bf16.xpose.msra.mxu0 0
  %454 = vmatprep.subr.bf16.mxu0 0
  %455 = vmatpush1.bf16.xpose.msra.mxu0 0
  %456 = vmatprep.subr.bf16.mxu0 0
  %457 = vmatpush1.bf16.xpose.msra.mxu0 0
  %458 = vmatprep.subr.bf16.mxu0 0
  %459 = vmatpush1.bf16.xpose.msra.mxu0 0
  %460 = vmatprep.subr.bf16.mxu0 0
  %461 = vmatpush1.bf16.xpose.msra.mxu0 0
  %462 = vmatprep.subr.bf16.mxu0 0
  %463 = vmatpush1.bf16.xpose.msra.mxu0 0
  %464 = vmatprep.subr.bf16.mxu0 0
  %465 = vmatpush1.bf16.xpose.msra.mxu0 0
  %466 = vmatprep.subr.bf16.mxu0 0
  %467 = vmatpush1.bf16.xpose.msra.mxu0 0
  %468 = vmatprep.mubr.bf16.mxu0 0
  %469 = vmatmul.mubr.bf16.gmra.mrb[0].mxu0 %v431
  %v470 = vpop.f32.mrb[0].mxu0
  %v471 = vadd.f32 %v134, %v470
  %v472 = vpop.f32.mrb[0].mxu0
  %v473 = vpop.f32.mrb[0].mxu0
  %v474 = vpop.f32.mrb[0].mxu0
  %475 = vdwg.mxu0
  %476 = vrot.lane.b32.xlu0 %v205, 120
  %v477 = vpop.permute.xlu0 %476
  %478 = vrot.lane.b32.xlu0 %v205, 88
  %v479 = vpop.permute.xlu0 %478
  %v481 = vsel %vm209, %v477, 0
  %v484 = vsel %vm209, %v479, 0
  %486 = vmatprep.subr.bf16.mxu0 0
  %487 = vmatpush1.bf16.xpose.msra.mxu0 %v484
  %488 = vmatprep.subr.bf16.mxu0 0
  %489 = vmatpush1.bf16.xpose.msra.mxu0 0
  %490 = vmatprep.subr.bf16.mxu0 0
  %491 = vmatpush1.bf16.xpose.msra.mxu0 0
  %492 = vmatprep.subr.bf16.mxu0 0
  %493 = vmatpush1.bf16.xpose.msra.mxu0 0
  %494 = vmatprep.subr.bf16.mxu0 0
  %495 = vmatpush1.bf16.xpose.msra.mxu0 0
  %496 = vmatprep.subr.bf16.mxu0 0
  %497 = vmatpush1.bf16.xpose.msra.mxu0 0
  %498 = vmatprep.subr.bf16.mxu0 0
  %499 = vmatpush1.bf16.xpose.msra.mxu0 0
  %500 = vmatprep.subr.bf16.mxu0 0
  %501 = vmatpush1.bf16.xpose.msra.mxu0 0
  %502 = vmatprep.subr.bf16.mxu0 0
  %503 = vmatpush1.bf16.xpose.msra.mxu0 0
  %504 = vmatprep.subr.bf16.mxu0 0
  %505 = vmatpush1.bf16.xpose.msra.mxu0 0
  %506 = vmatprep.subr.bf16.mxu0 0
  %507 = vmatpush1.bf16.xpose.msra.mxu0 0
  %508 = vmatprep.subr.bf16.mxu0 0
  %509 = vmatpush1.bf16.xpose.msra.mxu0 0
  %510 = vmatprep.subr.bf16.mxu0 0
  %511 = vmatpush1.bf16.xpose.msra.mxu0 0
  %512 = vmatprep.subr.bf16.mxu0 0
  %513 = vmatpush1.bf16.xpose.msra.mxu0 0
  %514 = vmatprep.subr.bf16.mxu0 0
  %515 = vmatpush1.bf16.xpose.msra.mxu0 0
  %516 = vmatprep.subr.bf16.mxu0 0
  %517 = vmatpush1.bf16.xpose.msra.mxu0 0
  %518 = vmatprep.mubr.bf16.mxu0 0
  %519 = vmatmul.mubr.bf16.gmra.mrb[0].mxu0 %v481
  %v520 = vpop.f32.mrb[0].mxu0
  %v521 = vadd.f32 %v134, %v520
  %v522 = vpop.f32.mrb[0].mxu0
  %v523 = vpop.f32.mrb[0].mxu0
  %v524 = vpop.f32.mrb[0].mxu0
  %525 = vdwg.mxu0
  %v526 = vsel %vm209, %v471, -inf
  %527 = vmax.xlane.f32.xlu0 %v526
  %v528 = vpop.xlane.xlu0 %527
  %v529 = vsel %vm209, %v521, -inf
  %530 = vmax.xlane.f32.xlu0 %v529
  %v531 = vpop.xlane.xlu0 %530
  %v532 = vsub.f32 %v471, %v528
  %v533 = vsub.f32 %v521, %v531
  %v534 = vmul.f32 %v532, 1.442695
  %v535 = vpow.pop %v534
  %v536 = vmul.f32 %v533, 1.442695
  %v537 = vpow.pop %v536
  %v538 = vsel %vm209, %v535, 0.0
  %539 = vadd.xlane.f32.xlu0 %v538
  %v540 = vpop.xlane.xlu0 %539
  %v541 = vsel %vm209, %v537, 0.0
  %542 = vadd.xlane.f32.xlu0 %v541
  %v543 = vpop.xlane.xlu0 %542
  %v544 = vrcp.pop %v540
  %v545 = vrcp.pop %v543
  %v546 = vmul.f32 %v535, %v544
  %v547 = vmul.f32 %v537, %v545
  %v548 = vpack.c.bf16 %v546, %v546
  %v549 = vpack.c.bf16 %v547, %v547
  %550 = vrot.lane.b32.xlu0 %v204, 56
  %v551 = vpop.permute.xlu0 %550
  %v553 = vsel %vm209, %v548, 0
  %v556 = vsel %vm334, %v551, 0
  %558 = vmatprep.subr.bf16.mxu0 0
  %559 = vmatpush1.bf16.msra.mxu0 %v556
  %560 = vmatprep.subr.bf16.mxu0 0
  %561 = vmatpush1.bf16.msra.mxu0 0
  %562 = vmatprep.subr.bf16.mxu0 0
  %563 = vmatpush1.bf16.msra.mxu0 0
  %564 = vmatprep.subr.bf16.mxu0 0
  %565 = vmatpush1.bf16.msra.mxu0 0
  %566 = vmatprep.subr.bf16.mxu0 0
  %567 = vmatpush1.bf16.msra.mxu0 0
  %568 = vmatprep.subr.bf16.mxu0 0
  %569 = vmatpush1.bf16.msra.mxu0 0
  %570 = vmatprep.subr.bf16.mxu0 0
  %571 = vmatpush1.bf16.msra.mxu0 0
  %572 = vmatprep.subr.bf16.mxu0 0
  %573 = vmatpush1.bf16.msra.mxu0 0
  %574 = vmatprep.subr.bf16.mxu0 0
  %575 = vmatpush1.bf16.msra.mxu0 0
  %576 = vmatprep.subr.bf16.mxu0 0
  %577 = vmatpush1.bf16.msra.mxu0 0
  %578 = vmatprep.subr.bf16.mxu0 0
  %579 = vmatpush1.bf16.msra.mxu0 0
  %580 = vmatprep.subr.bf16.mxu0 0
  %581 = vmatpush1.bf16.msra.mxu0 0
  %582 = vmatprep.subr.bf16.mxu0 0
  %583 = vmatpush1.bf16.msra.mxu0 0
  %584 = vmatprep.subr.bf16.mxu0 0
  %585 = vmatpush1.bf16.msra.mxu0 0
  %586 = vmatprep.subr.bf16.mxu0 0
  %587 = vmatpush1.bf16.msra.mxu0 0
  %588 = vmatprep.subr.bf16.mxu0 0
  %589 = vmatpush1.bf16.msra.mxu0 0
  %590 = vmatprep.mubr.bf16.mxu0 0
  %591 = vmatmul.mubr.bf16.gmra.mrb[0].mxu0 %v553
  %v592 = vpop.f32.mrb[0].mxu0
  %v593 = vadd.f32 0.0, %v592
  %v594 = vpop.f32.mrb[0].mxu0
  %v595 = vpop.f32.mrb[0].mxu0
  %v596 = vpop.f32.mrb[0].mxu0
  %597 = vdwg.mxu0
  %598 = vrot.lane.b32.xlu0 %v205, 56
  %v599 = vpop.permute.xlu0 %598
  %v601 = vsel %vm209, %v549, 0
  %v604 = vsel %vm334, %v599, 0
  %606 = vmatprep.subr.bf16.mxu0 0
  %607 = vmatpush1.bf16.msra.mxu0 %v604
  %608 = vmatprep.subr.bf16.mxu0 0
  %609 = vmatpush1.bf16.msra.mxu0 0
  %610 = vmatprep.subr.bf16.mxu0 0
  %611 = vmatpush1.bf16.msra.mxu0 0
  %612 = vmatprep.subr.bf16.mxu0 0
  %613 = vmatpush1.bf16.msra.mxu0 0
  %614 = vmatprep.subr.bf16.mxu0 0
  %615 = vmatpush1.bf16.msra.mxu0 0
  %616 = vmatprep.subr.bf16.mxu0 0
  %617 = vmatpush1.bf16.msra.mxu0 0
  %618 = vmatprep.subr.bf16.mxu0 0
  %619 = vmatpush1.bf16.msra.mxu0 0
  %620 = vmatprep.subr.bf16.mxu0 0
  %621 = vmatpush1.bf16.msra.mxu0 0
  %622 = vmatprep.subr.bf16.mxu0 0
  %623 = vmatpush1.bf16.msra.mxu0 0
  %624 = vmatprep.subr.bf16.mxu0 0
  %625 = vmatpush1.bf16.msra.mxu0 0
  %626 = vmatprep.subr.bf16.mxu0 0
  %627 = vmatpush1.bf16.msra.mxu0 0
  %628 = vmatprep.subr.bf16.mxu0 0
  %629 = vmatpush1.bf16.msra.mxu0 0
  %630 = vmatprep.subr.bf16.mxu0 0
  %631 = vmatpush1.bf16.msra.mxu0 0
  %632 = vmatprep.subr.bf16.mxu0 0
  %633 = vmatpush1.bf16.msra.mxu0 0
  %634 = vmatprep.subr.bf16.mxu0 0
  %635 = vmatpush1.bf16.msra.mxu0 0
  %636 = vmatprep.subr.bf16.mxu0 0
  %637 = vmatpush1.bf16.msra.mxu0 0
  %638 = vmatprep.mubr.bf16.mxu0 0
  %639 = vmatmul.mubr.bf16.gmra.mrb[0].mxu0 %v601
  %v640 = vpop.f32.mrb[0].mxu0
  %v641 = vadd.f32 0.0, %v640
  %v642 = vpop.f32.mrb[0].mxu0
  %v643 = vpop.f32.mrb[0].mxu0
  %v644 = vpop.f32.mrb[0].mxu0
  %645 = vdwg.mxu0
  %646 = vrot.lane.b32.xlu0 %v204, 112
  %v647 = vpop.permute.xlu0 %646
  %648 = vrot.lane.b32.xlu0 %v204, 80
  %v649 = vpop.permute.xlu0 %648
  %v651 = vsel %vm209, %v647, 0
  %v654 = vsel %vm209, %v649, 0
  %656 = vmatprep.subr.bf16.mxu0 0
  %657 = vmatpush1.bf16.xpose.msra.mxu0 %v654
  %658 = vmatprep.subr.bf16.mxu0 0
  %659 = vmatpush1.bf16.xpose.msra.mxu0 0
  %660 = vmatprep.subr.bf16.mxu0 0
  %661 = vmatpush1.bf16.xpose.msra.mxu0 0
  %662 = vmatprep.subr.bf16.mxu0 0
  %663 = vmatpush1.bf16.xpose.msra.mxu0 0
  %664 = vmatprep.subr.bf16.mxu0 0
  %665 = vmatpush1.bf16.xpose.msra.mxu0 0
  %666 = vmatprep.subr.bf16.mxu0 0
  %667 = vmatpush1.bf16.xpose.msra.mxu0 0
  %668 = vmatprep.subr.bf16.mxu0 0
  %669 = vmatpush1.bf16.xpose.msra.mxu0 0
  %670 = vmatprep.subr.bf16.mxu0 0
  %671 = vmatpush1.bf16.xpose.msra.mxu0 0
  %672 = vmatprep.subr.bf16.mxu0 0
  %673 = vmatpush1.bf16.xpose.msra.mxu0 0
  %674 = vmatprep.subr.bf16.mxu0 0
  %675 = vmatpush1.bf16.xpose.msra.mxu0 0
  %676 = vmatprep.subr.bf16.mxu0 0
  %677 = vmatpush1.bf16.xpose.msra.mxu0 0
  %678 = vmatprep.subr.bf16.mxu0 0
  %679 = vmatpush1.bf16.xpose.msra.mxu0 0
  %680 = vmatprep.subr.bf16.mxu0 0
  %681 = vmatpush1.bf16.xpose.msra.mxu0 0
  %682 = vmatprep.subr.bf16.mxu0 0
  %683 = vmatpush1.bf16.xpose.msra.mxu0 0
  %684 = vmatprep.subr.bf16.mxu0 0
  %685 = vmatpush1.bf16.xpose.msra.mxu0 0
  %686 = vmatprep.subr.bf16.mxu0 0
  %687 = vmatpush1.bf16.xpose.msra.mxu0 0
  %688 = vmatprep.mubr.bf16.mxu0 0
  %689 = vmatmul.mubr.bf16.gmra.mrb[0].mxu0 %v651
  %v690 = vpop.f32.mrb[0].mxu0
  %v691 = vadd.f32 %v134, %v690
  %v692 = vpop.f32.mrb[0].mxu0
  %v693 = vpop.f32.mrb[0].mxu0
  %v694 = vpop.f32.mrb[0].mxu0
  %695 = vdwg.mxu0
  %696 = vrot.lane.b32.xlu0 %v205, 112
  %v697 = vpop.permute.xlu0 %696
  %698 = vrot.lane.b32.xlu0 %v205, 80
  %v699 = vpop.permute.xlu0 %698
  %v701 = vsel %vm209, %v697, 0
  %v704 = vsel %vm209, %v699, 0
  %706 = vmatprep.subr.bf16.mxu0 0
  %707 = vmatpush1.bf16.xpose.msra.mxu0 %v704
  %708 = vmatprep.subr.bf16.mxu0 0
  %709 = vmatpush1.bf16.xpose.msra.mxu0 0
  %710 = vmatprep.subr.bf16.mxu0 0
  %711 = vmatpush1.bf16.xpose.msra.mxu0 0
  %712 = vmatprep.subr.bf16.mxu0 0
  %713 = vmatpush1.bf16.xpose.msra.mxu0 0
  %714 = vmatprep.subr.bf16.mxu0 0
  %715 = vmatpush1.bf16.xpose.msra.mxu0 0
  %716 = vmatprep.subr.bf16.mxu0 0
  %717 = vmatpush1.bf16.xpose.msra.mxu0 0
  %718 = vmatprep.subr.bf16.mxu0 0
  %719 = vmatpush1.bf16.xpose.msra.mxu0 0
  %720 = vmatprep.subr.bf16.mxu0 0
  %721 = vmatpush1.bf16.xpose.msra.mxu0 0
  %722 = vmatprep.subr.bf16.mxu0 0
  %723 = vmatpush1.bf16.xpose.msra.mxu0 0
  %724 = vmatprep.subr.bf16.mxu0 0
  %725 = vmatpush1.bf16.xpose.msra.mxu0 0
  %726 = vmatprep.subr.bf16.mxu0 0
  %727 = vmatpush1.bf16.xpose.msra.mxu0 0
  %728 = vmatprep.subr.bf16.mxu0 0
  %729 = vmatpush1.bf16.xpose.msra.mxu0 0
  %730 = vmatprep.subr.bf16.mxu0 0
  %731 = vmatpush1.bf16.xpose.msra.mxu0 0
  %732 = vmatprep.subr.bf16.mxu0 0
  %733 = vmatpush1.bf16.xpose.msra.mxu0 0
  %734 = vmatprep.subr.bf16.mxu0 0
  %735 = vmatpush1.bf16.xpose.msra.mxu0 0
  %736 = vmatprep.subr.bf16.mxu0 0
  %737 = vmatpush1.bf16.xpose.msra.mxu0 0
  %738 = vmatprep.mubr.bf16.mxu0 0
  %739 = vmatmul.mubr.bf16.gmra.mrb[0].mxu0 %v701
  %v740 = vpop.f32.mrb[0].mxu0
  %v741 = vadd.f32 %v134, %v740
  %v742 = vpop.f32.mrb[0].mxu0
  %v743 = vpop.f32.mrb[0].mxu0
  %v744 = vpop.f32.mrb[0].mxu0
  %745 = vdwg.mxu0
  %v746 = vsel %vm209, %v691, -inf
  %747 = vmax.xlane.f32.xlu0 %v746
  %v748 = vpop.xlane.xlu0 %747
  %v749 = vsel %vm209, %v741, -inf
  %750 = vmax.xlane.f32.xlu0 %v749
  %v751 = vpop.xlane.xlu0 %750
  %v752 = vsub.f32 %v691, %v748
  %v753 = vsub.f32 %v741, %v751
  %v754 = vmul.f32 %v752, 1.442695
  %v755 = vpow.pop %v754
  %v756 = vmul.f32 %v753, 1.442695
  %v757 = vpow.pop %v756
  %v758 = vsel %vm209, %v755, 0.0
  %759 = vadd.xlane.f32.xlu0 %v758
  %v760 = vpop.xlane.xlu0 %759
  %v761 = vsel %vm209, %v757, 0.0
  %762 = vadd.xlane.f32.xlu0 %v761
  %v763 = vpop.xlane.xlu0 %762
  %v764 = vrcp.pop %v760
  %v765 = vrcp.pop %v763
  %v766 = vmul.f32 %v755, %v764
  %v767 = vmul.f32 %v757, %v765
  %v768 = vpack.c.bf16 %v766, %v766
  %v769 = vpack.c.bf16 %v767, %v767
  %770 = vrot.lane.b32.xlu0 %v204, 48
  %v771 = vpop.permute.xlu0 %770
  %v773 = vsel %vm209, %v768, 0
  %v776 = vsel %vm334, %v771, 0
  %778 = vmatprep.subr.bf16.mxu0 0
  %779 = vmatpush1.bf16.msra.mxu0 %v776
  %780 = vmatprep.subr.bf16.mxu0 0
  %781 = vmatpush1.bf16.msra.mxu0 0
  %782 = vmatprep.subr.bf16.mxu0 0
  %783 = vmatpush1.bf16.msra.mxu0 0
  %784 = vmatprep.subr.bf16.mxu0 0
  %785 = vmatpush1.bf16.msra.mxu0 0
  %786 = vmatprep.subr.bf16.mxu0 0
  %787 = vmatpush1.bf16.msra.mxu0 0
  %788 = vmatprep.subr.bf16.mxu0 0
  %789 = vmatpush1.bf16.msra.mxu0 0
  %790 = vmatprep.subr.bf16.mxu0 0
  %791 = vmatpush1.bf16.msra.mxu0 0
  %792 = vmatprep.subr.bf16.mxu0 0
  %793 = vmatpush1.bf16.msra.mxu0 0
  %794 = vmatprep.subr.bf16.mxu0 0
  %795 = vmatpush1.bf16.msra.mxu0 0
  %796 = vmatprep.subr.bf16.mxu0 0
  %797 = vmatpush1.bf16.msra.mxu0 0
  %798 = vmatprep.subr.bf16.mxu0 0
  %799 = vmatpush1.bf16.msra.mxu0 0
  %800 = vmatprep.subr.bf16.mxu0 0
  %801 = vmatpush1.bf16.msra.mxu0 0
  %802 = vmatprep.subr.bf16.mxu0 0
  %803 = vmatpush1.bf16.msra.mxu0 0
  %804 = vmatprep.subr.bf16.mxu0 0
  %805 = vmatpush1.bf16.msra.mxu0 0
  %806 = vmatprep.subr.bf16.mxu0 0
  %807 = vmatpush1.bf16.msra.mxu0 0
  %808 = vmatprep.subr.bf16.mxu0 0
  %809 = vmatpush1.bf16.msra.mxu0 0
  %810 = vmatprep.mubr.bf16.mxu0 0
  %811 = vmatmul.mubr.bf16.gmra.mrb[0].mxu0 %v773
  %v812 = vpop.f32.mrb[0].mxu0
  %v813 = vadd.f32 0.0, %v812
  %v814 = vpop.f32.mrb[0].mxu0
  %v815 = vpop.f32.mrb[0].mxu0
  %v816 = vpop.f32.mrb[0].mxu0
  %817 = vdwg.mxu0
  %818 = vrot.lane.b32.xlu0 %v205, 48
  %v819 = vpop.permute.xlu0 %818
  %v821 = vsel %vm209, %v769, 0
  %v824 = vsel %vm334, %v819, 0
  %826 = vmatprep.subr.bf16.mxu0 0
  %827 = vmatpush1.bf16.msra.mxu0 %v824
  %828 = vmatprep.subr.bf16.mxu0 0
  %829 = vmatpush1.bf16.msra.mxu0 0
  %830 = vmatprep.subr.bf16.mxu0 0
  %831 = vmatpush1.bf16.msra.mxu0 0
  %832 = vmatprep.subr.bf16.mxu0 0
  %833 = vmatpush1.bf16.msra.mxu0 0
  %834 = vmatprep.subr.bf16.mxu0 0
  %835 = vmatpush1.bf16.msra.mxu0 0
  %836 = vmatprep.subr.bf16.mxu0 0
  %837 = vmatpush1.bf16.msra.mxu0 0
  %838 = vmatprep.subr.bf16.mxu0 0
  %839 = vmatpush1.bf16.msra.mxu0 0
  %840 = vmatprep.subr.bf16.mxu0 0
  %841 = vmatpush1.bf16.msra.mxu0 0
  %842 = vmatprep.subr.bf16.mxu0 0
  %843 = vmatpush1.bf16.msra.mxu0 0
  %844 = vmatprep.subr.bf16.mxu0 0
  %845 = vmatpush1.bf16.msra.mxu0 0
  %846 = vmatprep.subr.bf16.mxu0 0
  %847 = vmatpush1.bf16.msra.mxu0 0
  %848 = vmatprep.subr.bf16.mxu0 0
  %849 = vmatpush1.bf16.msra.mxu0 0
  %850 = vmatprep.subr.bf16.mxu0 0
  %851 = vmatpush1.bf16.msra.mxu0 0
  %852 = vmatprep.subr.bf16.mxu0 0
  %853 = vmatpush1.bf16.msra.mxu0 0
  %854 = vmatprep.subr.bf16.mxu0 0
  %855 = vmatpush1.bf16.msra.mxu0 0
  %856 = vmatprep.subr.bf16.mxu0 0
  %857 = vmatpush1.bf16.msra.mxu0 0
  %858 = vmatprep.mubr.bf16.mxu0 0
  %859 = vmatmul.mubr.bf16.gmra.mrb[0].mxu0 %v821
  %v860 = vpop.f32.mrb[0].mxu0
  %v861 = vadd.f32 0.0, %v860
  %v862 = vpop.f32.mrb[0].mxu0
  %v863 = vpop.f32.mrb[0].mxu0
  %v864 = vpop.f32.mrb[0].mxu0
  %865 = vdwg.mxu0
  %866 = vrot.lane.b32.xlu0 %v204, 104
  %v867 = vpop.permute.xlu0 %866
  %868 = vrot.lane.b32.xlu0 %v204, 72
  %v869 = vpop.permute.xlu0 %868
  %v871 = vsel %vm209, %v867, 0
  %v874 = vsel %vm209, %v869, 0
  %876 = vmatprep.subr.bf16.mxu0 0
  %877 = vmatpush1.bf16.xpose.msra.mxu0 %v874
  %878 = vmatprep.subr.bf16.mxu0 0
  %879 = vmatpush1.bf16.xpose.msra.mxu0 0
  %880 = vmatprep.subr.bf16.mxu0 0
  %881 = vmatpush1.bf16.xpose.msra.mxu0 0
  %882 = vmatprep.subr.bf16.mxu0 0
  %883 = vmatpush1.bf16.xpose.msra.mxu0 0
  %884 = vmatprep.subr.bf16.mxu0 0
  %885 = vmatpush1.bf16.xpose.msra.mxu0 0
  %886 = vmatprep.subr.bf16.mxu0 0
  %887 = vmatpush1.bf16.xpose.msra.mxu0 0
  %888 = vmatprep.subr.bf16.mxu0 0
  %889 = vmatpush1.bf16.xpose.msra.mxu0 0
  %890 = vmatprep.subr.bf16.mxu0 0
  %891 = vmatpush1.bf16.xpose.msra.mxu0 0
  %892 = vmatprep.subr.bf16.mxu0 0
  %893 = vmatpush1.bf16.xpose.msra.mxu0 0
  %894 = vmatprep.subr.bf16.mxu0 0
  %895 = vmatpush1.bf16.xpose.msra.mxu0 0
  %896 = vmatprep.subr.bf16.mxu0 0
  %897 = vmatpush1.bf16.xpose.msra.mxu0 0
  %898 = vmatprep.subr.bf16.mxu0 0
  %899 = vmatpush1.bf16.xpose.msra.mxu0 0
  %900 = vmatprep.subr.bf16.mxu0 0
  %901 = vmatpush1.bf16.xpose.msra.mxu0 0
  %902 = vmatprep.subr.bf16.mxu0 0
  %903 = vmatpush1.bf16.xpose.msra.mxu0 0
  %904 = vmatprep.subr.bf16.mxu0 0
  %905 = vmatpush1.bf16.xpose.msra.mxu0 0
  %906 = vmatprep.subr.bf16.mxu0 0
  %907 = vmatpush1.bf16.xpose.msra.mxu0 0
  %908 = vmatprep.mubr.bf16.mxu0 0
  %909 = vmatmul.mubr.bf16.gmra.mrb[0].mxu0 %v871
  %v910 = vpop.f32.mrb[0].mxu0
  %v911 = vadd.f32 %v134, %v910
  %v912 = vpop.f32.mrb[0].mxu0
  %v913 = vpop.f32.mrb[0].mxu0
  %v914 = vpop.f32.mrb[0].mxu0
  %915 = vdwg.mxu0
  %916 = vrot.lane.b32.xlu0 %v205, 104
  %v917 = vpop.permute.xlu0 %916
  %918 = vrot.lane.b32.xlu0 %v205, 72
  %v919 = vpop.permute.xlu0 %918
  %v921 = vsel %vm209, %v917, 0
  %v924 = vsel %vm209, %v919, 0
  %926 = vmatprep.subr.bf16.mxu0 0
  %927 = vmatpush1.bf16.xpose.msra.mxu0 %v924
  %928 = vmatprep.subr.bf16.mxu0 0
  %929 = vmatpush1.bf16.xpose.msra.mxu0 0
  %930 = vmatprep.subr.bf16.mxu0 0
  %931 = vmatpush1.bf16.xpose.msra.mxu0 0
  %932 = vmatprep.subr.bf16.mxu0 0
  %933 = vmatpush1.bf16.xpose.msra.mxu0 0
  %934 = vmatprep.subr.bf16.mxu0 0
  %935 = vmatpush1.bf16.xpose.msra.mxu0 0
  %936 = vmatprep.subr.bf16.mxu0 0
  %937 = vmatpush1.bf16.xpose.msra.mxu0 0
  %938 = vmatprep.subr.bf16.mxu0 0
  %939 = vmatpush1.bf16.xpose.msra.mxu0 0
  %940 = vmatprep.subr.bf16.mxu0 0
  %941 = vmatpush1.bf16.xpose.msra.mxu0 0
  %942 = vmatprep.subr.bf16.mxu0 0
  %943 = vmatpush1.bf16.xpose.msra.mxu0 0
  %944 = vmatprep.subr.bf16.mxu0 0
  %945 = vmatpush1.bf16.xpose.msra.mxu0 0
  %946 = vmatprep.subr.bf16.mxu0 0
  %947 = vmatpush1.bf16.xpose.msra.mxu0 0
  %948 = vmatprep.subr.bf16.mxu0 0
  %949 = vmatpush1.bf16.xpose.msra.mxu0 0
  %950 = vmatprep.subr.bf16.mxu0 0
  %951 = vmatpush1.bf16.xpose.msra.mxu0 0
  %952 = vmatprep.subr.bf16.mxu0 0
  %953 = vmatpush1.bf16.xpose.msra.mxu0 0
  %954 = vmatprep.subr.bf16.mxu0 0
  %955 = vmatpush1.bf16.xpose.msra.mxu0 0
  %956 = vmatprep.subr.bf16.mxu0 0
  %957 = vmatpush1.bf16.xpose.msra.mxu0 0
  %958 = vmatprep.mubr.bf16.mxu0 0
  %959 = vmatmul.mubr.bf16.gmra.mrb[0].mxu0 %v921
  %v960 = vpop.f32.mrb[0].mxu0
  %v961 = vadd.f32 %v134, %v960
  %v962 = vpop.f32.mrb[0].mxu0
  %v963 = vpop.f32.mrb[0].mxu0
  %v964 = vpop.f32.mrb[0].mxu0
  %965 = vdwg.mxu0
  %v966 = vsel %vm209, %v911, -inf
  %967 = vmax.xlane.f32.xlu0 %v966
  %v968 = vpop.xlane.xlu0 %967
  %v969 = vsel %vm209, %v961, -inf
  %970 = vmax.xlane.f32.xlu0 %v969
  %v971 = vpop.xlane.xlu0 %970
  %v972 = vsub.f32 %v911, %v968
  %v973 = vsub.f32 %v961, %v971
  %v974 = vmul.f32 %v972, 1.442695
  %v975 = vpow.pop %v974
  %v976 = vmul.f32 %v973, 1.442695
  %v977 = vpow.pop %v976
  %v978 = vsel %vm209, %v975, 0.0
  %979 = vadd.xlane.f32.xlu0 %v978
  %v980 = vpop.xlane.xlu0 %979
  %v981 = vsel %vm209, %v977, 0.0
  %982 = vadd.xlane.f32.xlu0 %v981
  %v983 = vpop.xlane.xlu0 %982
  %v984 = vrcp.pop %v980
  %v985 = vrcp.pop %v983
  %v986 = vmul.f32 %v975, %v984
  %v987 = vmul.f32 %v977, %v985
  %v988 = vpack.c.bf16 %v986, %v986
  %v989 = vpack.c.bf16 %v987, %v987
  %990 = vrot.lane.b32.xlu0 %v204, 40
  %v991 = vpop.permute.xlu0 %990
  %v993 = vsel %vm209, %v988, 0
  %v996 = vsel %vm334, %v991, 0
  %998 = vmatprep.subr.bf16.mxu0 0
  %999 = vmatpush1.bf16.msra.mxu0 %v996
  %1000 = vmatprep.subr.bf16.mxu0 0
  %1001 = vmatpush1.bf16.msra.mxu0 0
  %1002 = vmatprep.subr.bf16.mxu0 0
  %1003 = vmatpush1.bf16.msra.mxu0 0
  %1004 = vmatprep.subr.bf16.mxu0 0
  %1005 = vmatpush1.bf16.msra.mxu0 0
  %1006 = vmatprep.subr.bf16.mxu0 0
  %1007 = vmatpush1.bf16.msra.mxu0 0
  %1008 = vmatprep.subr.bf16.mxu0 0
  %1009 = vmatpush1.bf16.msra.mxu0 0
  %1010 = vmatprep.subr.bf16.mxu0 0
  %1011 = vmatpush1.bf16.msra.mxu0 0
  %1012 = vmatprep.subr.bf16.mxu0 0
  %1013 = vmatpush1.bf16.msra.mxu0 0
  %1014 = vmatprep.subr.bf16.mxu0 0
  %1015 = vmatpush1.bf16.msra.mxu0 0
  %1016 = vmatprep.subr.bf16.mxu0 0
  %1017 = vmatpush1.bf16.msra.mxu0 0
  %1018 = vmatprep.subr.bf16.mxu0 0
  %1019 = vmatpush1.bf16.msra.mxu0 0
  %1020 = vmatprep.subr.bf16.mxu0 0
  %1021 = vmatpush1.bf16.msra.mxu0 0
  %1022 = vmatprep.subr.bf16.mxu0 0
  %1023 = vmatpush1.bf16.msra.mxu0 0
  %1024 = vmatprep.subr.bf16.mxu0 0
  %1025 = vmatpush1.bf16.msra.mxu0 0
  %1026 = vmatprep.subr.bf16.mxu0 0
  %1027 = vmatpush1.bf16.msra.mxu0 0
  %1028 = vmatprep.subr.bf16.mxu0 0
  %1029 = vmatpush1.bf16.msra.mxu0 0
  %1030 = vmatprep.mubr.bf16.mxu0 0
  %1031 = vmatmul.mubr.bf16.gmra.mrb[0].mxu0 %v993
  %v1032 = vpop.f32.mrb[0].mxu0
  %v1033 = vadd.f32 0.0, %v1032
  %v1034 = vpop.f32.mrb[0].mxu0
  %v1035 = vpop.f32.mrb[0].mxu0
  %v1036 = vpop.f32.mrb[0].mxu0
  %1037 = vdwg.mxu0
  %1038 = vrot.lane.b32.xlu0 %v205, 40
  %v1039 = vpop.permute.xlu0 %1038
  %v1041 = vsel %vm209, %v989, 0
  %v1044 = vsel %vm334, %v1039, 0
  %1046 = vmatprep.subr.bf16.mxu0 0
  %1047 = vmatpush1.bf16.msra.mxu0 %v1044
  %1048 = vmatprep.subr.bf16.mxu0 0
  %1049 = vmatpush1.bf16.msra.mxu0 0
  %1050 = vmatprep.subr.bf16.mxu0 0
  %1051 = vmatpush1.bf16.msra.mxu0 0
  %1052 = vmatprep.subr.bf16.mxu0 0
  %1053 = vmatpush1.bf16.msra.mxu0 0
  %1054 = vmatprep.subr.bf16.mxu0 0
  %1055 = vmatpush1.bf16.msra.mxu0 0
  %1056 = vmatprep.subr.bf16.mxu0 0
  %1057 = vmatpush1.bf16.msra.mxu0 0
  %1058 = vmatprep.subr.bf16.mxu0 0
  %1059 = vmatpush1.bf16.msra.mxu0 0
  %1060 = vmatprep.subr.bf16.mxu0 0
  %1061 = vmatpush1.bf16.msra.mxu0 0
  %1062 = vmatprep.subr.bf16.mxu0 0
  %1063 = vmatpush1.bf16.msra.mxu0 0
  %1064 = vmatprep.subr.bf16.mxu0 0
  %1065 = vmatpush1.bf16.msra.mxu0 0
  %1066 = vmatprep.subr.bf16.mxu0 0
  %1067 = vmatpush1.bf16.msra.mxu0 0
  %1068 = vmatprep.subr.bf16.mxu0 0
  %1069 = vmatpush1.bf16.msra.mxu0 0
  %1070 = vmatprep.subr.bf16.mxu0 0
  %1071 = vmatpush1.bf16.msra.mxu0 0
  %1072 = vmatprep.subr.bf16.mxu0 0
  %1073 = vmatpush1.bf16.msra.mxu0 0
  %1074 = vmatprep.subr.bf16.mxu0 0
  %1075 = vmatpush1.bf16.msra.mxu0 0
  %1076 = vmatprep.subr.bf16.mxu0 0
  %1077 = vmatpush1.bf16.msra.mxu0 0
  %1078 = vmatprep.mubr.bf16.mxu0 0
  %1079 = vmatmul.mubr.bf16.gmra.mrb[0].mxu0 %v1041
  %v1080 = vpop.f32.mrb[0].mxu0
  %v1081 = vadd.f32 0.0, %v1080
  %v1082 = vpop.f32.mrb[0].mxu0
  %v1083 = vpop.f32.mrb[0].mxu0
  %v1084 = vpop.f32.mrb[0].mxu0
  %1085 = vdwg.mxu0
  %1088 = vrot.lane.b32.xlu0 %v593, 8
  %v1089 = vpop.permute.xlu0 %1088
  %1090 = vrot.lane.b32.xlu0 %v641, 8
  %v1091 = vpop.permute.xlu0 %1090
  %1096 = vrot.lane.b32.xlu0 %v813, 16
  %v1097 = vpop.permute.xlu0 %1096
  %1098 = vrot.lane.b32.xlu0 %v861, 16
  %v1099 = vpop.permute.xlu0 %1098
  %1104 = vrot.lane.b32.xlu0 %v1033, 24
  %v1105 = vpop.permute.xlu0 %1104
  %1106 = vrot.lane.b32.xlu0 %v1081, 24
  %v1107 = vpop.permute.xlu0 %1106
  %v1110 = vsel %vm209, %v373, %v1089
  %v1111 = vsel %vm209, %v421, %v1091
  %vm1112 = vcmask 130048
  %v1113 = vsel %vm1112, %v1110, %v1097
  %v1114 = vsel %vm1112, %v1111, %v1099
  %vm1115 = vcmask 195584
  %v1116 = vsel %vm1115, %v1113, %v1105
  %v1117 = vsel %vm1115, %v1114, %v1107
  %v1118 = vpack.c.bf16 %v1117, %v1116
  %v1119 = vld [vmem:[%s7] sm:$0xf]
  %v1120 = vld [vmem:[%s7 + $0x4] sm:$0xf]
  %v1121 = vld [vmem:[%s7 + $0x8] sm:$0xf]
  %v1122 = vld [vmem:[%s7 + $0xc] sm:$0xf]
  %v1123 = vld [vmem:[%s8] sm:$0x1]
  %v1125 = vlaneseq
  %v1126 = vshrl.u32 %v1125, 7
  %v1127 = vsub.s32 0, %v1126
  %v1128 = vrot.slane %v1123, %v1127
  %v1134 = vunpack.c.l.b16 %v1119
  %v1135 = vunpack.c.l.b16 %v1120
  %v1136 = vunpack.c.l.b16 %v1121
  %v1137 = vunpack.c.l.b16 %v1122
  %v1138 = vpack.c.b16 %v1135, %v1134
  %v1139 = vpack.c.b16 %v1137, %v1136
  %v1143 = vsel %vm159, %v1118, 0
  %1145 = vmatprep.subr.bf16.mxu0 0
  %1146 = vmatpush1.bf16.msra.mxu0 %v1138
  %1147 = vmatprep.subr.bf16.mxu0 0
  %1148 = vmatpush1.bf16.msra.mxu0 %v1139
  %1149 = vmatprep.subr.bf16.mxu0 0
  %1150 = vmatpush1.bf16.msra.mxu0 0
  %1151 = vmatprep.subr.bf16.mxu0 0
  %1152 = vmatpush1.bf16.msra.mxu0 0
  %1153 = vmatprep.subr.bf16.mxu0 0
  %1154 = vmatpush1.bf16.msra.mxu0 0
  %1155 = vmatprep.subr.bf16.mxu0 0
  %1156 = vmatpush1.bf16.msra.mxu0 0
  %1157 = vmatprep.subr.bf16.mxu0 0
  %1158 = vmatpush1.bf16.msra.mxu0 0
  %1159 = vmatprep.subr.bf16.mxu0 0
  %1160 = vmatpush1.bf16.msra.mxu0 0
  %1161 = vmatprep.subr.bf16.mxu0 0
  %1162 = vmatpush1.bf16.msra.mxu0 0
  %1163 = vmatprep.subr.bf16.mxu0 0
  %1164 = vmatpush1.bf16.msra.mxu0 0
  %1165 = vmatprep.subr.bf16.mxu0 0
  %1166 = vmatpush1.bf16.msra.mxu0 0
  %1167 = vmatprep.subr.bf16.mxu0 0
  %1168 = vmatpush1.bf16.msra.mxu0 0
  %1169 = vmatprep.subr.bf16.mxu0 0
  %1170 = vmatpush1.bf16.msra.mxu0 0
  %1171 = vmatprep.subr.bf16.mxu0 0
  %1172 = vmatpush1.bf16.msra.mxu0 0
  %1173 = vmatprep.subr.bf16.mxu0 0
  %1174 = vmatpush1.bf16.msra.mxu0 0
  %1175 = vmatprep.subr.bf16.mxu0 0
  %1176 = vmatpush1.bf16.msra.mxu0 0
  %1177 = vmatprep.mubr.bf16.mxu0 0
  %1178 = vmatmul.mubr.bf16.gmra.mrb[0].mxu0 %v1143
  %v1179 = vpop.f32.mrb[0].mxu0
  %v1180 = vadd.f32 %v1128, %v1179
  %v1181 = vpop.f32.mrb[0].mxu0
  %v1182 = vpop.f32.mrb[0].mxu0
  %v1183 = vadd.f32 %v1128, %v1182
  %v1184 = vpop.f32.mrb[0].mxu0
  %1185 = vdwg.mxu0
  %v1186 = vadd.f32 %v127, %v1180
  %v1187 = vadd.f32 %v128, %v1183
  %v1188 = vld [vmem:[%s9] sm:$0x1]
  %v1189 = vld [vmem:[%s10] sm:$0x1]
  %v1190 = vsel %vm159, %v1186, 0.0
  %1191 = vadd.xlane.f32.xlu0 %v1190
  %v1192 = vpop.xlane.xlu0 %1191
  %v1193 = vsel %vm159, %v1187, 0.0
  %1194 = vadd.xlane.f32.xlu0 %v1193
  %v1195 = vpop.xlane.xlu0 %1194
  %v1196 = vrcp.pop 32.0
  %v1197 = vmul.f32 %v1192, %v1196
  %v1198 = vmul.f32 %v1195, %v1196
  %v1199 = vsub.f32 %v1186, %v1197
  %v1200 = vsub.f32 %v1187, %v1198
  %v1201 = vmul.f32 %v1199, %v1199
  %v1202 = vmul.f32 %v1200, %v1200
  %v1203 = vsel %vm159, %v1201, 0.0
  %1204 = vadd.xlane.f32.xlu0 %v1203
  %v1205 = vpop.xlane.xlu0 %1204
  %v1206 = vsel %vm159, %v1202, 0.0
  %1207 = vadd.xlane.f32.xlu0 %v1206
  %v1208 = vpop.xlane.xlu0 %1207
  %v1209 = vmul.f32 %v1205, %v1196
  %v1210 = vmul.f32 %v1208, %v1196
  %v1211 = vadd.f32 %v1209, 1e-05
  %v1212 = vadd.f32 %v1210, 1e-05
  %v1213 = vrsqrt.pop %v1211
  %v1214 = vrsqrt.pop %v1212
  %v1215 = vmul.f32 %v1199, %v1213
  %v1216 = vmul.f32 %v1200, %v1214
  %v1218 = vlaneseq
  %v1219 = vshrl.u32 %v1218, 7
  %v1220 = vsub.s32 0, %v1219
  %v1221 = vrot.slane %v1188, %v1220
  %v1223 = vmul.f32 %v1215, %v1221
  %v1224 = vmul.f32 %v1216, %v1221
  %v1226 = vlaneseq
  %v1227 = vshrl.u32 %v1226, 7
  %v1228 = vsub.s32 0, %v1227
  %v1229 = vrot.slane %v1189, %v1228
  %v1231 = vadd.f32 %v1223, %v1229
  %v1232 = vadd.f32 %v1224, %v1229
  %v1233 = vpack.c.bf16 %v1232, %v1231
  %v1234 = vld [vmem:[%s11] sm:$0xf]
  %v1235 = vld [vmem:[%s11 + $0x4] sm:$0xf]
  %v1236 = vld [vmem:[%s11 + $0x8] sm:$0xf]
  %v1237 = vld [vmem:[%s11 + $0xc] sm:$0xf]
  %v1238 = vld [vmem:[%s12] sm:$0x1]
  %v1240 = vlaneseq
  %v1241 = vshrl.u32 %v1240, 7
  %v1242 = vsub.s32 0, %v1241
  %v1243 = vrot.slane %v1238, %v1242
  %v1249 = vunpack.c.l.b16 %v1234
  %v1250 = vunpack.c.l.b16 %v1235
  %v1251 = vunpack.c.l.b16 %v1236
  %v1252 = vunpack.c.l.b16 %v1237
  %v1253 = vpack.c.b16 %v1250, %v1249
  %v1254 = vpack.c.b16 %v1252, %v1251
  %v1258 = vsel %vm159, %v1233, 0
  %1260 = vmatprep.subr.bf16.mxu0 0
  %1261 = vmatpush1.bf16.msra.mxu0 %v1253
  %1262 = vmatprep.subr.bf16.mxu0 0
  %1263 = vmatpush1.bf16.msra.mxu0 %v1254
  %1264 = vmatprep.subr.bf16.mxu0 0
  %1265 = vmatpush1.bf16.msra.mxu0 0
  %1266 = vmatprep.subr.bf16.mxu0 0
  %1267 = vmatpush1.bf16.msra.mxu0 0
  %1268 = vmatprep.subr.bf16.mxu0 0
  %1269 = vmatpush1.bf16.msra.mxu0 0
  %1270 = vmatprep.subr.bf16.mxu0 0
  %1271 = vmatpush1.bf16.msra.mxu0 0
  %1272 = vmatprep.subr.bf16.mxu0 0
  %1273 = vmatpush1.bf16.msra.mxu0 0
  %1274 = vmatprep.subr.bf16.mxu0 0
  %1275 = vmatpush1.bf16.msra.mxu0 0
  %1276 = vmatprep.subr.bf16.mxu0 0
  %1277 = vmatpush1.bf16.msra.mxu0 0
  %1278 = vmatprep.subr.bf16.mxu0 0
  %1279 = vmatpush1.bf16.msra.mxu0 0
  %1280 = vmatprep.subr.bf16.mxu0 0
  %1281 = vmatpush1.bf16.msra.mxu0 0
  %1282 = vmatprep.subr.bf16.mxu0 0
  %1283 = vmatpush1.bf16.msra.mxu0 0
  %1284 = vmatprep.subr.bf16.mxu0 0
  %1285 = vmatpush1.bf16.msra.mxu0 0
  %1286 = vmatprep.subr.bf16.mxu0 0
  %1287 = vmatpush1.bf16.msra.mxu0 0
  %1288 = vmatprep.subr.bf16.mxu0 0
  %1289 = vmatpush1.bf16.msra.mxu0 0
  %1290 = vmatprep.subr.bf16.mxu0 0
  %1291 = vmatpush1.bf16.msra.mxu0 0
  %1292 = vmatprep.mubr.bf16.mxu0 0
  %1293 = vmatmul.mubr.bf16.gmra.mrb[0].mxu0 %v1258
  %v1294 = vpop.f32.mrb[0].mxu0
  %v1295 = vadd.f32 %v1243, %v1294
  %v1296 = vpop.f32.mrb[0].mxu0
  %v1297 = vpop.f32.mrb[0].mxu0
  %v1298 = vadd.f32 %v1243, %v1297
  %v1299 = vpop.f32.mrb[0].mxu0
  %1300 = vdwg.mxu0
  %v1301 = vmax.f32 %v1295, 0.0
  %v1302 = vmax.f32 %v1298, 0.0
  %v1303 = vpack.c.bf16 %v1302, %v1301
  %v1304 = vld [vmem:[%s13] sm:$0xf]
  %v1305 = vld [vmem:[%s13 + $0x4] sm:$0xf]
  %v1306 = vld [vmem:[%s13 + $0x8] sm:$0xf]
  %v1307 = vld [vmem:[%s13 + $0xc] sm:$0xf]
  %v1308 = vld [vmem:[%s13 + $0x10] sm:$0xf]
  %v1309 = vld [vmem:[%s13 + $0x14] sm:$0xf]
  %v1310 = vld [vmem:[%s13 + $0x18] sm:$0xf]
  %v1311 = vld [vmem:[%s13 + $0x1c] sm:$0xf]
  %v1312 = vld [vmem:[%s14] sm:$0x1]
  %v1314 = vlaneseq
  %v1315 = vshrl.u32 %v1314, 7
  %v1316 = vsub.s32 0, %v1315
  %v1317 = vrot.slane %v1312, %v1316
  %v1327 = vunpack.c.l.b16 %v1304
  %v1328 = vunpack.c.l.b16 %v1305
  %v1329 = vunpack.c.l.b16 %v1306
  %v1330 = vunpack.c.l.b16 %v1307
  %v1331 = vunpack.c.l.b16 %v1308
  %v1332 = vunpack.c.l.b16 %v1309
  %v1333 = vunpack.c.l.b16 %v1310
  %v1334 = vunpack.c.l.b16 %v1311
  %v1335 = vpack.c.b16 %v1328, %v1327
  %v1336 = vpack.c.b16 %v1330, %v1329
  %v1337 = vpack.c.b16 %v1332, %v1331
  %v1338 = vpack.c.b16 %v1334, %v1333
  %vm1343 = vcmask 523264
  %v1345 = vsel %vm1343, %v1303, 0
  %1347 = vmatprep.subr.bf16.mxu0 0
  %1348 = vmatpush1.bf16.msra.mxu0 %v1335
  %1349 = vmatprep.subr.bf16.mxu0 0
  %1350 = vmatpush1.bf16.msra.mxu0 %v1336
  %1351 = vmatprep.subr.bf16.mxu0 0
  %1352 = vmatpush1.bf16.msra.mxu0 %v1337
  %1353 = vmatprep.subr.bf16.mxu0 0
  %1354 = vmatpush1.bf16.msra.mxu0 %v1338
  %1355 = vmatprep.subr.bf16.mxu0 0
  %1356 = vmatpush1.bf16.msra.mxu0 0
  %1357 = vmatprep.subr.bf16.mxu0 0
  %1358 = vmatpush1.bf16.msra.mxu0 0
  %1359 = vmatprep.subr.bf16.mxu0 0
  %1360 = vmatpush1.bf16.msra.mxu0 0
  %1361 = vmatprep.subr.bf16.mxu0 0
  %1362 = vmatpush1.bf16.msra.mxu0 0
  %1363 = vmatprep.subr.bf16.mxu0 0
  %1364 = vmatpush1.bf16.msra.mxu0 0
  %1365 = vmatprep.subr.bf16.mxu0 0
  %1366 = vmatpush1.bf16.msra.mxu0 0
  %1367 = vmatprep.subr.bf16.mxu0 0
  %1368 = vmatpush1.bf16.msra.mxu0 0
  %1369 = vmatprep.subr.bf16.mxu0 0
  %1370 = vmatpush1.bf16.msra.mxu0 0
  %1371 = vmatprep.subr.bf16.mxu0 0
  %1372 = vmatpush1.bf16.msra.mxu0 0
  %1373 = vmatprep.subr.bf16.mxu0 0
  %1374 = vmatpush1.bf16.msra.mxu0 0
  %1375 = vmatprep.subr.bf16.mxu0 0
  %1376 = vmatpush1.bf16.msra.mxu0 0
  %1377 = vmatprep.subr.bf16.mxu0 0
  %1378 = vmatpush1.bf16.msra.mxu0 0
  %1379 = vmatprep.mubr.bf16.mxu0 0
  %1380 = vmatmul.mubr.bf16.gmra.mrb[0].mxu0 %v1345
  %v1381 = vpop.f32.mrb[0].mxu0
  %v1382 = vadd.f32 %v1317, %v1381
  %v1383 = vpop.f32.mrb[0].mxu0
  %v1384 = vpop.f32.mrb[0].mxu0
  %v1385 = vadd.f32 %v1317, %v1384
  %v1386 = vpop.f32.mrb[0].mxu0
  %1387 = vdwg.mxu0
  %v1388 = vadd.f32 %v1231, %v1382
  %v1389 = vadd.f32 %v1232, %v1385
  %v1390 = vld [vmem:[%s15] sm:$0x1]
  %v1391 = vld [vmem:[%s16] sm:$0x1]
  %v1392 = vsel %vm159, %v1388, 0.0
  %1393 = vadd.xlane.f32.xlu0 %v1392
  %v1394 = vpop.xlane.xlu0 %1393
  %v1395 = vsel %vm159, %v1389, 0.0
  %1396 = vadd.xlane.f32.xlu0 %v1395
  %v1397 = vpop.xlane.xlu0 %1396
  %v1398 = vmul.f32 %v1394, %v1196
  %v1399 = vmul.f32 %v1397, %v1196
  %v1400 = vsub.f32 %v1388, %v1398
  %v1401 = vsub.f32 %v1389, %v1399
  %v1402 = vmul.f32 %v1400, %v1400
  %v1403 = vmul.f32 %v1401, %v1401
  %v1404 = vsel %vm159, %v1402, 0.0
  %1405 = vadd.xlane.f32.xlu0 %v1404
  %v1406 = vpop.xlane.xlu0 %1405
  %v1407 = vsel %vm159, %v1403, 0.0
  %1408 = vadd.xlane.f32.xlu0 %v1407
  %v1409 = vpop.xlane.xlu0 %1408
  %v1410 = vmul.f32 %v1406, %v1196
  %v1411 = vmul.f32 %v1409, %v1196
  %v1412 = vadd.f32 %v1410, 1e-05
  %v1413 = vadd.f32 %v1411, 1e-05
  %v1414 = vrsqrt.pop %v1412
  %v1415 = vrsqrt.pop %v1413
  %v1416 = vmul.f32 %v1400, %v1414
  %v1417 = vmul.f32 %v1401, %v1415
  %v1419 = vlaneseq
  %v1420 = vshrl.u32 %v1419, 7
  %v1421 = vsub.s32 0, %v1420
  %v1422 = vrot.slane %v1390, %v1421
  %v1424 = vmul.f32 %v1416, %v1422
  %v1425 = vmul.f32 %v1417, %v1422
  %v1427 = vlaneseq
  %v1428 = vshrl.u32 %v1427, 7
  %v1429 = vsub.s32 0, %v1428
  %v1430 = vrot.slane %v1391, %v1429
  %v1432 = vadd.f32 %v1424, %v1430
  %v1433 = vadd.f32 %v1425, %v1430
  %v1434 = vpack.c.bf16 %v1433, %v1432
  %s1435 = scalar_lea.vmem %s5, 16
  %v1436 = vld [vmem:[%s1435] sm:$0xf]
  %v1437 = vld [vmem:[%s1435 + $0x4] sm:$0xf]
  %v1438 = vld [vmem:[%s1435 + $0x8] sm:$0xf]
  %v1439 = vld [vmem:[%s1435 + $0xc] sm:$0xf]
  %s1440 = scalar_lea.vmem %s6, 1
  %v1441 = vld [vmem:[%s1440] sm:$0x1]
  %v1443 = vlaneseq
  %v1444 = vshrl.u32 %v1443, 7
  %v1445 = vsub.s32 0, %v1444
  %v1446 = vrot.slane %v1441, %v1445
  %v1452 = vunpack.c.l.b16 %v1436
  %v1453 = vunpack.c.l.b16 %v1437
  %v1454 = vunpack.c.l.b16 %v1438
  %v1455 = vunpack.c.l.b16 %v1439
  %v1456 = vpack.c.b16 %v1453, %v1452
  %v1457 = vpack.c.b16 %v1455, %v1454
  %v1461 = vsel %vm159, %v1434, 0
  %1463 = vmatprep.subr.bf16.mxu0 0
  %1464 = vmatpush1.bf16.msra.mxu0 %v1456
  %1465 = vmatprep.subr.bf16.mxu0 0
  %1466 = vmatpush1.bf16.msra.mxu0 %v1457
  %1467 = vmatprep.subr.bf16.mxu0 0
  %1468 = vmatpush1.bf16.msra.mxu0 0
  %1469 = vmatprep.subr.bf16.mxu0 0
  %1470 = vmatpush1.bf16.msra.mxu0 0
  %1471 = vmatprep.subr.bf16.mxu0 0
  %1472 = vmatpush1.bf16.msra.mxu0 0
  %1473 = vmatprep.subr.bf16.mxu0 0
  %1474 = vmatpush1.bf16.msra.mxu0 0
  %1475 = vmatprep.subr.bf16.mxu0 0
  %1476 = vmatpush1.bf16.msra.mxu0 0
  %1477 = vmatprep.subr.bf16.mxu0 0
  %1478 = vmatpush1.bf16.msra.mxu0 0
  %1479 = vmatprep.subr.bf16.mxu0 0
  %1480 = vmatpush1.bf16.msra.mxu0 0
  %1481 = vmatprep.subr.bf16.mxu0 0
  %1482 = vmatpush1.bf16.msra.mxu0 0
  %1483 = vmatprep.subr.bf16.mxu0 0
  %1484 = vmatpush1.bf16.msra.mxu0 0
  %1485 = vmatprep.subr.bf16.mxu0 0
  %1486 = vmatpush1.bf16.msra.mxu0 0
  %1487 = vmatprep.subr.bf16.mxu0 0
  %1488 = vmatpush1.bf16.msra.mxu0 0
  %1489 = vmatprep.subr.bf16.mxu0 0
  %1490 = vmatpush1.bf16.msra.mxu0 0
  %1491 = vmatprep.subr.bf16.mxu0 0
  %1492 = vmatpush1.bf16.msra.mxu0 0
  %1493 = vmatprep.subr.bf16.mxu0 0
  %1494 = vmatpush1.bf16.msra.mxu0 0
  %1495 = vmatprep.mubr.bf16.mxu0 0
  %1496 = vmatmul.mubr.bf16.gmra.mrb[0].mxu0 %v1461
  %v1497 = vpop.f32.mrb[0].mxu0
  %v1498 = vadd.f32 %v1446, %v1497
  %v1499 = vpop.f32.mrb[0].mxu0
  %v1500 = vpop.f32.mrb[0].mxu0
  %v1501 = vadd.f32 %v1446, %v1500
  %v1502 = vpop.f32.mrb[0].mxu0
  %1503 = vdwg.mxu0
  %v1504 = vpack.c.bf16 %v1498, %v1498
  %v1505 = vpack.c.bf16 %v1501, %v1501
  %1507 = vrot.lane.b32.xlu0 %v1504, 96
  %v1508 = vpop.permute.xlu0 %1507
  %v1510 = vsel %vm209, %v1504, 0
  %v1513 = vsel %vm209, %v1508, 0
  %1515 = vmatprep.subr.bf16.mxu0 0
  %1516 = vmatpush1.bf16.xpose.msra.mxu0 %v1513
  %1517 = vmatprep.subr.bf16.mxu0 0
  %1518 = vmatpush1.bf16.xpose.msra.mxu0 0
  %1519 = vmatprep.subr.bf16.mxu0 0
  %1520 = vmatpush1.bf16.xpose.msra.mxu0 0
  %1521 = vmatprep.subr.bf16.mxu0 0
  %1522 = vmatpush1.bf16.xpose.msra.mxu0 0
  %1523 = vmatprep.subr.bf16.mxu0 0
  %1524 = vmatpush1.bf16.xpose.msra.mxu0 0
  %1525 = vmatprep.subr.bf16.mxu0 0
  %1526 = vmatpush1.bf16.xpose.msra.mxu0 0
  %1527 = vmatprep.subr.bf16.mxu0 0
  %1528 = vmatpush1.bf16.xpose.msra.mxu0 0
  %1529 = vmatprep.subr.bf16.mxu0 0
  %1530 = vmatpush1.bf16.xpose.msra.mxu0 0
  %1531 = vmatprep.subr.bf16.mxu0 0
  %1532 = vmatpush1.bf16.xpose.msra.mxu0 0
  %1533 = vmatprep.subr.bf16.mxu0 0
  %1534 = vmatpush1.bf16.xpose.msra.mxu0 0
  %1535 = vmatprep.subr.bf16.mxu0 0
  %1536 = vmatpush1.bf16.xpose.msra.mxu0 0
  %1537 = vmatprep.subr.bf16.mxu0 0
  %1538 = vmatpush1.bf16.xpose.msra.mxu0 0
  %1539 = vmatprep.subr.bf16.mxu0 0
  %1540 = vmatpush1.bf16.xpose.msra.mxu0 0
  %1541 = vmatprep.subr.bf16.mxu0 0
  %1542 = vmatpush1.bf16.xpose.msra.mxu0 0
  %1543 = vmatprep.subr.bf16.mxu0 0
  %1544 = vmatpush1.bf16.xpose.msra.mxu0 0
  %1545 = vmatprep.subr.bf16.mxu0 0
  %1546 = vmatpush1.bf16.xpose.msra.mxu0 0
  %1547 = vmatprep.mubr.bf16.mxu0 0
  %1548 = vmatmul.mubr.bf16.gmra.mrb[0].mxu0 %v1510
  %v1549 = vpop.f32.mrb[0].mxu0
  %v1550 = vadd.f32 %v134, %v1549
  %v1551 = vpop.f32.mrb[0].mxu0
  %v1552 = vpop.f32.mrb[0].mxu0
  %v1553 = vpop.f32.mrb[0].mxu0
  %1554 = vdwg.mxu0
  %1556 = vrot.lane.b32.xlu0 %v1505, 96
  %v1557 = vpop.permute.xlu0 %1556
  %v1559 = vsel %vm209, %v1505, 0
  %v1562 = vsel %vm209, %v1557, 0
  %1564 = vmatprep.subr.bf16.mxu0 0
  %1565 = vmatpush1.bf16.xpose.msra.mxu0 %v1562
  %1566 = vmatprep.subr.bf16.mxu0 0
  %1567 = vmatpush1.bf16.xpose.msra.mxu0 0
  %1568 = vmatprep.subr.bf16.mxu0 0
  %1569 = vmatpush1.bf16.xpose.msra.mxu0 0
  %1570 = vmatprep.subr.bf16.mxu0 0
  %1571 = vmatpush1.bf16.xpose.msra.mxu0 0
  %1572 = vmatprep.subr.bf16.mxu0 0
  %1573 = vmatpush1.bf16.xpose.msra.mxu0 0
  %1574 = vmatprep.subr.bf16.mxu0 0
  %1575 = vmatpush1.bf16.xpose.msra.mxu0 0
  %1576 = vmatprep.subr.bf16.mxu0 0
  %1577 = vmatpush1.bf16.xpose.msra.mxu0 0
  %1578 = vmatprep.subr.bf16.mxu0 0
  %1579 = vmatpush1.bf16.xpose.msra.mxu0 0
  %1580 = vmatprep.subr.bf16.mxu0 0
  %1581 = vmatpush1.bf16.xpose.msra.mxu0 0
  %1582 = vmatprep.subr.bf16.mxu0 0
  %1583 = vmatpush1.bf16.xpose.msra.mxu0 0
  %1584 = vmatprep.subr.bf16.mxu0 0
  %1585 = vmatpush1.bf16.xpose.msra.mxu0 0
  %1586 = vmatprep.subr.bf16.mxu0 0
  %1587 = vmatpush1.bf16.xpose.msra.mxu0 0
  %1588 = vmatprep.subr.bf16.mxu0 0
  %1589 = vmatpush1.bf16.xpose.msra.mxu0 0
  %1590 = vmatprep.subr.bf16.mxu0 0
  %1591 = vmatpush1.bf16.xpose.msra.mxu0 0
  %1592 = vmatprep.subr.bf16.mxu0 0
  %1593 = vmatpush1.bf16.xpose.msra.mxu0 0
  %1594 = vmatprep.subr.bf16.mxu0 0
  %1595 = vmatpush1.bf16.xpose.msra.mxu0 0
  %1596 = vmatprep.mubr.bf16.mxu0 0
  %1597 = vmatmul.mubr.bf16.gmra.mrb[0].mxu0 %v1559
  %v1598 = vpop.f32.mrb[0].mxu0
  %v1599 = vadd.f32 %v134, %v1598
  %v1600 = vpop.f32.mrb[0].mxu0
  %v1601 = vpop.f32.mrb[0].mxu0
  %v1602 = vpop.f32.mrb[0].mxu0
  %1603 = vdwg.mxu0
  %v1604 = vsel %vm209, %v1550, -inf
  %1605 = vmax.xlane.f32.xlu0 %v1604
  %v1606 = vpop.xlane.xlu0 %1605
  %v1607 = vsel %vm209, %v1599, -inf
  %1608 = vmax.xlane.f32.xlu0 %v1607
  %v1609 = vpop.xlane.xlu0 %1608
  %v1610 = vsub.f32 %v1550, %v1606
  %v1611 = vsub.f32 %v1599, %v1609
  %v1612 = vmul.f32 %v1610, 1.442695
  %v1613 = vpow.pop %v1612
  %v1614 = vmul.f32 %v1611, 1.442695
  %v1615 = vpow.pop %v1614
  %v1616 = vsel %vm209, %v1613, 0.0
  %1617 = vadd.xlane.f32.xlu0 %v1616
  %v1618 = vpop.xlane.xlu0 %1617
  %v1619 = vsel %vm209, %v1615, 0.0
  %1620 = vadd.xlane.f32.xlu0 %v1619
  %v1621 = vpop.xlane.xlu0 %1620
  %v1622 = vrcp.pop %v1618
  %v1623 = vrcp.pop %v1621
  %v1624 = vmul.f32 %v1613, %v1622
  %v1625 = vmul.f32 %v1615, %v1623
  %v1626 = vpack.c.bf16 %v1624, %v1624
  %v1627 = vpack.c.bf16 %v1625, %v1625
  %1628 = vrot.lane.b32.xlu0 %v1504, 64
  %v1629 = vpop.permute.xlu0 %1628
  %v1631 = vsel %vm209, %v1626, 0
  %v1634 = vsel %vm334, %v1629, 0
  %1636 = vmatprep.subr.bf16.mxu0 0
  %1637 = vmatpush1.bf16.msra.mxu0 %v1634
  %1638 = vmatprep.subr.bf16.mxu0 0
  %1639 = vmatpush1.bf16.msra.mxu0 0
  %1640 = vmatprep.subr.bf16.mxu0 0
  %1641 = vmatpush1.bf16.msra.mxu0 0
  %1642 = vmatprep.subr.bf16.mxu0 0
  %1643 = vmatpush1.bf16.msra.mxu0 0
  %1644 = vmatprep.subr.bf16.mxu0 0
  %1645 = vmatpush1.bf16.msra.mxu0 0
  %1646 = vmatprep.subr.bf16.mxu0 0
  %1647 = vmatpush1.bf16.msra.mxu0 0
  %1648 = vmatprep.subr.bf16.mxu0 0
  %1649 = vmatpush1.bf16.msra.mxu0 0
  %1650 = vmatprep.subr.bf16.mxu0 0
  %1651 = vmatpush1.bf16.msra.mxu0 0
  %1652 = vmatprep.subr.bf16.mxu0 0
  %1653 = vmatpush1.bf16.msra.mxu0 0
  %1654 = vmatprep.subr.bf16.mxu0 0
  %1655 = vmatpush1.bf16.msra.mxu0 0
  %1656 = vmatprep.subr.bf16.mxu0 0
  %1657 = vmatpush1.bf16.msra.mxu0 0
  %1658 = vmatprep.subr.bf16.mxu0 0
  %1659 = vmatpush1.bf16.msra.mxu0 0
  %1660 = vmatprep.subr.bf16.mxu0 0
  %1661 = vmatpush1.bf16.msra.mxu0 0
  %1662 = vmatprep.subr.bf16.mxu0 0
  %1663 = vmatpush1.bf16.msra.mxu0 0
  %1664 = vmatprep.subr.bf16.mxu0 0
  %1665 = vmatpush1.bf16.msra.mxu0 0
  %1666 = vmatprep.subr.bf16.mxu0 0
  %1667 = vmatpush1.bf16.msra.mxu0 0
  %1668 = vmatprep.mubr.bf16.mxu0 0
  %1669 = vmatmul.mubr.bf16.gmra.mrb[0].mxu0 %v1631
  %v1670 = vpop.f32.mrb[0].mxu0
  %v1671 = vadd.f32 0.0, %v1670
  %v1672 = vpop.f32.mrb[0].mxu0
  %v1673 = vpop.f32.mrb[0].mxu0
  %v1674 = vpop.f32.mrb[0].mxu0
  %1675 = vdwg.mxu0
  %1676 = vrot.lane.b32.xlu0 %v1505, 64
  %v1677 = vpop.permute.xlu0 %1676
  %v1679 = vsel %vm209, %v1627, 0
  %v1682 = vsel %vm334, %v1677, 0
  %1684 = vmatprep.subr.bf16.mxu0 0
  %1685 = vmatpush1.bf16.msra.mxu0 %v1682
  %1686 = vmatprep.subr.bf16.mxu0 0
  %1687 = vmatpush1.bf16.msra.mxu0 0
  %1688 = vmatprep.subr.bf16.mxu0 0
  %1689 = vmatpush1.bf16.msra.mxu0 0
  %1690 = vmatprep.subr.bf16.mxu0 0
  %1691 = vmatpush1.bf16.msra.mxu0 0
  %1692 = vmatprep.subr.bf16.mxu0 0
  %1693 = vmatpush1.bf16.msra.mxu0 0
  %1694 = vmatprep.subr.bf16.mxu0 0
  %1695 = vmatpush1.bf16.msra.mxu0 0
  %1696 = vmatprep.subr.bf16.mxu0 0
  %1697 = vmatpush1.bf16.msra.mxu0 0
  %1698 = vmatprep.subr.bf16.mxu0 0
  %1699 = vmatpush1.bf16.msra.mxu0 0
  %1700 = vmatprep.subr.bf16.mxu0 0
  %1701 = vmatpush1.bf16.msra.mxu0 0
  %1702 = vmatprep.subr.bf16.mxu0 0
  %1703 = vmatpush1.bf16.msra.mxu0 0
  %1704 = vmatprep.subr.bf16.mxu0 0
  %1705 = vmatpush1.bf16.msra.mxu0 0
  %1706 = vmatprep.subr.bf16.mxu0 0
  %1707 = vmatpush1.bf16.msra.mxu0 0
  %1708 = vmatprep.subr.bf16.mxu0 0
  %1709 = vmatpush1.bf16.msra.mxu0 0
  %1710 = vmatprep.subr.bf16.mxu0 0
  %1711 = vmatpush1.bf16.msra.mxu0 0
  %1712 = vmatprep.subr.bf16.mxu0 0
  %1713 = vmatpush1.bf16.msra.mxu0 0
  %1714 = vmatprep.subr.bf16.mxu0 0
  %1715 = vmatpush1.bf16.msra.mxu0 0
  %1716 = vmatprep.mubr.bf16.mxu0 0
  %1717 = vmatmul.mubr.bf16.gmra.mrb[0].mxu0 %v1679
  %v1718 = vpop.f32.mrb[0].mxu0
  %v1719 = vadd.f32 0.0, %v1718
  %v1720 = vpop.f32.mrb[0].mxu0
  %v1721 = vpop.f32.mrb[0].mxu0
  %v1722 = vpop.f32.mrb[0].mxu0
  %1723 = vdwg.mxu0
  %1724 = vrot.lane.b32.xlu0 %v1504, 120
  %v1725 = vpop.permute.xlu0 %1724
  %1726 = vrot.lane.b32.xlu0 %v1504, 88
  %v1727 = vpop.permute.xlu0 %1726
  %v1729 = vsel %vm209, %v1725, 0
  %v1732 = vsel %vm209, %v1727, 0
  %1734 = vmatprep.subr.bf16.mxu0 0
  %1735 = vmatpush1.bf16.xpose.msra.mxu0 %v1732
  %1736 = vmatprep.subr.bf16.mxu0 0
  %1737 = vmatpush1.bf16.xpose.msra.mxu0 0
  %1738 = vmatprep.subr.bf16.mxu0 0
  %1739 = vmatpush1.bf16.xpose.msra.mxu0 0
  %1740 = vmatprep.subr.bf16.mxu0 0
  %1741 = vmatpush1.bf16.xpose.msra.mxu0 0
  %1742 = vmatprep.subr.bf16.mxu0 0
  %1743 = vmatpush1.bf16.xpose.msra.mxu0 0
  %1744 = vmatprep.subr.bf16.mxu0 0
  %1745 = vmatpush1.bf16.xpose.msra.mxu0 0
  %1746 = vmatprep.subr.bf16.mxu0 0
  %1747 = vmatpush1.bf16.xpose.msra.mxu0 0
  %1748 = vmatprep.subr.bf16.mxu0 0
  %1749 = vmatpush1.bf16.xpose.msra.mxu0 0
  %1750 = vmatprep.subr.bf16.mxu0 0
  %1751 = vmatpush1.bf16.xpose.msra.mxu0 0
  %1752 = vmatprep.subr.bf16.mxu0 0
  %1753 = vmatpush1.bf16.xpose.msra.mxu0 0
  %1754 = vmatprep.subr.bf16.mxu0 0
  %1755 = vmatpush1.bf16.xpose.msra.mxu0 0
  %1756 = vmatprep.subr.bf16.mxu0 0
  %1757 = vmatpush1.bf16.xpose.msra.mxu0 0
  %1758 = vmatprep.subr.bf16.mxu0 0
  %1759 = vmatpush1.bf16.xpose.msra.mxu0 0
  %1760 = vmatprep.subr.bf16.mxu0 0
  %1761 = vmatpush1.bf16.xpose.msra.mxu0 0
  %1762 = vmatprep.subr.bf16.mxu0 0
  %1763 = vmatpush1.bf16.xpose.msra.mxu0 0
  %1764 = vmatprep.subr.bf16.mxu0 0
  %1765 = vmatpush1.bf16.xpose.msra.mxu0 0
  %1766 = vmatprep.mubr.bf16.mxu0 0
  %1767 = vmatmul.mubr.bf16.gmra.mrb[0].mxu0 %v1729
  %v1768 = vpop.f32.mrb[0].mxu0
  %v1769 = vadd.f32 %v134, %v1768
  %v1770 = vpop.f32.mrb[0].mxu0
  %v1771 = vpop.f32.mrb[0].mxu0
  %v1772 = vpop.f32.mrb[0].mxu0
  %1773 = vdwg.mxu0
  %1774 = vrot.lane.b32.xlu0 %v1505, 120
  %v1775 = vpop.permute.xlu0 %1774
  %1776 = vrot.lane.b32.xlu0 %v1505, 88
  %v1777 = vpop.permute.xlu0 %1776
  %v1779 = vsel %vm209, %v1775, 0
  %v1782 = vsel %vm209, %v1777, 0
  %1784 = vmatprep.subr.bf16.mxu0 0
  %1785 = vmatpush1.bf16.xpose.msra.mxu0 %v1782
  %1786 = vmatprep.subr.bf16.mxu0 0
  %1787 = vmatpush1.bf16.xpose.msra.mxu0 0
  %1788 = vmatprep.subr.bf16.mxu0 0
  %1789 = vmatpush1.bf16.xpose.msra.mxu0 0
  %1790 = vmatprep.subr.bf16.mxu0 0
  %1791 = vmatpush1.bf16.xpose.msra.mxu0 0
  %1792 = vmatprep.subr.bf16.mxu0 0
  %1793 = vmatpush1.bf16.xpose.msra.mxu0 0
  %1794 = vmatprep.subr.bf16.mxu0 0
  %1795 = vmatpush1.bf16.xpose.msra.mxu0 0
  %1796 = vmatprep.subr.bf16.mxu0 0
  %1797 = vmatpush1.bf16.xpose.msra.mxu0 0
  %1798 = vmatprep.subr.bf16.mxu0 0
  %1799 = vmatpush1.bf16.xpose.msra.mxu0 0
  %1800 = vmatprep.subr.bf16.mxu0 0
  %1801 = vmatpush1.bf16.xpose.msra.mxu0 0
  %1802 = vmatprep.subr.bf16.mxu0 0
  %1803 = vmatpush1.bf16.xpose.msra.mxu0 0
  %1804 = vmatprep.subr.bf16.mxu0 0
  %1805 = vmatpush1.bf16.xpose.msra.mxu0 0
  %1806 = vmatprep.subr.bf16.mxu0 0
  %1807 = vmatpush1.bf16.xpose.msra.mxu0 0
  %1808 = vmatprep.subr.bf16.mxu0 0
  %1809 = vmatpush1.bf16.xpose.msra.mxu0 0
  %1810 = vmatprep.subr.bf16.mxu0 0
  %1811 = vmatpush1.bf16.xpose.msra.mxu0 0
  %1812 = vmatprep.subr.bf16.mxu0 0
  %1813 = vmatpush1.bf16.xpose.msra.mxu0 0
  %1814 = vmatprep.subr.bf16.mxu0 0
  %1815 = vmatpush1.bf16.xpose.msra.mxu0 0
  %1816 = vmatprep.mubr.bf16.mxu0 0
  %1817 = vmatmul.mubr.bf16.gmra.mrb[0].mxu0 %v1779
  %v1818 = vpop.f32.mrb[0].mxu0
  %v1819 = vadd.f32 %v134, %v1818
  %v1820 = vpop.f32.mrb[0].mxu0
  %v1821 = vpop.f32.mrb[0].mxu0
  %v1822 = vpop.f32.mrb[0].mxu0
  %1823 = vdwg.mxu0
  %v1824 = vsel %vm209, %v1769, -inf
  %1825 = vmax.xlane.f32.xlu0 %v1824
  %v1826 = vpop.xlane.xlu0 %1825
  %v1827 = vsel %vm209, %v1819, -inf
  %1828 = vmax.xlane.f32.xlu0 %v1827
  %v1829 = vpop.xlane.xlu0 %1828
  %v1830 = vsub.f32 %v1769, %v1826
  %v1831 = vsub.f32 %v1819, %v1829
  %v1832 = vmul.f32 %v1830, 1.442695
  %v1833 = vpow.pop %v1832
  %v1834 = vmul.f32 %v1831, 1.442695
  %v1835 = vpow.pop %v1834
  %v1836 = vsel %vm209, %v1833, 0.0
  %1837 = vadd.xlane.f32.xlu0 %v1836
  %v1838 = vpop.xlane.xlu0 %1837
  %v1839 = vsel %vm209, %v1835, 0.0
  %1840 = vadd.xlane.f32.xlu0 %v1839
  %v1841 = vpop.xlane.xlu0 %1840
  %v1842 = vrcp.pop %v1838
  %v1843 = vrcp.pop %v1841
  %v1844 = vmul.f32 %v1833, %v1842
  %v1845 = vmul.f32 %v1835, %v1843
  %v1846 = vpack.c.bf16 %v1844, %v1844
  %v1847 = vpack.c.bf16 %v1845, %v1845
  %1848 = vrot.lane.b32.xlu0 %v1504, 56
  %v1849 = vpop.permute.xlu0 %1848
  %v1851 = vsel %vm209, %v1846, 0
  %v1854 = vsel %vm334, %v1849, 0
  %1856 = vmatprep.subr.bf16.mxu0 0
  %1857 = vmatpush1.bf16.msra.mxu0 %v1854
  %1858 = vmatprep.subr.bf16.mxu0 0
  %1859 = vmatpush1.bf16.msra.mxu0 0
  %1860 = vmatprep.subr.bf16.mxu0 0
  %1861 = vmatpush1.bf16.msra.mxu0 0
  %1862 = vmatprep.subr.bf16.mxu0 0
  %1863 = vmatpush1.bf16.msra.mxu0 0
  %1864 = vmatprep.subr.bf16.mxu0 0
  %1865 = vmatpush1.bf16.msra.mxu0 0
  %1866 = vmatprep.subr.bf16.mxu0 0
  %1867 = vmatpush1.bf16.msra.mxu0 0
  %1868 = vmatprep.subr.bf16.mxu0 0
  %1869 = vmatpush1.bf16.msra.mxu0 0
  %1870 = vmatprep.subr.bf16.mxu0 0
  %1871 = vmatpush1.bf16.msra.mxu0 0
  %1872 = vmatprep.subr.bf16.mxu0 0
  %1873 = vmatpush1.bf16.msra.mxu0 0
  %1874 = vmatprep.subr.bf16.mxu0 0
  %1875 = vmatpush1.bf16.msra.mxu0 0
  %1876 = vmatprep.subr.bf16.mxu0 0
  %1877 = vmatpush1.bf16.msra.mxu0 0
  %1878 = vmatprep.subr.bf16.mxu0 0
  %1879 = vmatpush1.bf16.msra.mxu0 0
  %1880 = vmatprep.subr.bf16.mxu0 0
  %1881 = vmatpush1.bf16.msra.mxu0 0
  %1882 = vmatprep.subr.bf16.mxu0 0
  %1883 = vmatpush1.bf16.msra.mxu0 0
  %1884 = vmatprep.subr.bf16.mxu0 0
  %1885 = vmatpush1.bf16.msra.mxu0 0
  %1886 = vmatprep.subr.bf16.mxu0 0
  %1887 = vmatpush1.bf16.msra.mxu0 0
  %1888 = vmatprep.mubr.bf16.mxu0 0
  %1889 = vmatmul.mubr.bf16.gmra.mrb[0].mxu0 %v1851
  %v1890 = vpop.f32.mrb[0].mxu0
  %v1891 = vadd.f32 0.0, %v1890
  %v1892 = vpop.f32.mrb[0].mxu0
  %v1893 = vpop.f32.mrb[0].mxu0
  %v1894 = vpop.f32.mrb[0].mxu0
  %1895 = vdwg.mxu0
  %1896 = vrot.lane.b32.xlu0 %v1505, 56
  %v1897 = vpop.permute.xlu0 %1896
  %v1899 = vsel %vm209, %v1847, 0
  %v1902 = vsel %vm334, %v1897, 0
  %1904 = vmatprep.subr.bf16.mxu0 0
  %1905 = vmatpush1.bf16.msra.mxu0 %v1902
  %1906 = vmatprep.subr.bf16.mxu0 0
  %1907 = vmatpush1.bf16.msra.mxu0 0
  %1908 = vmatprep.subr.bf16.mxu0 0
  %1909 = vmatpush1.bf16.msra.mxu0 0
  %1910 = vmatprep.subr.bf16.mxu0 0
  %1911 = vmatpush1.bf16.msra.mxu0 0
  %1912 = vmatprep.subr.bf16.mxu0 0
  %1913 = vmatpush1.bf16.msra.mxu0 0
  %1914 = vmatprep.subr.bf16.mxu0 0
  %1915 = vmatpush1.bf16.msra.mxu0 0
  %1916 = vmatprep.subr.bf16.mxu0 0
  %1917 = vmatpush1.bf16.msra.mxu0 0
  %1918 = vmatprep.subr.bf16.mxu0 0
  %1919 = vmatpush1.bf16.msra.mxu0 0
  %1920 = vmatprep.subr.bf16.mxu0 0
  %1921 = vmatpush1.bf16.msra.mxu0 0
  %1922 = vmatprep.subr.bf16.mxu0 0
  %1923 = vmatpush1.bf16.msra.mxu0 0
  %1924 = vmatprep.subr.bf16.mxu0 0
  %1925 = vmatpush1.bf16.msra.mxu0 0
  %1926 = vmatprep.subr.bf16.mxu0 0
  %1927 = vmatpush1.bf16.msra.mxu0 0
  %1928 = vmatprep.subr.bf16.mxu0 0
  %1929 = vmatpush1.bf16.msra.mxu0 0
  %1930 = vmatprep.subr.bf16.mxu0 0
  %1931 = vmatpush1.bf16.msra.mxu0 0
  %1932 = vmatprep.subr.bf16.mxu0 0
  %1933 = vmatpush1.bf16.msra.mxu0 0
  %1934 = vmatprep.subr.bf16.mxu0 0
  %1935 = vmatpush1.bf16.msra.mxu0 0
  %1936 = vmatprep.mubr.bf16.mxu0 0
  %1937 = vmatmul.mubr.bf16.gmra.mrb[0].mxu0 %v1899
  %v1938 = vpop.f32.mrb[0].mxu0
  %v1939 = vadd.f32 0.0, %v1938
  %v1940 = vpop.f32.mrb[0].mxu0
  %v1941 = vpop.f32.mrb[0].mxu0
  %v1942 = vpop.f32.mrb[0].mxu0
  %1943 = vdwg.mxu0
  %1944 = vrot.lane.b32.xlu0 %v1504, 112
  %v1945 = vpop.permute.xlu0 %1944
  %1946 = vrot.lane.b32.xlu0 %v1504, 80
  %v1947 = vpop.permute.xlu0 %1946
  %v1949 = vsel %vm209, %v1945, 0
  %v1952 = vsel %vm209, %v1947, 0
  %1954 = vmatprep.subr.bf16.mxu0 0
  %1955 = vmatpush1.bf16.xpose.msra.mxu0 %v1952
  %1956 = vmatprep.subr.bf16.mxu0 0
  %1957 = vmatpush1.bf16.xpose.msra.mxu0 0
  %1958 = vmatprep.subr.bf16.mxu0 0
  %1959 = vmatpush1.bf16.xpose.msra.mxu0 0
  %1960 = vmatprep.subr.bf16.mxu0 0
  %1961 = vmatpush1.bf16.xpose.msra.mxu0 0
  %1962 = vmatprep.subr.bf16.mxu0 0
  %1963 = vmatpush1.bf16.xpose.msra.mxu0 0
  %1964 = vmatprep.subr.bf16.mxu0 0
  %1965 = vmatpush1.bf16.xpose.msra.mxu0 0
  %1966 = vmatprep.subr.bf16.mxu0 0
  %1967 = vmatpush1.bf16.xpose.msra.mxu0 0
  %1968 = vmatprep.subr.bf16.mxu0 0
  %1969 = vmatpush1.bf16.xpose.msra.mxu0 0
  %1970 = vmatprep.subr.bf16.mxu0 0
  %1971 = vmatpush1.bf16.xpose.msra.mxu0 0
  %1972 = vmatprep.subr.bf16.mxu0 0
  %1973 = vmatpush1.bf16.xpose.msra.mxu0 0
  %1974 = vmatprep.subr.bf16.mxu0 0
  %1975 = vmatpush1.bf16.xpose.msra.mxu0 0
  %1976 = vmatprep.subr.bf16.mxu0 0
  %1977 = vmatpush1.bf16.xpose.msra.mxu0 0
  %1978 = vmatprep.subr.bf16.mxu0 0
  %1979 = vmatpush1.bf16.xpose.msra.mxu0 0
  %1980 = vmatprep.subr.bf16.mxu0 0
  %1981 = vmatpush1.bf16.xpose.msra.mxu0 0
  %1982 = vmatprep.subr.bf16.mxu0 0
  %1983 = vmatpush1.bf16.xpose.msra.mxu0 0
  %1984 = vmatprep.subr.bf16.mxu0 0
  %1985 = vmatpush1.bf16.xpose.msra.mxu0 0
  %1986 = vmatprep.mubr.bf16.mxu0 0
  %1987 = vmatmul.mubr.bf16.gmra.mrb[0].mxu0 %v1949
  %v1988 = vpop.f32.mrb[0].mxu0
  %v1989 = vadd.f32 %v134, %v1988
  %v1990 = vpop.f32.mrb[0].mxu0
  %v1991 = vpop.f32.mrb[0].mxu0
  %v1992 = vpop.f32.mrb[0].mxu0
  %1993 = vdwg.mxu0
  %1994 = vrot.lane.b32.xlu0 %v1505, 112
  %v1995 = vpop.permute.xlu0 %1994
  %1996 = vrot.lane.b32.xlu0 %v1505, 80
  %v1997 = vpop.permute.xlu0 %1996
  %v1999 = vsel %vm209, %v1995, 0
  %v2002 = vsel %vm209, %v1997, 0
  %2004 = vmatprep.subr.bf16.mxu0 0
  %2005 = vmatpush1.bf16.xpose.msra.mxu0 %v2002
  %2006 = vmatprep.subr.bf16.mxu0 0
  %2007 = vmatpush1.bf16.xpose.msra.mxu0 0
  %2008 = vmatprep.subr.bf16.mxu0 0
  %2009 = vmatpush1.bf16.xpose.msra.mxu0 0
  %2010 = vmatprep.subr.bf16.mxu0 0
  %2011 = vmatpush1.bf16.xpose.msra.mxu0 0
  %2012 = vmatprep.subr.bf16.mxu0 0
  %2013 = vmatpush1.bf16.xpose.msra.mxu0 0
  %2014 = vmatprep.subr.bf16.mxu0 0
  %2015 = vmatpush1.bf16.xpose.msra.mxu0 0
  %2016 = vmatprep.subr.bf16.mxu0 0
  %2017 = vmatpush1.bf16.xpose.msra.mxu0 0
  %2018 = vmatprep.subr.bf16.mxu0 0
  %2019 = vmatpush1.bf16.xpose.msra.mxu0 0
  %2020 = vmatprep.subr.bf16.mxu0 0
  %2021 = vmatpush1.bf16.xpose.msra.mxu0 0
  %2022 = vmatprep.subr.bf16.mxu0 0
  %2023 = vmatpush1.bf16.xpose.msra.mxu0 0
  %2024 = vmatprep.subr.bf16.mxu0 0
  %2025 = vmatpush1.bf16.xpose.msra.mxu0 0
  %2026 = vmatprep.subr.bf16.mxu0 0
  %2027 = vmatpush1.bf16.xpose.msra.mxu0 0
  %2028 = vmatprep.subr.bf16.mxu0 0
  %2029 = vmatpush1.bf16.xpose.msra.mxu0 0
  %2030 = vmatprep.subr.bf16.mxu0 0
  %2031 = vmatpush1.bf16.xpose.msra.mxu0 0
  %2032 = vmatprep.subr.bf16.mxu0 0
  %2033 = vmatpush1.bf16.xpose.msra.mxu0 0
  %2034 = vmatprep.subr.bf16.mxu0 0
  %2035 = vmatpush1.bf16.xpose.msra.mxu0 0
  %2036 = vmatprep.mubr.bf16.mxu0 0
  %2037 = vmatmul.mubr.bf16.gmra.mrb[0].mxu0 %v1999
  %v2038 = vpop.f32.mrb[0].mxu0
  %v2039 = vadd.f32 %v134, %v2038
  %v2040 = vpop.f32.mrb[0].mxu0
  %v2041 = vpop.f32.mrb[0].mxu0
  %v2042 = vpop.f32.mrb[0].mxu0
  %2043 = vdwg.mxu0
  %v2044 = vsel %vm209, %v1989, -inf
  %2045 = vmax.xlane.f32.xlu0 %v2044
  %v2046 = vpop.xlane.xlu0 %2045
  %v2047 = vsel %vm209, %v2039, -inf
  %2048 = vmax.xlane.f32.xlu0 %v2047
  %v2049 = vpop.xlane.xlu0 %2048
  %v2050 = vsub.f32 %v1989, %v2046
  %v2051 = vsub.f32 %v2039, %v2049
  %v2052 = vmul.f32 %v2050, 1.442695
  %v2053 = vpow.pop %v2052
  %v2054 = vmul.f32 %v2051, 1.442695
  %v2055 = vpow.pop %v2054
  %v2056 = vsel %vm209, %v2053, 0.0
  %2057 = vadd.xlane.f32.xlu0 %v2056
  %v2058 = vpop.xlane.xlu0 %2057
  %v2059 = vsel %vm209, %v2055, 0.0
  %2060 = vadd.xlane.f32.xlu0 %v2059
  %v2061 = vpop.xlane.xlu0 %2060
  %v2062 = vrcp.pop %v2058
  %v2063 = vrcp.pop %v2061
  %v2064 = vmul.f32 %v2053, %v2062
  %v2065 = vmul.f32 %v2055, %v2063
  %v2066 = vpack.c.bf16 %v2064, %v2064
  %v2067 = vpack.c.bf16 %v2065, %v2065
  %2068 = vrot.lane.b32.xlu0 %v1504, 48
  %v2069 = vpop.permute.xlu0 %2068
  %v2071 = vsel %vm209, %v2066, 0
  %v2074 = vsel %vm334, %v2069, 0
  %2076 = vmatprep.subr.bf16.mxu0 0
  %2077 = vmatpush1.bf16.msra.mxu0 %v2074
  %2078 = vmatprep.subr.bf16.mxu0 0
  %2079 = vmatpush1.bf16.msra.mxu0 0
  %2080 = vmatprep.subr.bf16.mxu0 0
  %2081 = vmatpush1.bf16.msra.mxu0 0
  %2082 = vmatprep.subr.bf16.mxu0 0
  %2083 = vmatpush1.bf16.msra.mxu0 0
  %2084 = vmatprep.subr.bf16.mxu0 0
  %2085 = vmatpush1.bf16.msra.mxu0 0
  %2086 = vmatprep.subr.bf16.mxu0 0
  %2087 = vmatpush1.bf16.msra.mxu0 0
  %2088 = vmatprep.subr.bf16.mxu0 0
  %2089 = vmatpush1.bf16.msra.mxu0 0
  %2090 = vmatprep.subr.bf16.mxu0 0
  %2091 = vmatpush1.bf16.msra.mxu0 0
  %2092 = vmatprep.subr.bf16.mxu0 0
  %2093 = vmatpush1.bf16.msra.mxu0 0
  %2094 = vmatprep.subr.bf16.mxu0 0
  %2095 = vmatpush1.bf16.msra.mxu0 0
  %2096 = vmatprep.subr.bf16.mxu0 0
  %2097 = vmatpush1.bf16.msra.mxu0 0
  %2098 = vmatprep.subr.bf16.mxu0 0
  %2099 = vmatpush1.bf16.msra.mxu0 0
  %2100 = vmatprep.subr.bf16.mxu0 0
  %2101 = vmatpush1.bf16.msra.mxu0 0
  %2102 = vmatprep.subr.bf16.mxu0 0
  %2103 = vmatpush1.bf16.msra.mxu0 0
  %2104 = vmatprep.subr.bf16.mxu0 0
  %2105 = vmatpush1.bf16.msra.mxu0 0
  %2106 = vmatprep.subr.bf16.mxu0 0
  %2107 = vmatpush1.bf16.msra.mxu0 0
  %2108 = vmatprep.mubr.bf16.mxu0 0
  %2109 = vmatmul.mubr.bf16.gmra.mrb[0].mxu0 %v2071
  %v2110 = vpop.f32.mrb[0].mxu0
  %v2111 = vadd.f32 0.0, %v2110
  %v2112 = vpop.f32.mrb[0].mxu0
  %v2113 = vpop.f32.mrb[0].mxu0
  %v2114 = vpop.f32.mrb[0].mxu0
  %2115 = vdwg.mxu0
  %2116 = vrot.lane.b32.xlu0 %v1505, 48
  %v2117 = vpop.permute.xlu0 %2116
  %v2119 = vsel %vm209, %v2067, 0
  %v2122 = vsel %vm334, %v2117, 0
  %2124 = vmatprep.subr.bf16.mxu0 0
  %2125 = vmatpush1.bf16.msra.mxu0 %v2122
  %2126 = vmatprep.subr.bf16.mxu0 0
  %2127 = vmatpush1.bf16.msra.mxu0 0
  %2128 = vmatprep.subr.bf16.mxu0 0
  %2129 = vmatpush1.bf16.msra.mxu0 0
  %2130 = vmatprep.subr.bf16.mxu0 0
  %2131 = vmatpush1.bf16.msra.mxu0 0
  %2132 = vmatprep.subr.bf16.mxu0 0
  %2133 = vmatpush1.bf16.msra.mxu0 0
  %2134 = vmatprep.subr.bf16.mxu0 0
  %2135 = vmatpush1.bf16.msra.mxu0 0
  %2136 = vmatprep.subr.bf16.mxu0 0
  %2137 = vmatpush1.bf16.msra.mxu0 0
  %2138 = vmatprep.subr.bf16.mxu0 0
  %2139 = vmatpush1.bf16.msra.mxu0 0
  %2140 = vmatprep.subr.bf16.mxu0 0
  %2141 = vmatpush1.bf16.msra.mxu0 0
  %2142 = vmatprep.subr.bf16.mxu0 0
  %2143 = vmatpush1.bf16.msra.mxu0 0
  %2144 = vmatprep.subr.bf16.mxu0 0
  %2145 = vmatpush1.bf16.msra.mxu0 0
  %2146 = vmatprep.subr.bf16.mxu0 0
  %2147 = vmatpush1.bf16.msra.mxu0 0
  %2148 = vmatprep.subr.bf16.mxu0 0
  %2149 = vmatpush1.bf16.msra.mxu0 0
  %2150 = vmatprep.subr.bf16.mxu0 0
  %2151 = vmatpush1.bf16.msra.mxu0 0
  %2152 = vmatprep.subr.bf16.mxu0 0
  %2153 = vmatpush1.bf16.msra.mxu0 0
  %2154 = vmatprep.subr.bf16.mxu0 0
  %2155 = vmatpush1.bf16.msra.mxu0 0
  %2156 = vmatprep.mubr.bf16.mxu0 0
  %2157 = vmatmul.mubr.bf16.gmra.mrb[0].mxu0 %v2119
  %v2158 = vpop.f32.mrb[0].mxu0
  %v2159 = vadd.f32 0.0, %v2158
  %v2160 = vpop.f32.mrb[0].mxu0
  %v2161 = vpop.f32.mrb[0].mxu0
  %v2162 = vpop.f32.mrb[0].mxu0
  %2163 = vdwg.mxu0
  %2164 = vrot.lane.b32.xlu0 %v1504, 104
  %v2165 = vpop.permute.xlu0 %2164
  %2166 = vrot.lane.b32.xlu0 %v1504, 72
  %v2167 = vpop.permute.xlu0 %2166
  %v2169 = vsel %vm209, %v2165, 0
  %v2172 = vsel %vm209, %v2167, 0
  %2174 = vmatprep.subr.bf16.mxu0 0
  %2175 = vmatpush1.bf16.xpose.msra.mxu0 %v2172
  %2176 = vmatprep.subr.bf16.mxu0 0
  %2177 = vmatpush1.bf16.xpose.msra.mxu0 0
  %2178 = vmatprep.subr.bf16.mxu0 0
  %2179 = vmatpush1.bf16.xpose.msra.mxu0 0
  %2180 = vmatprep.subr.bf16.mxu0 0
  %2181 = vmatpush1.bf16.xpose.msra.mxu0 0
  %2182 = vmatprep.subr.bf16.mxu0 0
  %2183 = vmatpush1.bf16.xpose.msra.mxu0 0
  %2184 = vmatprep.subr.bf16.mxu0 0
  %2185 = vmatpush1.bf16.xpose.msra.mxu0 0
  %2186 = vmatprep.subr.bf16.mxu0 0
  %2187 = vmatpush1.bf16.xpose.msra.mxu0 0
  %2188 = vmatprep.subr.bf16.mxu0 0
  %2189 = vmatpush1.bf16.xpose.msra.mxu0 0
  %2190 = vmatprep.subr.bf16.mxu0 0
  %2191 = vmatpush1.bf16.xpose.msra.mxu0 0
  %2192 = vmatprep.subr.bf16.mxu0 0
  %2193 = vmatpush1.bf16.xpose.msra.mxu0 0
  %2194 = vmatprep.subr.bf16.mxu0 0
  %2195 = vmatpush1.bf16.xpose.msra.mxu0 0
  %2196 = vmatprep.subr.bf16.mxu0 0
  %2197 = vmatpush1.bf16.xpose.msra.mxu0 0
  %2198 = vmatprep.subr.bf16.mxu0 0
  %2199 = vmatpush1.bf16.xpose.msra.mxu0 0
  %2200 = vmatprep.subr.bf16.mxu0 0
  %2201 = vmatpush1.bf16.xpose.msra.mxu0 0
  %2202 = vmatprep.subr.bf16.mxu0 0
  %2203 = vmatpush1.bf16.xpose.msra.mxu0 0
  %2204 = vmatprep.subr.bf16.mxu0 0
  %2205 = vmatpush1.bf16.xpose.msra.mxu0 0
  %2206 = vmatprep.mubr.bf16.mxu0 0
  %2207 = vmatmul.mubr.bf16.gmra.mrb[0].mxu0 %v2169
  %v2208 = vpop.f32.mrb[0].mxu0
  %v2209 = vadd.f32 %v134, %v2208
  %v2210 = vpop.f32.mrb[0].mxu0
  %v2211 = vpop.f32.mrb[0].mxu0
  %v2212 = vpop.f32.mrb[0].mxu0
  %2213 = vdwg.mxu0
  %2214 = vrot.lane.b32.xlu0 %v1505, 104
  %v2215 = vpop.permute.xlu0 %2214
  %2216 = vrot.lane.b32.xlu0 %v1505, 72
  %v2217 = vpop.permute.xlu0 %2216
  %v2219 = vsel %vm209, %v2215, 0
  %v2222 = vsel %vm209, %v2217, 0
  %2224 = vmatprep.subr.bf16.mxu0 0
  %2225 = vmatpush1.bf16.xpose.msra.mxu0 %v2222
  %2226 = vmatprep.subr.bf16.mxu0 0
  %2227 = vmatpush1.bf16.xpose.msra.mxu0 0
  %2228 = vmatprep.subr.bf16.mxu0 0
  %2229 = vmatpush1.bf16.xpose.msra.mxu0 0
  %2230 = vmatprep.subr.bf16.mxu0 0
  %2231 = vmatpush1.bf16.xpose.msra.mxu0 0
  %2232 = vmatprep.subr.bf16.mxu0 0
  %2233 = vmatpush1.bf16.xpose.msra.mxu0 0
  %2234 = vmatprep.subr.bf16.mxu0 0
  %2235 = vmatpush1.bf16.xpose.msra.mxu0 0
  %2236 = vmatprep.subr.bf16.mxu0 0
  %2237 = vmatpush1.bf16.xpose.msra.mxu0 0
  %2238 = vmatprep.subr.bf16.mxu0 0
  %2239 = vmatpush1.bf16.xpose.msra.mxu0 0
  %2240 = vmatprep.subr.bf16.mxu0 0
  %2241 = vmatpush1.bf16.xpose.msra.mxu0 0
  %2242 = vmatprep.subr.bf16.mxu0 0
  %2243 = vmatpush1.bf16.xpose.msra.mxu0 0
  %2244 = vmatprep.subr.bf16.mxu0 0
  %2245 = vmatpush1.bf16.xpose.msra.mxu0 0
  %2246 = vmatprep.subr.bf16.mxu0 0
  %2247 = vmatpush1.bf16.xpose.msra.mxu0 0
  %2248 = vmatprep.subr.bf16.mxu0 0
  %2249 = vmatpush1.bf16.xpose.msra.mxu0 0
  %2250 = vmatprep.subr.bf16.mxu0 0
  %2251 = vmatpush1.bf16.xpose.msra.mxu0 0
  %2252 = vmatprep.subr.bf16.mxu0 0
  %2253 = vmatpush1.bf16.xpose.msra.mxu0 0
  %2254 = vmatprep.subr.bf16.mxu0 0
  %2255 = vmatpush1.bf16.xpose.msra.mxu0 0
  %2256 = vmatprep.mubr.bf16.mxu0 0
  %2257 = vmatmul.mubr.bf16.gmra.mrb[0].mxu0 %v2219
  %v2258 = vpop.f32.mrb[0].mxu0
  %v2259 = vadd.f32 %v134, %v2258
  %v2260 = vpop.f32.mrb[0].mxu0
  %v2261 = vpop.f32.mrb[0].mxu0
  %v2262 = vpop.f32.mrb[0].mxu0
  %2263 = vdwg.mxu0
  %v2264 = vsel %vm209, %v2209, -inf
  %2265 = vmax.xlane.f32.xlu0 %v2264
  %v2266 = vpop.xlane.xlu0 %2265
  %v2267 = vsel %vm209, %v2259, -inf
  %2268 = vmax.xlane.f32.xlu0 %v2267
  %v2269 = vpop.xlane.xlu0 %2268
  %v2270 = vsub.f32 %v2209, %v2266
  %v2271 = vsub.f32 %v2259, %v2269
  %v2272 = vmul.f32 %v2270, 1.442695
  %v2273 = vpow.pop %v2272
  %v2274 = vmul.f32 %v2271, 1.442695
  %v2275 = vpow.pop %v2274
  %v2276 = vsel %vm209, %v2273, 0.0
  %2277 = vadd.xlane.f32.xlu0 %v2276
  %v2278 = vpop.xlane.xlu0 %2277
  %v2279 = vsel %vm209, %v2275, 0.0
  %2280 = vadd.xlane.f32.xlu0 %v2279
  %v2281 = vpop.xlane.xlu0 %2280
  %v2282 = vrcp.pop %v2278
  %v2283 = vrcp.pop %v2281
  %v2284 = vmul.f32 %v2273, %v2282
  %v2285 = vmul.f32 %v2275, %v2283
  %v2286 = vpack.c.bf16 %v2284, %v2284
  %v2287 = vpack.c.bf16 %v2285, %v2285
  %2288 = vrot.lane.b32.xlu0 %v1504, 40
  %v2289 = vpop.permute.xlu0 %2288
  %v2291 = vsel %vm209, %v2286, 0
  %v2294 = vsel %vm334, %v2289, 0
  %2296 = vmatprep.subr.bf16.mxu0 0
  %2297 = vmatpush1.bf16.msra.mxu0 %v2294
  %2298 = vmatprep.subr.bf16.mxu0 0
  %2299 = vmatpush1.bf16.msra.mxu0 0
  %2300 = vmatprep.subr.bf16.mxu0 0
  %2301 = vmatpush1.bf16.msra.mxu0 0
  %2302 = vmatprep.subr.bf16.mxu0 0
  %2303 = vmatpush1.bf16.msra.mxu0 0
  %2304 = vmatprep.subr.bf16.mxu0 0
  %2305 = vmatpush1.bf16.msra.mxu0 0
  %2306 = vmatprep.subr.bf16.mxu0 0
  %2307 = vmatpush1.bf16.msra.mxu0 0
  %2308 = vmatprep.subr.bf16.mxu0 0
  %2309 = vmatpush1.bf16.msra.mxu0 0
  %2310 = vmatprep.subr.bf16.mxu0 0
  %2311 = vmatpush1.bf16.msra.mxu0 0
  %2312 = vmatprep.subr.bf16.mxu0 0
  %2313 = vmatpush1.bf16.msra.mxu0 0
  %2314 = vmatprep.subr.bf16.mxu0 0
  %2315 = vmatpush1.bf16.msra.mxu0 0
  %2316 = vmatprep.subr.bf16.mxu0 0
  %2317 = vmatpush1.bf16.msra.mxu0 0
  %2318 = vmatprep.subr.bf16.mxu0 0
  %2319 = vmatpush1.bf16.msra.mxu0 0
  %2320 = vmatprep.subr.bf16.mxu0 0
  %2321 = vmatpush1.bf16.msra.mxu0 0
  %2322 = vmatprep.subr.bf16.mxu0 0
  %2323 = vmatpush1.bf16.msra.mxu0 0
  %2324 = vmatprep.subr.bf16.mxu0 0
  %2325 = vmatpush1.bf16.msra.mxu0 0
  %2326 = vmatprep.subr.bf16.mxu0 0
  %2327 = vmatpush1.bf16.msra.mxu0 0
  %2328 = vmatprep.mubr.bf16.mxu0 0
  %2329 = vmatmul.mubr.bf16.gmra.mrb[0].mxu0 %v2291
  %v2330 = vpop.f32.mrb[0].mxu0
  %v2331 = vadd.f32 0.0, %v2330
  %v2332 = vpop.f32.mrb[0].mxu0
  %v2333 = vpop.f32.mrb[0].mxu0
  %v2334 = vpop.f32.mrb[0].mxu0
  %2335 = vdwg.mxu0
  %2336 = vrot.lane.b32.xlu0 %v1505, 40
  %v2337 = vpop.permute.xlu0 %2336
  %v2339 = vsel %vm209, %v2287, 0
  %v2342 = vsel %vm334, %v2337, 0
  %2344 = vmatprep.subr.bf16.mxu0 0
  %2345 = vmatpush1.bf16.msra.mxu0 %v2342
  %2346 = vmatprep.subr.bf16.mxu0 0
  %2347 = vmatpush1.bf16.msra.mxu0 0
  %2348 = vmatprep.subr.bf16.mxu0 0
  %2349 = vmatpush1.bf16.msra.mxu0 0
  %2350 = vmatprep.subr.bf16.mxu0 0
  %2351 = vmatpush1.bf16.msra.mxu0 0
  %2352 = vmatprep.subr.bf16.mxu0 0
  %2353 = vmatpush1.bf16.msra.mxu0 0
  %2354 = vmatprep.subr.bf16.mxu0 0
  %2355 = vmatpush1.bf16.msra.mxu0 0
  %2356 = vmatprep.subr.bf16.mxu0 0
  %2357 = vmatpush1.bf16.msra.mxu0 0
  %2358 = vmatprep.subr.bf16.mxu0 0
  %2359 = vmatpush1.bf16.msra.mxu0 0
  %2360 = vmatprep.subr.bf16.mxu0 0
  %2361 = vmatpush1.bf16.msra.mxu0 0
  %2362 = vmatprep.subr.bf16.mxu0 0
  %2363 = vmatpush1.bf16.msra.mxu0 0
  %2364 = vmatprep.subr.bf16.mxu0 0
  %2365 = vmatpush1.bf16.msra.mxu0 0
  %2366 = vmatprep.subr.bf16.mxu0 0
  %2367 = vmatpush1.bf16.msra.mxu0 0
  %2368 = vmatprep.subr.bf16.mxu0 0
  %2369 = vmatpush1.bf16.msra.mxu0 0
  %2370 = vmatprep.subr.bf16.mxu0 0
  %2371 = vmatpush1.bf16.msra.mxu0 0
  %2372 = vmatprep.subr.bf16.mxu0 0
  %2373 = vmatpush1.bf16.msra.mxu0 0
  %2374 = vmatprep.subr.bf16.mxu0 0
  %2375 = vmatpush1.bf16.msra.mxu0 0
  %2376 = vmatprep.mubr.bf16.mxu0 0
  %2377 = vmatmul.mubr.bf16.gmra.mrb[0].mxu0 %v2339
  %v2378 = vpop.f32.mrb[0].mxu0
  %v2379 = vadd.f32 0.0, %v2378
  %v2380 = vpop.f32.mrb[0].mxu0
  %v2381 = vpop.f32.mrb[0].mxu0
  %v2382 = vpop.f32.mrb[0].mxu0
  %2383 = vdwg.mxu0
  %2386 = vrot.lane.b32.xlu0 %v1891, 8
  %v2387 = vpop.permute.xlu0 %2386
  %2388 = vrot.lane.b32.xlu0 %v1939, 8
  %v2389 = vpop.permute.xlu0 %2388
  %2394 = vrot.lane.b32.xlu0 %v2111, 16
  %v2395 = vpop.permute.xlu0 %2394
  %2396 = vrot.lane.b32.xlu0 %v2159, 16
  %v2397 = vpop.permute.xlu0 %2396
  %2402 = vrot.lane.b32.xlu0 %v2331, 24
  %v2403 = vpop.permute.xlu0 %2402
  %2404 = vrot.lane.b32.xlu0 %v2379, 24
  %v2405 = vpop.permute.xlu0 %2404
  %v2408 = vsel %vm209, %v1671, %v2387
  %v2409 = vsel %vm209, %v1719, %v2389
  %v2410 = vsel %vm1112, %v2408, %v2395
  %v2411 = vsel %vm1112, %v2409, %v2397
  %v2412 = vsel %vm1115, %v2410, %v2403
  %v2413 = vsel %vm1115, %v2411, %v2405
  %v2414 = vpack.c.bf16 %v2413, %v2412
  %s2415 = scalar_lea.vmem %s7, 16
  %v2416 = vld [vmem:[%s2415] sm:$0xf]
  %v2417 = vld [vmem:[%s2415 + $0x4] sm:$0xf]
  %v2418 = vld [vmem:[%s2415 + $0x8] sm:$0xf]
  %v2419 = vld [vmem:[%s2415 + $0xc] sm:$0xf]
  %s2420 = scalar_lea.vmem %s8, 1
  %v2421 = vld [vmem:[%s2420] sm:$0x1]
  %v2423 = vlaneseq
  %v2424 = vshrl.u32 %v2423, 7
  %v2425 = vsub.s32 0, %v2424
  %v2426 = vrot.slane %v2421, %v2425
  %v2432 = vunpack.c.l.b16 %v2416
  %v2433 = vunpack.c.l.b16 %v2417
  %v2434 = vunpack.c.l.b16 %v2418
  %v2435 = vunpack.c.l.b16 %v2419
  %v2436 = vpack.c.b16 %v2433, %v2432
  %v2437 = vpack.c.b16 %v2435, %v2434
  %v2441 = vsel %vm159, %v2414, 0
  %2443 = vmatprep.subr.bf16.mxu0 0
  %2444 = vmatpush1.bf16.msra.mxu0 %v2436
  %2445 = vmatprep.subr.bf16.mxu0 0
  %2446 = vmatpush1.bf16.msra.mxu0 %v2437
  %2447 = vmatprep.subr.bf16.mxu0 0
  %2448 = vmatpush1.bf16.msra.mxu0 0
  %2449 = vmatprep.subr.bf16.mxu0 0
  %2450 = vmatpush1.bf16.msra.mxu0 0
  %2451 = vmatprep.subr.bf16.mxu0 0
  %2452 = vmatpush1.bf16.msra.mxu0 0
  %2453 = vmatprep.subr.bf16.mxu0 0
  %2454 = vmatpush1.bf16.msra.mxu0 0
  %2455 = vmatprep.subr.bf16.mxu0 0
  %2456 = vmatpush1.bf16.msra.mxu0 0
  %2457 = vmatprep.subr.bf16.mxu0 0
  %2458 = vmatpush1.bf16.msra.mxu0 0
  %2459 = vmatprep.subr.bf16.mxu0 0
  %2460 = vmatpush1.bf16.msra.mxu0 0
  %2461 = vmatprep.subr.bf16.mxu0 0
  %2462 = vmatpush1.bf16.msra.mxu0 0
  %2463 = vmatprep.subr.bf16.mxu0 0
  %2464 = vmatpush1.bf16.msra.mxu0 0
  %2465 = vmatprep.subr.bf16.mxu0 0
  %2466 = vmatpush1.bf16.msra.mxu0 0
  %2467 = vmatprep.subr.bf16.mxu0 0
  %2468 = vmatpush1.bf16.msra.mxu0 0
  %2469 = vmatprep.subr.bf16.mxu0 0
  %2470 = vmatpush1.bf16.msra.mxu0 0
  %2471 = vmatprep.subr.bf16.mxu0 0
  %2472 = vmatpush1.bf16.msra.mxu0 0
  %2473 = vmatprep.subr.bf16.mxu0 0
  %2474 = vmatpush1.bf16.msra.mxu0 0
  %2475 = vmatprep.mubr.bf16.mxu0 0
  %2476 = vmatmul.mubr.bf16.gmra.mrb[0].mxu0 %v2441
  %v2477 = vpop.f32.mrb[0].mxu0
  %v2478 = vadd.f32 %v2426, %v2477
  %v2479 = vpop.f32.mrb[0].mxu0
  %v2480 = vpop.f32.mrb[0].mxu0
  %v2481 = vadd.f32 %v2426, %v2480
  %v2482 = vpop.f32.mrb[0].mxu0
  %2483 = vdwg.mxu0
  %v2484 = vadd.f32 %v1432, %v2478
  %v2485 = vadd.f32 %v1433, %v2481
  %s2486 = scalar_lea.vmem %s9, 1
  %v2487 = vld [vmem:[%s2486] sm:$0x1]
  %s2488 = scalar_lea.vmem %s10, 1
  %v2489 = vld [vmem:[%s2488] sm:$0x1]
  %v2490 = vsel %vm159, %v2484, 0.0
  %2491 = vadd.xlane.f32.xlu0 %v2490
  %v2492 = vpop.xlane.xlu0 %2491
  %v2493 = vsel %vm159, %v2485, 0.0
  %2494 = vadd.xlane.f32.xlu0 %v2493
  %v2495 = vpop.xlane.xlu0 %2494
  %v2496 = vmul.f32 %v2492, %v1196
  %v2497 = vmul.f32 %v2495, %v1196
  %v2498 = vsub.f32 %v2484, %v2496
  %v2499 = vsub.f32 %v2485, %v2497
  %v2500 = vmul.f32 %v2498, %v2498
  %v2501 = vmul.f32 %v2499, %v2499
  %v2502 = vsel %vm159, %v2500, 0.0
  %2503 = vadd.xlane.f32.xlu0 %v2502
  %v2504 = vpop.xlane.xlu0 %2503
  %v2505 = vsel %vm159, %v2501, 0.0
  %2506 = vadd.xlane.f32.xlu0 %v2505
  %v2507 = vpop.xlane.xlu0 %2506
  %v2508 = vmul.f32 %v2504, %v1196
  %v2509 = vmul.f32 %v2507, %v1196
  %v2510 = vadd.f32 %v2508, 1e-05
  %v2511 = vadd.f32 %v2509, 1e-05
  %v2512 = vrsqrt.pop %v2510
  %v2513 = vrsqrt.pop %v2511
  %v2514 = vmul.f32 %v2498, %v2512
  %v2515 = vmul.f32 %v2499, %v2513
  %v2517 = vlaneseq
  %v2518 = vshrl.u32 %v2517, 7
  %v2519 = vsub.s32 0, %v2518
  %v2520 = vrot.slane %v2487, %v2519
  %v2522 = vmul.f32 %v2514, %v2520
  %v2523 = vmul.f32 %v2515, %v2520
  %v2525 = vlaneseq
  %v2526 = vshrl.u32 %v2525, 7
  %v2527 = vsub.s32 0, %v2526
  %v2528 = vrot.slane %v2489, %v2527
  %v2530 = vadd.f32 %v2522, %v2528
  %v2531 = vadd.f32 %v2523, %v2528
  %v2532 = vpack.c.bf16 %v2531, %v2530
  %s2533 = scalar_lea.vmem %s11, 16
  %v2534 = vld [vmem:[%s2533] sm:$0xf]
  %v2535 = vld [vmem:[%s2533 + $0x4] sm:$0xf]
  %v2536 = vld [vmem:[%s2533 + $0x8] sm:$0xf]
  %v2537 = vld [vmem:[%s2533 + $0xc] sm:$0xf]
  %s2538 = scalar_lea.vmem %s12, 1
  %v2539 = vld [vmem:[%s2538] sm:$0x1]
  %v2541 = vlaneseq
  %v2542 = vshrl.u32 %v2541, 7
  %v2543 = vsub.s32 0, %v2542
  %v2544 = vrot.slane %v2539, %v2543
  %v2550 = vunpack.c.l.b16 %v2534
  %v2551 = vunpack.c.l.b16 %v2535
  %v2552 = vunpack.c.l.b16 %v2536
  %v2553 = vunpack.c.l.b16 %v2537
  %v2554 = vpack.c.b16 %v2551, %v2550
  %v2555 = vpack.c.b16 %v2553, %v2552
  %v2559 = vsel %vm159, %v2532, 0
  %2561 = vmatprep.subr.bf16.mxu0 0
  %2562 = vmatpush1.bf16.msra.mxu0 %v2554
  %2563 = vmatprep.subr.bf16.mxu0 0
  %2564 = vmatpush1.bf16.msra.mxu0 %v2555
  %2565 = vmatprep.subr.bf16.mxu0 0
  %2566 = vmatpush1.bf16.msra.mxu0 0
  %2567 = vmatprep.subr.bf16.mxu0 0
  %2568 = vmatpush1.bf16.msra.mxu0 0
  %2569 = vmatprep.subr.bf16.mxu0 0
  %2570 = vmatpush1.bf16.msra.mxu0 0
  %2571 = vmatprep.subr.bf16.mxu0 0
  %2572 = vmatpush1.bf16.msra.mxu0 0
  %2573 = vmatprep.subr.bf16.mxu0 0
  %2574 = vmatpush1.bf16.msra.mxu0 0
  %2575 = vmatprep.subr.bf16.mxu0 0
  %2576 = vmatpush1.bf16.msra.mxu0 0
  %2577 = vmatprep.subr.bf16.mxu0 0
  %2578 = vmatpush1.bf16.msra.mxu0 0
  %2579 = vmatprep.subr.bf16.mxu0 0
  %2580 = vmatpush1.bf16.msra.mxu0 0
  %2581 = vmatprep.subr.bf16.mxu0 0
  %2582 = vmatpush1.bf16.msra.mxu0 0
  %2583 = vmatprep.subr.bf16.mxu0 0
  %2584 = vmatpush1.bf16.msra.mxu0 0
  %2585 = vmatprep.subr.bf16.mxu0 0
  %2586 = vmatpush1.bf16.msra.mxu0 0
  %2587 = vmatprep.subr.bf16.mxu0 0
  %2588 = vmatpush1.bf16.msra.mxu0 0
  %2589 = vmatprep.subr.bf16.mxu0 0
  %2590 = vmatpush1.bf16.msra.mxu0 0
  %2591 = vmatprep.subr.bf16.mxu0 0
  %2592 = vmatpush1.bf16.msra.mxu0 0
  %2593 = vmatprep.mubr.bf16.mxu0 0
  %2594 = vmatmul.mubr.bf16.gmra.mrb[0].mxu0 %v2559
  %v2595 = vpop.f32.mrb[0].mxu0
  %v2596 = vadd.f32 %v2544, %v2595
  %v2597 = vpop.f32.mrb[0].mxu0
  %v2598 = vpop.f32.mrb[0].mxu0
  %v2599 = vadd.f32 %v2544, %v2598
  %v2600 = vpop.f32.mrb[0].mxu0
  %2601 = vdwg.mxu0
  %v2602 = vmax.f32 %v2596, 0.0
  %v2603 = vmax.f32 %v2599, 0.0
  %v2604 = vpack.c.bf16 %v2603, %v2602
  %s2605 = scalar_lea.vmem %s13, 32
  %v2606 = vld [vmem:[%s2605] sm:$0xf]
  %v2607 = vld [vmem:[%s2605 + $0x4] sm:$0xf]
  %v2608 = vld [vmem:[%s2605 + $0x8] sm:$0xf]
  %v2609 = vld [vmem:[%s2605 + $0xc] sm:$0xf]
  %v2610 = vld [vmem:[%s2605 + $0x10] sm:$0xf]
  %v2611 = vld [vmem:[%s2605 + $0x14] sm:$0xf]
  %v2612 = vld [vmem:[%s2605 + $0x18] sm:$0xf]
  %v2613 = vld [vmem:[%s2605 + $0x1c] sm:$0xf]
  %s2614 = scalar_lea.vmem %s14, 1
  %v2615 = vld [vmem:[%s2614] sm:$0x1]
  %v2617 = vlaneseq
  %v2618 = vshrl.u32 %v2617, 7
  %v2619 = vsub.s32 0, %v2618
  %v2620 = vrot.slane %v2615, %v2619
  %v2630 = vunpack.c.l.b16 %v2606
  %v2631 = vunpack.c.l.b16 %v2607
  %v2632 = vunpack.c.l.b16 %v2608
  %v2633 = vunpack.c.l.b16 %v2609
  %v2634 = vunpack.c.l.b16 %v2610
  %v2635 = vunpack.c.l.b16 %v2611
  %v2636 = vunpack.c.l.b16 %v2612
  %v2637 = vunpack.c.l.b16 %v2613
  %v2638 = vpack.c.b16 %v2631, %v2630
  %v2639 = vpack.c.b16 %v2633, %v2632
  %v2640 = vpack.c.b16 %v2635, %v2634
  %v2641 = vpack.c.b16 %v2637, %v2636
  %v2647 = vsel %vm1343, %v2604, 0
  %2649 = vmatprep.subr.bf16.mxu0 0
  %2650 = vmatpush1.bf16.msra.mxu0 %v2638
  %2651 = vmatprep.subr.bf16.mxu0 0
  %2652 = vmatpush1.bf16.msra.mxu0 %v2639
  %2653 = vmatprep.subr.bf16.mxu0 0
  %2654 = vmatpush1.bf16.msra.mxu0 %v2640
  %2655 = vmatprep.subr.bf16.mxu0 0
  %2656 = vmatpush1.bf16.msra.mxu0 %v2641
  %2657 = vmatprep.subr.bf16.mxu0 0
  %2658 = vmatpush1.bf16.msra.mxu0 0
  %2659 = vmatprep.subr.bf16.mxu0 0
  %2660 = vmatpush1.bf16.msra.mxu0 0
  %2661 = vmatprep.subr.bf16.mxu0 0
  %2662 = vmatpush1.bf16.msra.mxu0 0
  %2663 = vmatprep.subr.bf16.mxu0 0
  %2664 = vmatpush1.bf16.msra.mxu0 0
  %2665 = vmatprep.subr.bf16.mxu0 0
  %2666 = vmatpush1.bf16.msra.mxu0 0
  %2667 = vmatprep.subr.bf16.mxu0 0
  %2668 = vmatpush1.bf16.msra.mxu0 0
  %2669 = vmatprep.subr.bf16.mxu0 0
  %2670 = vmatpush1.bf16.msra.mxu0 0
  %2671 = vmatprep.subr.bf16.mxu0 0
  %2672 = vmatpush1.bf16.msra.mxu0 0
  %2673 = vmatprep.subr.bf16.mxu0 0
  %2674 = vmatpush1.bf16.msra.mxu0 0
  %2675 = vmatprep.subr.bf16.mxu0 0
  %2676 = vmatpush1.bf16.msra.mxu0 0
  %2677 = vmatprep.subr.bf16.mxu0 0
  %2678 = vmatpush1.bf16.msra.mxu0 0
  %2679 = vmatprep.subr.bf16.mxu0 0
  %2680 = vmatpush1.bf16.msra.mxu0 0
  %2681 = vmatprep.mubr.bf16.mxu0 0
  %2682 = vmatmul.mubr.bf16.gmra.mrb[0].mxu0 %v2647
  %v2683 = vpop.f32.mrb[0].mxu0
  %v2684 = vadd.f32 %v2620, %v2683
  %v2685 = vpop.f32.mrb[0].mxu0
  %v2686 = vpop.f32.mrb[0].mxu0
  %v2687 = vadd.f32 %v2620, %v2686
  %v2688 = vpop.f32.mrb[0].mxu0
  %2689 = vdwg.mxu0
  %v2690 = vadd.f32 %v2530, %v2684
  %v2691 = vadd.f32 %v2531, %v2687
  %s2692 = scalar_lea.vmem %s15, 1
  %v2693 = vld [vmem:[%s2692] sm:$0x1]
  %s2694 = scalar_lea.vmem %s16, 1
  %v2695 = vld [vmem:[%s2694] sm:$0x1]
  %v2696 = vsel %vm159, %v2690, 0.0
  %2697 = vadd.xlane.f32.xlu0 %v2696
  %v2698 = vpop.xlane.xlu0 %2697
  %v2699 = vsel %vm159, %v2691, 0.0
  %2700 = vadd.xlane.f32.xlu0 %v2699
  %v2701 = vpop.xlane.xlu0 %2700
  %v2702 = vmul.f32 %v2698, %v1196
  %v2703 = vmul.f32 %v2701, %v1196
  %v2704 = vsub.f32 %v2690, %v2702
  %v2705 = vsub.f32 %v2691, %v2703
  %v2706 = vmul.f32 %v2704, %v2704
  %v2707 = vmul.f32 %v2705, %v2705
  %v2708 = vsel %vm159, %v2706, 0.0
  %2709 = vadd.xlane.f32.xlu0 %v2708
  %v2710 = vpop.xlane.xlu0 %2709
  %v2711 = vsel %vm159, %v2707, 0.0
  %2712 = vadd.xlane.f32.xlu0 %v2711
  %v2713 = vpop.xlane.xlu0 %2712
  %v2714 = vmul.f32 %v2710, %v1196
  %v2715 = vmul.f32 %v2713, %v1196
  %v2716 = vadd.f32 %v2714, 1e-05
  %v2717 = vadd.f32 %v2715, 1e-05
  %v2718 = vrsqrt.pop %v2716
  %v2719 = vrsqrt.pop %v2717
  %v2720 = vmul.f32 %v2704, %v2718
  %v2721 = vmul.f32 %v2705, %v2719
  %v2723 = vlaneseq
  %v2724 = vshrl.u32 %v2723, 7
  %v2725 = vsub.s32 0, %v2724
  %v2726 = vrot.slane %v2693, %v2725
  %v2728 = vmul.f32 %v2720, %v2726
  %v2729 = vmul.f32 %v2721, %v2726
  %v2731 = vlaneseq
  %v2732 = vshrl.u32 %v2731, 7
  %v2733 = vsub.s32 0, %v2732
  %v2734 = vrot.slane %v2695, %v2733
  %v2736 = vadd.f32 %v2728, %v2734
  %v2737 = vadd.f32 %v2729, %v2734
  %v2738 = vld [vmem:[%s2] sm:$0x1]
  %v2739 = vpack.c.bf16 %v2737, %v2736
  %v2741 = vsel %vm1112, %v2738, 0
  %2743 = vmatprep.subr.bf16.mxu0 0
  %2744 = vmatpush1.bf16.msra.mxu0 %v2739
  %2745 = vmatprep.subr.bf16.mxu0 0
  %2746 = vmatpush1.bf16.msra.mxu0 0
  %2747 = vmatprep.subr.bf16.mxu0 0
  %2748 = vmatpush1.bf16.msra.mxu0 0
  %2749 = vmatprep.subr.bf16.mxu0 0
  %2750 = vmatpush1.bf16.msra.mxu0 0
  %2751 = vmatprep.subr.bf16.mxu0 0
  %2752 = vmatpush1.bf16.msra.mxu0 0
  %2753 = vmatprep.subr.bf16.mxu0 0
  %2754 = vmatpush1.bf16.msra.mxu0 0
  %2755 = vmatprep.subr.bf16.mxu0 0
  %2756 = vmatpush1.bf16.msra.mxu0 0
  %2757 = vmatprep.subr.bf16.mxu0 0
  %2758 = vmatpush1.bf16.msra.mxu0 0
  %2759 = vmatprep.subr.bf16.mxu0 0
  %2760 = vmatpush1.bf16.msra.mxu0 0
  %2761 = vmatprep.subr.bf16.mxu0 0
  %2762 = vmatpush1.bf16.msra.mxu0 0
  %2763 = vmatprep.subr.bf16.mxu0 0
  %2764 = vmatpush1.bf16.msra.mxu0 0
  %2765 = vmatprep.subr.bf16.mxu0 0
  %2766 = vmatpush1.bf16.msra.mxu0 0
  %2767 = vmatprep.subr.bf16.mxu0 0
  %2768 = vmatpush1.bf16.msra.mxu0 0
  %2769 = vmatprep.subr.bf16.mxu0 0
  %2770 = vmatpush1.bf16.msra.mxu0 0
  %2771 = vmatprep.subr.bf16.mxu0 0
  %2772 = vmatpush1.bf16.msra.mxu0 0
  %2773 = vmatprep.subr.bf16.mxu0 0
  %2774 = vmatpush1.bf16.msra.mxu0 0
  %2775 = vmatprep.mubr.bf16.mxu0 0
  %2776 = vmatmul.mubr.bf16.gmra.mrb[0].mxu0 %v2741
  %v2777 = vpop.f32.mrb[0].mxu0
  %v2778 = vadd.f32 0.0, %v2777
  %v2779 = vpop.f32.mrb[0].mxu0
  %v2780 = vpop.f32.mrb[0].mxu0
  %v2781 = vpop.f32.mrb[0].mxu0
  %2782 = vdwg.mxu0
  %v2783 = vpack.c.bf16 %v2778, %v2778
  %v2784 = vld [vmem:[%s17] sm:$0xf]
  %v2785 = vld [vmem:[%s17 + $0x4] sm:$0xf]
  %v2786 = vld [vmem:[%s17 + $0x8] sm:$0xf]
  %v2787 = vld [vmem:[%s17 + $0xc] sm:$0xf]
  %v2788 = vld [vmem:[#allocation2] sm:$0x1]
  %v2790 = vlaneseq
  %v2791 = vshrl.u32 %v2790, 7
  %v2792 = vsub.s32 0, %v2791
  %v2793 = vrot.slane %v2788, %v2792
  %v2799 = vunpack.c.l.b16 %v2784
  %v2800 = vunpack.c.l.b16 %v2785
  %v2801 = vunpack.c.l.b16 %v2786
  %v2802 = vunpack.c.l.b16 %v2787
  %v2803 = vpack.c.b16 %v2800, %v2799
  %v2804 = vpack.c.b16 %v2802, %v2801
  %v2808 = vsel %vm159, %v2783, 0
  %2810 = vmatprep.subr.bf16.mxu0 0
  %2811 = vmatpush1.bf16.msra.mxu0 %v2803
  %2812 = vmatprep.subr.bf16.mxu0 0
  %2813 = vmatpush1.bf16.msra.mxu0 %v2804
  %2814 = vmatprep.subr.bf16.mxu0 0
  %2815 = vmatpush1.bf16.msra.mxu0 0
  %2816 = vmatprep.subr.bf16.mxu0 0
  %2817 = vmatpush1.bf16.msra.mxu0 0
  %2818 = vmatprep.subr.bf16.mxu0 0
  %2819 = vmatpush1.bf16.msra.mxu0 0
  %2820 = vmatprep.subr.bf16.mxu0 0
  %2821 = vmatpush1.bf16.msra.mxu0 0
  %2822 = vmatprep.subr.bf16.mxu0 0
  %2823 = vmatpush1.bf16.msra.mxu0 0
  %2824 = vmatprep.subr.bf16.mxu0 0
  %2825 = vmatpush1.bf16.msra.mxu0 0
  %2826 = vmatprep.subr.bf16.mxu0 0
  %2827 = vmatpush1.bf16.msra.mxu0 0
  %2828 = vmatprep.subr.bf16.mxu0 0
  %2829 = vmatpush1.bf16.msra.mxu0 0
  %2830 = vmatprep.subr.bf16.mxu0 0
  %2831 = vmatpush1.bf16.msra.mxu0 0
  %2832 = vmatprep.subr.bf16.mxu0 0
  %2833 = vmatpush1.bf16.msra.mxu0 0
  %2834 = vmatprep.subr.bf16.mxu0 0
  %2835 = vmatpush1.bf16.msra.mxu0 0
  %2836 = vmatprep.subr.bf16.mxu0 0
  %2837 = vmatpush1.bf16.msra.mxu0 0
  %2838 = vmatprep.subr.bf16.mxu0 0
  %2839 = vmatpush1.bf16.msra.mxu0 0
  %2840 = vmatprep.subr.bf16.mxu0 0
  %2841 = vmatpush1.bf16.msra.mxu0 0
  %2842 = vmatprep.mubr.bf16.mxu0 0
  %2843 = vmatmul.mubr.bf16.gmra.mrb[0].mxu0 %v2808
  %v2844 = vpop.f32.mrb[0].mxu0
  %v2845 = vadd.f32 %v2793, %v2844
  %v2846 = vpop.f32.mrb[0].mxu0
  %v2847 = vpop.f32.mrb[0].mxu0
  %v2848 = vpop.f32.mrb[0].mxu0
  %2849 = vdwg.mxu0
  %vm2850 = vcmask 1024
  %2851 = vst.msk [vmem:[%s19] sm:$0x3] %vm2850, %v2845
  // Predicated region
  $region78: #{transformer_forward.1} parent=0 // pred_check
    _
  $region79: #{transformer_forward.1} parent=0 // pred_check_branch
    %2853 = sbr.rel (0) target = $region81
  $region80: #{transformer_forward.1} parent=0 // pred_region
    _
  $region81: #{transformer_forward.1} parent=0 // pred_fallthru
    _
  // Predicated region
  $region82: #{transformer_forward.1} parent=0 // pred_check
    _
  $region83: #{transformer_forward.1} parent=0 // pred_check_branch
    %2855 = sbr.rel (0) target = $region85
  $region84: #{transformer_forward.1} parent=0 // pred_region
    _
  $region85: #{transformer_forward.1} parent=0 // pred_fallthru
    _

</llo_original>
